<compile_context>
chip_gen: v7x
topology: tpu7x:2x2x1
jax: 0.10.0
libtpu: 0.0.40
codegen_flags: <defaults>
</compile_context>

<pallas_src>
import jax
import jax.numpy as jnp
from jax.experimental import pallas as pl
from jax.experimental.pallas import tpu as pltpu

# ---- problem sizes (small, (8,128)-friendly; hidden sizes fixed by module) ----
BATCH = 256
INPUT_DIM = 256
LATENT_DIM = 128
ENC_H1 = 512          # VAE encoder hidden 1 (fixed by the module)
ENC_H2 = 256          # VAE encoder hidden 2
DEC_H1 = 256          # VAE decoder hidden 1
DEC_H2 = 512          # VAE decoder hidden 2

# packed bias layout: one lane-dense (1, 2048) f32 row, 128-aligned columns
_BIAS_SIZES = (("bp", LATENT_DIM), ("be1", ENC_H1), ("be2", ENC_H2),
               ("be3", 2 * LATENT_DIM), ("bd1", DEC_H1), ("bd2", DEC_H2),
               ("bd3", LATENT_DIM))
_BIAS_OFF = {}
_off = 0
for _name, _sz in _BIAS_SIZES:
    _BIAS_OFF[_name] = (_off, _off + _sz)
    _off += _sz
BIAS_TOTAL = _off   # 2048


def _kernel(x_ref, spk_ref, eps_ref, w128_ref, w256_ref, w512_ref, b_ref, out_ref):
    f32 = jnp.float32
    bf16 = jnp.bfloat16

    def bias(name):
        lo, hi = _BIAS_OFF[name]
        return b_ref[:, lo:hi]                       # (1, n) lane-aligned slice

    # static views into the packed weight slabs (free; sublane-tile aligned)
    wp  = w128_ref[0:INPUT_DIM, :]                               # (256,128) project_to_latent
    wd3 = w128_ref[INPUT_DIM:INPUT_DIM + DEC_H2, :]              # (512,128) vae.decoder[4]
    we2 = w256_ref[0:ENC_H1, :]                                  # (512,256) vae.encoder[2]
    we3 = w256_ref[ENC_H1:ENC_H1 + ENC_H2, :]                    # (256,256) vae.encoder[4] (mu|logvar)
    wd1 = w256_ref[ENC_H1 + ENC_H2:ENC_H1 + ENC_H2 + LATENT_DIM, :]  # (128,256) vae.decoder[0]
    we1 = w512_ref[0:LATENT_DIM, :]                              # (128,512) vae.encoder[0]
    wd2 = w512_ref[LATENT_DIM:LATENT_DIM + DEC_H1, :]            # (256,512) vae.decoder[2]

    # project_to_latent (x already bf16); content_input = projected - speaker_mu
    projected = jnp.dot(x_ref[...], wp, preferred_element_type=f32) + bias("bp")
    c = (projected - spk_ref[...]).astype(bf16)

    # VAE encoder: Linear(128,512) ReLU Linear(512,256) ReLU
    h = jnp.maximum(jnp.dot(c, we1, preferred_element_type=f32) + bias("be1"), 0.0).astype(bf16)
    h = jnp.maximum(jnp.dot(h, we2, preferred_element_type=f32) + bias("be2"), 0.0).astype(bf16)

    # merged mu|logvar head: one 256-wide MXU pass + one 256-lane store
    # (matches encoder(x).view(-1, 2, latent): cols [0,128)=mu, [128,256)=logvar)
    head = jnp.dot(h, we3, preferred_element_type=f32) + bias("be3")
    out_ref[:, LATENT_DIM:3 * LATENT_DIM] = head

    mu = head[:, 0:LATENT_DIM]
    logvar = head[:, LATENT_DIM:2 * LATENT_DIM]

    # reparameterize: z = mu + eps * exp(0.5 * logvar)
    z = (mu + eps_ref[...] * jnp.exp(0.5 * logvar)).astype(bf16)

    # VAE decoder: Linear(128,256) ReLU Linear(256,512) ReLU Linear(512,128) Sigmoid
    d = jnp.maximum(jnp.dot(z, wd1, preferred_element_type=f32) + bias("bd1"), 0.0).astype(bf16)
    d = jnp.maximum(jnp.dot(d, wd2, preferred_element_type=f32) + bias("bd2"), 0.0).astype(bf16)
    logits = jnp.dot(d, wd3, preferred_element_type=f32) + bias("bd3")

    # exact sigmoid: exp on EUP + exact reciprocal (keeps recon in [0, 1])
    recon = pl.reciprocal(1.0 + jnp.exp(-logits), approx=False)
    out_ref[:, 0:LATENT_DIM] = recon


def _num_tensorcores():
    try:
        kind = jax.devices()[0].device_kind.lower()
    except Exception:
        return 1
    # v7x has 2 TensorCores per chip; v5e/v6e have 1.
    return 2 if ("v7" in kind or "7x" in kind) else 1


def _choose_tb(B, n_cores):
    candidates = (256, 128, 64, 32, 16)
    if n_cores > 1:
        # keep >= n_cores grid steps so every TensorCore gets work
        for tb in candidates:
            if B % tb == 0 and B // tb >= n_cores:
                return tb
    # single-TC chips: biggest tile that divides B (ideally one grid step)
    for tb in candidates:
        if B % tb == 0:
            return tb
    return 128  # ragged batch: falls back to padding


@jax.jit
def disentangled_content_layer(x, speaker_mu, eps, params):
    w128, w256, w512, biases = params
    B = x.shape[0]
    tb = _choose_tb(B, _num_tensorcores())
    B_pad = pl.cdiv(B, tb) * tb

    x = x.astype(jnp.bfloat16)   # kernel consumes bf16 activations (half the DMA)
    if B_pad != B:               # only taken for ragged batches (not the demo)
        pad = B_pad - B
        x = jnp.pad(x, ((0, pad), (0, 0)))
        speaker_mu = jnp.pad(speaker_mu, ((0, pad), (0, 0)))
        eps = jnp.pad(eps, ((0, pad), (0, 0)))

    def batch_spec(d):
        return pl.BlockSpec((tb, d), lambda i: (i, 0))

    def resident_spec(shape):
        # constant block index -> fetched once, held VMEM-resident across tiles
        return pl.BlockSpec(shape, lambda i: tuple(0 for _ in shape))

    in_specs = [
        batch_spec(INPUT_DIM),        # x (bf16)
        batch_spec(LATENT_DIM),       # speaker_mu (f32)
        batch_spec(LATENT_DIM),       # eps (f32)
        resident_spec(w128.shape),    # packed bf16 weights, out-dim 128
        resident_spec(w256.shape),    # packed bf16 weights, out-dim 256
        resident_spec(w512.shape),    # packed bf16 weights, out-dim 512
        resident_spec(biases.shape),  # packed f32 biases (1, 2048)
    ]
    out_specs = batch_spec(3 * LATENT_DIM)
    out_shape = jax.ShapeDtypeStruct((B_pad, 3 * LATENT_DIM), jnp.float32)

    # advisory cost hint for the XLA scheduler
    macs_per_row = (INPUT_DIM * LATENT_DIM
                    + LATENT_DIM * ENC_H1 + ENC_H1 * ENC_H2
                    + ENC_H2 * 2 * LATENT_DIM
                    + LATENT_DIM * DEC_H1 + DEC_H1 * DEC_H2
                    + DEC_H2 * LATENT_DIM)
    param_bytes = sum(int(p.size) * p.dtype.itemsize for p in params)
    io_bytes = (x.size * x.dtype.itemsize
                + speaker_mu.size * speaker_mu.dtype.itemsize
                + eps.size * eps.dtype.itemsize
                + B_pad * 3 * LATENT_DIM * 4)
    cost = pl.CostEstimate(flops=2 * B_pad * macs_per_row,
                           transcendentals=3 * B_pad * LATENT_DIM,
                           bytes_accessed=int(param_bytes + io_bytes))

    fused = pl.pallas_call(
        _kernel,
        out_shape=out_shape,
        grid_spec=pl.GridSpec(
            grid=(B_pad // tb,),
            in_specs=in_specs,
            out_specs=out_specs,
        ),
        compiler_params=pltpu.CompilerParams(
            dimension_semantics=("parallel",),
        ),
        cost_estimate=cost,
    )(x, speaker_mu, eps, w128, w256, w512, biases)

    recon = fused[:B, 0:LATENT_DIM]
    mu = fused[:B, LATENT_DIM:2 * LATENT_DIM]
    logvar = fused[:B, 2 * LATENT_DIM:3 * LATENT_DIM]
    return recon, mu, logvar


def _init_linear(key, d_in, d_out):
    # Deterministic synthetic init; weight stored as (in, out) for x @ W.
    kw, kb = jax.random.split(key)
    bound = 1.0 / jnp.sqrt(jnp.float32(d_in))
    w = jax.random.uniform(kw, (d_in, d_out), jnp.float32, -bound, bound)
    b = jax.random.uniform(kb, (1, d_out), jnp.float32, -bound, bound)
    return w, b


def make_params(key):
    keys = jax.random.split(key, 7)
    wp, bp = _init_linear(keys[0], INPUT_DIM, LATENT_DIM)        # project_to_latent
    we1, be1 = _init_linear(keys[1], LATENT_DIM, ENC_H1)         # vae.encoder[0]
    we2, be2 = _init_linear(keys[2], ENC_H1, ENC_H2)             # vae.encoder[2]
    we3, be3 = _init_linear(keys[3], ENC_H2, 2 * LATENT_DIM)     # vae.encoder[4] (mu|logvar)
    wd1, bd1 = _init_linear(keys[4], LATENT_DIM, DEC_H1)         # vae.decoder[0]
    wd2, bd2 = _init_linear(keys[5], DEC_H1, DEC_H2)             # vae.decoder[2]
    wd3, bd3 = _init_linear(keys[6], DEC_H2, LATENT_DIM)         # vae.decoder[4]

    bf16 = jnp.bfloat16
    # pack weights into lane-width groups (few big DMAs; free static slices in-kernel)
    w128 = jnp.concatenate([wp, wd3], axis=0).astype(bf16)        # (768, 128)
    w256 = jnp.concatenate([we2, we3, wd1], axis=0).astype(bf16)  # (896, 256)
    w512 = jnp.concatenate([we1, wd2], axis=0).astype(bf16)       # (384, 512)
    biases = jnp.concatenate([bp, be1, be2, be3, bd1, bd2, bd3], axis=1)  # (1, 2048) f32
    return (w128, w256, w512, biases)


def _reference(x, speaker_mu, eps, params):
    # Same bf16-weight / f32-accumulation math as the kernel (pure JAX).
    w128, w256, w512, b = params
    wp, wd3 = w128[:INPUT_DIM], w128[INPUT_DIM:]
    we2 = w256[:ENC_H1]
    we3 = w256[ENC_H1:ENC_H1 + ENC_H2]
    wd1 = w256[ENC_H1 + ENC_H2:]
    we1 = w512[:LATENT_DIM]
    wd2 = w512[LATENT_DIM:]
    bias = {n: b[:, lo:hi] for n, (lo, hi) in _BIAS_OFF.items()}

    dot = lambda a, w: jnp.dot(a.astype(jnp.bfloat16), w,
                               preferred_element_type=jnp.float32)
    projected = dot(x, wp) + bias["bp"]
    c = projected - speaker_mu
    h = jax.nn.relu(dot(c, we1) + bias["be1"])
    h = jax.nn.relu(dot(h, we2) + bias["be2"])
    head = dot(h, we3) + bias["be3"]
    mu, logvar = head[:, :LATENT_DIM], head[:, LATENT_DIM:]
    z = mu + eps * jnp.exp(0.5 * logvar)
    d = jax.nn.relu(dot(z, wd1) + bias["bd1"])
    d = jax.nn.relu(dot(d, wd2) + bias["bd2"])
    recon = jax.nn.sigmoid(dot(d, wd3) + bias["bd3"])
    return recon, mu, logvar


if __name__ == "__main__":
    key = jax.random.PRNGKey(0)
    k_param, k_x, k_spk, k_eps = jax.random.split(key, 4)

    params = make_params(k_param)
    x = jax.random.normal(k_x, (BATCH, INPUT_DIM), jnp.float32)
    speaker_mu = jax.random.normal(k_spk, (BATCH, LATENT_DIM), jnp.float32)
    # eps plays the role of torch.randn_like(std) in VAE.reparameterize()
    eps = jax.random.normal(k_eps, (BATCH, LATENT_DIM), jnp.float32)

    recon, mu, logvar = disentangled_content_layer(x, speaker_mu, eps, params)
    jax.block_until_ready((recon, mu, logvar))

    r_recon, r_mu, r_logvar = _reference(x, speaker_mu, eps, params)
    assert recon.shape == (BATCH, LATENT_DIM)
    assert mu.shape == (BATCH, LATENT_DIM)
    assert logvar.shape == (BATCH, LATENT_DIM)
    assert jnp.allclose(recon, r_recon, atol=2e-2, rtol=2e-2)
    assert jnp.allclose(mu, r_mu, atol=2e-2, rtol=2e-2)
    assert jnp.allclose(logvar, r_logvar, atol=2e-2, rtol=2e-2)

    print("KERNEL_OK")
</pallas_src>

<mosaic_0001>
module attributes {stable_mosaic.version = 11 : i64} {
  func.func @_kernel(%arg0: i32, %arg1: memref<256x256xbf16, #tpu.memory_space<vmem>>, %arg2: memref<256x128xf32, #tpu.memory_space<vmem>>, %arg3: memref<256x128xf32, #tpu.memory_space<vmem>>, %arg4: memref<768x128xbf16, #tpu.memory_space<vmem>>, %arg5: memref<896x256xbf16, #tpu.memory_space<vmem>>, %arg6: memref<384x512xbf16, #tpu.memory_space<vmem>>, %arg7: memref<1x2048xf32, #tpu.memory_space<vmem>>, %arg8: memref<256x384xf32, #tpu.memory_space<vmem>>) attributes {dimension_semantics = [#tpu.dimension_semantics<parallel>], iteration_bounds = array<i64: 1>, scalar_prefetch = 0 : i64, scratch_operands = 0 : i64, tpu.core_type = #tpu.core_type<tc>, window_params = [{transform_indices = @transform_0, window_bounds = array<i64: 256, 256>}, {transform_indices = @transform_1, window_bounds = array<i64: 256, 128>}, {transform_indices = @transform_2, window_bounds = array<i64: 256, 128>}, {pipeline_mode = #tpu.pipeline_mode<synchronous>, transform_indices = @transform_3, window_bounds = array<i64: 768, 128>}, {pipeline_mode = #tpu.pipeline_mode<synchronous>, transform_indices = @transform_4, window_bounds = array<i64: 896, 256>}, {pipeline_mode = #tpu.pipeline_mode<synchronous>, transform_indices = @transform_5, window_bounds = array<i64: 384, 512>}, {pipeline_mode = #tpu.pipeline_mode<synchronous>, transform_indices = @transform_6, window_bounds = array<i64: 1, 2048>}, {transform_indices = @transform_7, window_bounds = array<i64: 256, 384>}]} {
    %c0 = arith.constant 0 : index
    %c0_0 = arith.constant 0 : index
    %0 = vector.load %arg4[%c0, %c0_0] : memref<768x128xbf16, #tpu.memory_space<vmem>>, vector<256x128xbf16>
    %c256 = arith.constant 256 : index
    %c0_1 = arith.constant 0 : index
    %1 = vector.load %arg4[%c256, %c0_1] : memref<768x128xbf16, #tpu.memory_space<vmem>>, vector<512x128xbf16>
    %c0_2 = arith.constant 0 : index
    %c0_3 = arith.constant 0 : index
    %2 = vector.load %arg5[%c0_2, %c0_3] : memref<896x256xbf16, #tpu.memory_space<vmem>>, vector<512x256xbf16>
    %c512 = arith.constant 512 : index
    %c0_4 = arith.constant 0 : index
    %3 = vector.load %arg5[%c512, %c0_4] : memref<896x256xbf16, #tpu.memory_space<vmem>>, vector<256x256xbf16>
    %c768 = arith.constant 768 : index
    %c0_5 = arith.constant 0 : index
    %4 = vector.load %arg5[%c768, %c0_5] : memref<896x256xbf16, #tpu.memory_space<vmem>>, vector<128x256xbf16>
    %c0_6 = arith.constant 0 : index
    %c0_7 = arith.constant 0 : index
    %5 = vector.load %arg6[%c0_6, %c0_7] : memref<384x512xbf16, #tpu.memory_space<vmem>>, vector<128x512xbf16>
    %c128 = arith.constant 128 : index
    %c0_8 = arith.constant 0 : index
    %6 = vector.load %arg6[%c128, %c0_8] : memref<384x512xbf16, #tpu.memory_space<vmem>>, vector<256x512xbf16>
    %c0_9 = arith.constant 0 : index
    %c0_10 = arith.constant 0 : index
    %7 = vector.load %arg1[%c0_9, %c0_10] : memref<256x256xbf16, #tpu.memory_space<vmem>>, vector<256x256xbf16>
    %cst = arith.constant dense<0.000000e+00> : vector<256x128xf32>
    %8 = tpu.matmul %7, %0, %cst {dimension_numbers = #tpu.dot_dimension_numbers<[1], [0], [0], [1], [0, 0, 1, 1], [], []>} : vector<256x256xbf16>, vector<256x128xbf16>, vector<256x128xf32> -> vector<256x128xf32>
    %c0_11 = arith.constant 0 : index
    %c0_12 = arith.constant 0 : index
    %9 = vector.load %arg7[%c0_11, %c0_12] : memref<1x2048xf32, #tpu.memory_space<vmem>>, vector<1x128xf32>
    %10 = vector.broadcast %9 : vector<1x128xf32> to vector<256x128xf32>
    %11 = arith.addf %8, %10 : vector<256x128xf32>
    %c0_13 = arith.constant 0 : index
    %c0_14 = arith.constant 0 : index
    %12 = vector.load %arg2[%c0_13, %c0_14] : memref<256x128xf32, #tpu.memory_space<vmem>>, vector<256x128xf32>
    %13 = arith.subf %11, %12 : vector<256x128xf32>
    %14 = arith.truncf %13 : vector<256x128xf32> to vector<256x128xbf16>
    %cst_15 = arith.constant dense<0.000000e+00> : vector<256x512xf32>
    %15 = tpu.matmul %14, %5, %cst_15 {dimension_numbers = #tpu.dot_dimension_numbers<[1], [0], [0], [1], [0, 0, 1, 1], [], []>} : vector<256x128xbf16>, vector<128x512xbf16>, vector<256x512xf32> -> vector<256x512xf32>
    %c0_16 = arith.constant 0 : index
    %c128_17 = arith.constant 128 : index
    %16 = vector.load %arg7[%c0_16, %c128_17] : memref<1x2048xf32, #tpu.memory_space<vmem>>, vector<1x512xf32>
    %17 = vector.broadcast %16 : vector<1x512xf32> to vector<256x512xf32>
    %18 = arith.addf %15, %17 : vector<256x512xf32>
    %cst_18 = arith.constant 0.000000e+00 : f32
    %19 = vector.broadcast %cst_18 : f32 to vector<256x512xf32>
    %20 = arith.maximumf %18, %19 : vector<256x512xf32>
    %21 = arith.truncf %20 : vector<256x512xf32> to vector<256x512xbf16>
    %cst_19 = arith.constant dense<0.000000e+00> : vector<256x256xf32>
    %22 = tpu.matmul %21, %2, %cst_19 {dimension_numbers = #tpu.dot_dimension_numbers<[1], [0], [0], [1], [0, 0, 1, 1], [], []>} : vector<256x512xbf16>, vector<512x256xbf16>, vector<256x256xf32> -> vector<256x256xf32>
    %c0_20 = arith.constant 0 : index
    %c640 = arith.constant 640 : index
    %23 = vector.load %arg7[%c0_20, %c640] : memref<1x2048xf32, #tpu.memory_space<vmem>>, vector<1x256xf32>
    %24 = vector.broadcast %23 : vector<1x256xf32> to vector<256x256xf32>
    %25 = arith.addf %22, %24 : vector<256x256xf32>
    %cst_21 = arith.constant 0.000000e+00 : f32
    %26 = vector.broadcast %cst_21 : f32 to vector<256x256xf32>
    %27 = arith.maximumf %25, %26 : vector<256x256xf32>
    %28 = arith.truncf %27 : vector<256x256xf32> to vector<256x256xbf16>
    %cst_22 = arith.constant dense<0.000000e+00> : vector<256x256xf32>
    %29 = tpu.matmul %28, %3, %cst_22 {dimension_numbers = #tpu.dot_dimension_numbers<[1], [0], [0], [1], [0, 0, 1, 1], [], []>} : vector<256x256xbf16>, vector<256x256xbf16>, vector<256x256xf32> -> vector<256x256xf32>
    %c0_23 = arith.constant 0 : index
    %c896 = arith.constant 896 : index
    %30 = vector.load %arg7[%c0_23, %c896] : memref<1x2048xf32, #tpu.memory_space<vmem>>, vector<1x256xf32>
    %31 = vector.broadcast %30 : vector<1x256xf32> to vector<256x256xf32>
    %32 = arith.addf %29, %31 : vector<256x256xf32>
    %c0_24 = arith.constant 0 : index
    %c128_25 = arith.constant 128 : index
    %33 = vector.load %arg8[%c0_24, %c128_25] : memref<256x384xf32, #tpu.memory_space<vmem>>, vector<256x256xf32>
    tpu.vector_store %arg8[%c0_24, %c128_25], %32 {strides = array<i32>} : memref<256x384xf32, #tpu.memory_space<vmem>>, vector<256x256xf32>,
    %34 = vector.extract_strided_slice %32 {offsets = [0, 0], sizes = [256, 128], strides = [1, 1]} : vector<256x256xf32> to vector<256x128xf32>
    %35 = vector.extract_strided_slice %32 {offsets = [0, 128], sizes = [256, 128], strides = [1, 1]} : vector<256x256xf32> to vector<256x128xf32>
    %c0_26 = arith.constant 0 : index
    %c0_27 = arith.constant 0 : index
    %36 = vector.load %arg3[%c0_26, %c0_27] : memref<256x128xf32, #tpu.memory_space<vmem>>, vector<256x128xf32>
    %cst_28 = arith.constant 5.000000e-01 : f32
    %37 = vector.broadcast %cst_28 : f32 to vector<256x128xf32>
    %38 = arith.mulf %37, %35 : vector<256x128xf32>
    %39 = math.exp %38 : vector<256x128xf32>
    %40 = arith.mulf %36, %39 : vector<256x128xf32>
    %41 = arith.addf %34, %40 : vector<256x128xf32>
    %42 = arith.truncf %41 : vector<256x128xf32> to vector<256x128xbf16>
    %cst_29 = arith.constant dense<0.000000e+00> : vector<256x256xf32>
    %43 = tpu.matmul %42, %4, %cst_29 {dimension_numbers = #tpu.dot_dimension_numbers<[1], [0], [0], [1], [0, 0, 1, 1], [], []>} : vector<256x128xbf16>, vector<128x256xbf16>, vector<256x256xf32> -> vector<256x256xf32>
    %c0_30 = arith.constant 0 : index
    %c1152 = arith.constant 1152 : index
    %44 = vector.load %arg7[%c0_30, %c1152] : memref<1x2048xf32, #tpu.memory_space<vmem>>, vector<1x256xf32>
    %45 = vector.broadcast %44 : vector<1x256xf32> to vector<256x256xf32>
    %46 = arith.addf %43, %45 : vector<256x256xf32>
    %cst_31 = arith.constant 0.000000e+00 : f32
    %47 = vector.broadcast %cst_31 : f32 to vector<256x256xf32>
    %48 = arith.maximumf %46, %47 : vector<256x256xf32>
    %49 = arith.truncf %48 : vector<256x256xf32> to vector<256x256xbf16>
    %cst_32 = arith.constant dense<0.000000e+00> : vector<256x512xf32>
    %50 = tpu.matmul %49, %6, %cst_32 {dimension_numbers = #tpu.dot_dimension_numbers<[1], [0], [0], [1], [0, 0, 1, 1], [], []>} : vector<256x256xbf16>, vector<256x512xbf16>, vector<256x512xf32> -> vector<256x512xf32>
    %c0_33 = arith.constant 0 : index
    %c1408 = arith.constant 1408 : index
    %51 = vector.load %arg7[%c0_33, %c1408] : memref<1x2048xf32, #tpu.memory_space<vmem>>, vector<1x512xf32>
    %52 = vector.broadcast %51 : vector<1x512xf32> to vector<256x512xf32>
    %53 = arith.addf %50, %52 : vector<256x512xf32>
    %cst_34 = arith.constant 0.000000e+00 : f32
    %54 = vector.broadcast %cst_34 : f32 to vector<256x512xf32>
    %55 = arith.maximumf %53, %54 : vector<256x512xf32>
    %56 = arith.truncf %55 : vector<256x512xf32> to vector<256x512xbf16>
    %cst_35 = arith.constant dense<0.000000e+00> : vector<256x128xf32>
    %57 = tpu.matmul %56, %1, %cst_35 {dimension_numbers = #tpu.dot_dimension_numbers<[1], [0], [0], [1], [0, 0, 1, 1], [], []>} : vector<256x512xbf16>, vector<512x128xbf16>, vector<256x128xf32> -> vector<256x128xf32>
    %c0_36 = arith.constant 0 : index
    %c1920 = arith.constant 1920 : index
    %58 = vector.load %arg7[%c0_36, %c1920] : memref<1x2048xf32, #tpu.memory_space<vmem>>, vector<1x128xf32>
    %59 = vector.broadcast %58 : vector<1x128xf32> to vector<256x128xf32>
    %60 = arith.addf %57, %59 : vector<256x128xf32>
    %cst_37 = arith.constant 0.000000e+00 : f32
    %61 = vector.broadcast %cst_37 : f32 to vector<256x128xf32>
    %62 = arith.subf %61, %60 : vector<256x128xf32>
    %63 = math.exp %62 : vector<256x128xf32>
    %cst_38 = arith.constant 1.000000e+00 : f32
    %64 = vector.broadcast %cst_38 : f32 to vector<256x128xf32>
    %65 = arith.addf %64, %63 : vector<256x128xf32>
    %66 = tpu.reciprocal %65 : vector<256x128xf32> -> vector<256x128xf32>
    %c0_39 = arith.constant 0 : index
    %c0_40 = arith.constant 0 : index
    %67 = vector.load %arg8[%c0_39, %c0_40] : memref<256x384xf32, #tpu.memory_space<vmem>>, vector<256x128xf32>
    tpu.vector_store %arg8[%c0_39, %c0_40], %66 {strides = array<i32>} : memref<256x384xf32, #tpu.memory_space<vmem>>, vector<256x128xf32>,
    return
  }
  func.func @transform_0(%arg0: i32) -> (i32, i32) {
    %c0_i32 = arith.constant 0 : i32
    %c0_i32_0 = arith.constant 0 : i32
    return %arg0, %c0_i32 : i32, i32
  }
  func.func @transform_1(%arg0: i32) -> (i32, i32) {
    %c0_i32 = arith.constant 0 : i32
    %c0_i32_0 = arith.constant 0 : i32
    return %arg0, %c0_i32 : i32, i32
  }
  func.func @transform_2(%arg0: i32) -> (i32, i32) {
    %c0_i32 = arith.constant 0 : i32
    %c0_i32_0 = arith.constant 0 : i32
    return %arg0, %c0_i32 : i32, i32
  }
  func.func @transform_3(%arg0: i32) -> (i32, i32) {
    %c0_i32 = arith.constant 0 : i32
    %c0_i32_0 = arith.constant 0 : i32
    %c0_i32_1 = arith.constant 0 : i32
    return %c0_i32, %c0_i32_0 : i32, i32
  }
  func.func @transform_4(%arg0: i32) -> (i32, i32) {
    %c0_i32 = arith.constant 0 : i32
    %c0_i32_0 = arith.constant 0 : i32
    %c0_i32_1 = arith.constant 0 : i32
    return %c0_i32, %c0_i32_0 : i32, i32
  }
  func.func @transform_5(%arg0: i32) -> (i32, i32) {
    %c0_i32 = arith.constant 0 : i32
    %c0_i32_0 = arith.constant 0 : i32
    %c0_i32_1 = arith.constant 0 : i32
    return %c0_i32, %c0_i32_0 : i32, i32
  }
  func.func @transform_6(%arg0: i32) -> (i32, i32) {
    %c0_i32 = arith.constant 0 : i32
    %c0_i32_0 = arith.constant 0 : i32
    %c0_i32_1 = arith.constant 0 : i32
    return %c0_i32, %c0_i32_0 : i32, i32
  }
  func.func @transform_7(%arg0: i32) -> (i32, i32) {
    %c0_i32 = arith.constant 0 : i32
    %c0_i32_0 = arith.constant 0 : i32
    return %arg0, %c0_i32 : i32, i32
  }
}

</mosaic_0001>

<llo_original>
// kernel: disentangled_content_layer.1
$region0: #{disentangled_content_layer.1}
  #allocation0 [shape = 'u32[]', space=smem, size = 0x4, offset = 0x4, fixed_abs, tag = 'smem constant byte address 0x4 - core index']
  #allocation1 [shape = 'u32[144,128]{1,0:T(1,128)}', space=vmem, size = 0x12000, scoped, tag = 'internal scratch']
  %s0 = inlined_call_operand.vmem [shape: bf16[256,256], index: 0, kind: input, shape index: {}]
  %s1 = inlined_call_operand.hbm [shape: f32[256,128], index: 1, kind: input, shape index: {}]
  %s2 = inlined_call_operand.hbm [shape: f32[256,128], index: 2, kind: input, shape index: {}]
  %s3 = inlined_call_operand.hbm [shape: bf16[768,128], index: 3, kind: input, shape index: {}]
  %s4 = inlined_call_operand.hbm [shape: bf16[896,256], index: 4, kind: input, shape index: {}]
  %s5 = inlined_call_operand.vmem [shape: bf16[384,512], index: 5, kind: input, shape index: {}]
  %s6 = inlined_call_operand.vmem [shape: f32[1,2048], index: 6, kind: input, shape index: {}]
  %s7 = inlined_call_operand.vmem [shape: f32[256,384], index: 7, kind: output, shape index: {}]
  %s8 = sld [smem:[#allocation0]]
  $region54: #{disentangled_content_layer.1} parent=0
    _
  %s10 = ssub.s32 1, %s8
  %s11 = scalar_select 0, %s10, %s8
  $region1: #{disentangled_content_layer.1} parent=0
    #allocation2 [shape = 'u8[131072]{0}', space=vmem, size = 0x20000, scoped, tag = 'input window, operand 1, single buffered']
    #allocation3 [shape = 's32[1]{0}', space=sflag, size = 0x4, scoped, tag = 'scoped memory for disentangled_content_layer.1']
    #allocation4 [shape = 'u8[131072]{0}', space=vmem, size = 0x20000, scoped, tag = 'input window, operand 2, single buffered']
    #allocation5 [shape = 's32[1]{0}', space=sflag, size = 0x4, scoped, tag = 'scoped memory for disentangled_content_layer.1']
    #allocation6 [shape = 'u8[196608]{0}', space=vmem, size = 0x30000, scoped, tag = 'input window, operand 3, single buffered']
    #allocation7 [shape = 'u8[458752]{0}', space=vmem, size = 0x70000, scoped, tag = 'input window, operand 4, single buffered']
    #allocation8 [shape = 's32[1]{0}', space=sflag, size = 0x4, scoped, tag = 'scoped memory for disentangled_content_layer.1']
    %12 = vsyncpa [#allocation3], 0
    %13 = vsyncpa [#allocation5], 0
    %14 = vsyncpa [#allocation8], 0
    // Predicated region
    $region2: #{disentangled_content_layer.1} parent=1 // pred_check
      _
    $region3: #{disentangled_content_layer.1} parent=1 // pred_check_branch
      %16 = sbr.rel (0) target = $region5
    $region4: #{disentangled_content_layer.1} parent=1 // pred_region
      _
    $region5: #{disentangled_content_layer.1} parent=1 // pred_fallthru
      _
    // Predicated region
    $region6: #{disentangled_content_layer.1} parent=1 // pred_check
      _
    $region7: #{disentangled_content_layer.1} parent=1 // pred_check_branch
      %18 = sbr.rel (0) target = $region9
    $region8: #{disentangled_content_layer.1} parent=1 // pred_region
      %s20 = ssub.s32 4096, 4096
      %21 = vsyncadd [#allocation3], %s20
      %s22 = sshll.u32 [#allocation2], 4
      %s23 = int_to_ptr.vmem [resolvable:$true] %s22
      %28 = dma.hbm_to_vmem [thread:$0]  %s1, 4096, %s23, [#allocation3], 128, 128, 8
    $region9: #{disentangled_content_layer.1} parent=1 // pred_fallthru
      _
    // Predicated region
    $region10: #{disentangled_content_layer.1} parent=1 // pred_check
      _
    $region11: #{disentangled_content_layer.1} parent=1 // pred_check_branch
      %30 = sbr.rel (0) target = $region13
    $region12: #{disentangled_content_layer.1} parent=1 // pred_region
      %s32 = ssub.s32 4096, 4096
      %33 = vsyncadd [#allocation5], %s32
      %s34 = sshll.u32 [#allocation4], 4
      %s35 = int_to_ptr.vmem [resolvable:$true] %s34
      %40 = dma.hbm_to_vmem [thread:$0]  %s2, 4096, %s35, [#allocation5], 128, 128, 8
    $region13: #{disentangled_content_layer.1} parent=1 // pred_fallthru
      _
    // Predicated region
    $region14: #{disentangled_content_layer.1} parent=1 // pred_check
      _
    $region15: #{disentangled_content_layer.1} parent=1 // pred_check_branch
      %42 = sbr.rel (0) target = $region17
    $region16: #{disentangled_content_layer.1} parent=1 // pred_region
      %s44 = ssub.s32 6144, 6144
      %45 = vsyncadd [#allocation5], %s44
      %s46 = sshll.u32 [#allocation6], 4
      %s47 = int_to_ptr.vmem [resolvable:$true] %s46
      %52 = dma.hbm_to_vmem [thread:$0]  %s3, 6144, %s47, [#allocation5], 64, 64, 4
    $region17: #{disentangled_content_layer.1} parent=1 // pred_fallthru
      _
    // Predicated region
    $region18: #{disentangled_content_layer.1} parent=1 // pred_check
      _
    $region19: #{disentangled_content_layer.1} parent=1 // pred_check_branch
      %54 = sbr.rel (0) target = $region21
    $region20: #{disentangled_content_layer.1} parent=1 // pred_region
      %s56 = ssub.s32 14336, 14336
      %57 = vsyncadd [#allocation8], %s56
      %s58 = sshll.u32 [#allocation7], 4
      %s59 = int_to_ptr.vmem [resolvable:$true] %s58
      %64 = dma.hbm_to_vmem [thread:$0]  %s4, 14336, %s59, [#allocation8], 128, 128, 8
    $region21: #{disentangled_content_layer.1} parent=1 // pred_fallthru
      _
    // Predicated region
    $region22: #{disentangled_content_layer.1} parent=1 // pred_check
      _
    $region23: #{disentangled_content_layer.1} parent=1 // pred_check_branch
      %66 = sbr.rel (0) target = $region25
    $region24: #{disentangled_content_layer.1} parent=1 // pred_region
      _
    $region25: #{disentangled_content_layer.1} parent=1 // pred_fallthru
      _
    // Predicated region
    $region26: #{disentangled_content_layer.1} parent=1 // pred_check
      _
    $region27: #{disentangled_content_layer.1} parent=1 // pred_check_branch
      %68 = sbr.rel (0) target = $region29
    $region28: #{disentangled_content_layer.1} parent=1 // pred_region
      _
    $region29: #{disentangled_content_layer.1} parent=1 // pred_fallthru
      _
    // Predicated region
    $region30: #{disentangled_content_layer.1} parent=1 // pred_check
      _
    $region31: #{disentangled_content_layer.1} parent=1 // pred_check_branch
      %70 = sbr.rel (0) target = $region33
    $region32: #{disentangled_content_layer.1} parent=1 // pred_region
      %71 = dma.done [#allocation3], 4096
    $region33: #{disentangled_content_layer.1} parent=1 // pred_fallthru
      _
    // Predicated region
    $region34: #{disentangled_content_layer.1} parent=1 // pred_check
      _
    $region35: #{disentangled_content_layer.1} parent=1 // pred_check_branch
      %73 = sbr.rel (0) target = $region37
    $region36: #{disentangled_content_layer.1} parent=1 // pred_region
      %74 = dma.done [#allocation5], 4096
    $region37: #{disentangled_content_layer.1} parent=1 // pred_fallthru
      _
    // Predicated region
    $region38: #{disentangled_content_layer.1} parent=1 // pred_check
      _
    $region39: #{disentangled_content_layer.1} parent=1 // pred_check_branch
      %76 = sbr.rel (0) target = $region41
    $region40: #{disentangled_content_layer.1} parent=1 // pred_region
      %77 = dma.done [#allocation5], 6144
    $region41: #{disentangled_content_layer.1} parent=1 // pred_fallthru
      _
    // Predicated region
    $region42: #{disentangled_content_layer.1} parent=1 // pred_check
      _
    $region43: #{disentangled_content_layer.1} parent=1 // pred_check_branch
      %79 = sbr.rel (0) target = $region45
    $region44: #{disentangled_content_layer.1} parent=1 // pred_region
      %80 = dma.done [#allocation8], 14336
    $region45: #{disentangled_content_layer.1} parent=1 // pred_fallthru
      _
    %v82 = vld [vmem:[#allocation6] sm:$0xf]
    %v83 = vld [vmem:[#allocation6 + $0x4] sm:$0xf]
    %v84 = vld [vmem:[#allocation6 + $0x8] sm:$0xf]
    %v85 = vld [vmem:[#allocation6 + $0xc] sm:$0xf]
    %v86 = vld [vmem:[#allocation6 + $0x10] sm:$0xf]
    %v87 = vld [vmem:[#allocation6 + $0x14] sm:$0xf]
    %v88 = vld [vmem:[#allocation6 + $0x18] sm:$0xf]
    %v89 = vld [vmem:[#allocation6 + $0x1c] sm:$0xf]
    %v90 = vld [vmem:[#allocation6 + $0x20] sm:$0xf]
    %v91 = vld [vmem:[#allocation6 + $0x24] sm:$0xf]
    %v92 = vld [vmem:[#allocation6 + $0x28] sm:$0xf]
    %v93 = vld [vmem:[#allocation6 + $0x2c] sm:$0xf]
    %v94 = vld [vmem:[#allocation6 + $0x30] sm:$0xf]
    %v95 = vld [vmem:[#allocation6 + $0x34] sm:$0xf]
    %v96 = vld [vmem:[#allocation6 + $0x38] sm:$0xf]
    %v97 = vld [vmem:[#allocation6 + $0x3c] sm:$0xf]
    %v98 = vld [vmem:[#allocation6 + $0x40] sm:$0xf]
    %v99 = vld [vmem:[#allocation6 + $0x44] sm:$0xf]
    %v100 = vld [vmem:[#allocation6 + $0x48] sm:$0xf]
    %v101 = vld [vmem:[#allocation6 + $0x4c] sm:$0xf]
    %v102 = vld [vmem:[#allocation6 + $0x50] sm:$0xf]
    %v103 = vld [vmem:[#allocation6 + $0x54] sm:$0xf]
    %v104 = vld [vmem:[#allocation6 + $0x58] sm:$0xf]
    %v105 = vld [vmem:[#allocation6 + $0x5c] sm:$0xf]
    %v106 = vld [vmem:[#allocation6 + $0x60] sm:$0xf]
    %v107 = vld [vmem:[#allocation6 + $0x64] sm:$0xf]
    %v108 = vld [vmem:[#allocation6 + $0x68] sm:$0xf]
    %v109 = vld [vmem:[#allocation6 + $0x6c] sm:$0xf]
    %v110 = vld [vmem:[#allocation6 + $0x70] sm:$0xf]
    %v111 = vld [vmem:[#allocation6 + $0x74] sm:$0xf]
    %v112 = vld [vmem:[#allocation6 + $0x78] sm:$0xf]
    %v113 = vld [vmem:[#allocation6 + $0x7c] sm:$0xf]
    %v114 = vld [vmem:[#allocation6 + $0x80] sm:$0xf]
    %v115 = vld [vmem:[#allocation6 + $0x84] sm:$0xf]
    %v116 = vld [vmem:[#allocation6 + $0x88] sm:$0xf]
    %v117 = vld [vmem:[#allocation6 + $0x8c] sm:$0xf]
    %v118 = vld [vmem:[#allocation6 + $0x90] sm:$0xf]
    %v119 = vld [vmem:[#allocation6 + $0x94] sm:$0xf]
    %v120 = vld [vmem:[#allocation6 + $0x98] sm:$0xf]
    %v121 = vld [vmem:[#allocation6 + $0x9c] sm:$0xf]
    %v122 = vld [vmem:[#allocation6 + $0xa0] sm:$0xf]
    %v123 = vld [vmem:[#allocation6 + $0xa4] sm:$0xf]
    %v124 = vld [vmem:[#allocation6 + $0xa8] sm:$0xf]
    %v125 = vld [vmem:[#allocation6 + $0xac] sm:$0xf]
    %v126 = vld [vmem:[#allocation6 + $0xb0] sm:$0xf]
    %v127 = vld [vmem:[#allocation6 + $0xb4] sm:$0xf]
    %v128 = vld [vmem:[#allocation6 + $0xb8] sm:$0xf]
    %v129 = vld [vmem:[#allocation6 + $0xbc] sm:$0xf]
    %v130 = vld [vmem:[#allocation6 + $0xc0] sm:$0xf]
    %v131 = vld [vmem:[#allocation6 + $0xc4] sm:$0xf]
    %v132 = vld [vmem:[#allocation6 + $0xc8] sm:$0xf]
    %v133 = vld [vmem:[#allocation6 + $0xcc] sm:$0xf]
    %v134 = vld [vmem:[#allocation6 + $0xd0] sm:$0xf]
    %v135 = vld [vmem:[#allocation6 + $0xd4] sm:$0xf]
    %v136 = vld [vmem:[#allocation6 + $0xd8] sm:$0xf]
    %v137 = vld [vmem:[#allocation6 + $0xdc] sm:$0xf]
    %v138 = vld [vmem:[#allocation6 + $0xe0] sm:$0xf]
    %v139 = vld [vmem:[#allocation6 + $0xe4] sm:$0xf]
    %v140 = vld [vmem:[#allocation6 + $0xe8] sm:$0xf]
    %v141 = vld [vmem:[#allocation6 + $0xec] sm:$0xf]
    %v142 = vld [vmem:[#allocation6 + $0xf0] sm:$0xf]
    %v143 = vld [vmem:[#allocation6 + $0xf4] sm:$0xf]
    %v144 = vld [vmem:[#allocation6 + $0xf8] sm:$0xf]
    %v145 = vld [vmem:[#allocation6 + $0xfc] sm:$0xf]
    %v146 = vld [vmem:[#allocation6 + $0x100] sm:$0xf]
    %v147 = vld [vmem:[#allocation6 + $0x104] sm:$0xf]
    %v148 = vld [vmem:[#allocation6 + $0x108] sm:$0xf]
    %v149 = vld [vmem:[#allocation6 + $0x10c] sm:$0xf]
    %v150 = vld [vmem:[#allocation6 + $0x110] sm:$0xf]
    %v151 = vld [vmem:[#allocation6 + $0x114] sm:$0xf]
    %v152 = vld [vmem:[#allocation6 + $0x118] sm:$0xf]
    %v153 = vld [vmem:[#allocation6 + $0x11c] sm:$0xf]
    %v154 = vld [vmem:[#allocation6 + $0x120] sm:$0xf]
    %v155 = vld [vmem:[#allocation6 + $0x124] sm:$0xf]
    %v156 = vld [vmem:[#allocation6 + $0x128] sm:$0xf]
    %v157 = vld [vmem:[#allocation6 + $0x12c] sm:$0xf]
    %v158 = vld [vmem:[#allocation6 + $0x130] sm:$0xf]
    %v159 = vld [vmem:[#allocation6 + $0x134] sm:$0xf]
    %v160 = vld [vmem:[#allocation6 + $0x138] sm:$0xf]
    %v161 = vld [vmem:[#allocation6 + $0x13c] sm:$0xf]
    %v162 = vld [vmem:[#allocation6 + $0x140] sm:$0xf]
    %v163 = vld [vmem:[#allocation6 + $0x144] sm:$0xf]
    %v164 = vld [vmem:[#allocation6 + $0x148] sm:$0xf]
    %v165 = vld [vmem:[#allocation6 + $0x14c] sm:$0xf]
    %v166 = vld [vmem:[#allocation6 + $0x150] sm:$0xf]
    %v167 = vld [vmem:[#allocation6 + $0x154] sm:$0xf]
    %v168 = vld [vmem:[#allocation6 + $0x158] sm:$0xf]
    %v169 = vld [vmem:[#allocation6 + $0x15c] sm:$0xf]
    %v170 = vld [vmem:[#allocation6 + $0x160] sm:$0xf]
    %v171 = vld [vmem:[#allocation6 + $0x164] sm:$0xf]
    %v172 = vld [vmem:[#allocation6 + $0x168] sm:$0xf]
    %v173 = vld [vmem:[#allocation6 + $0x16c] sm:$0xf]
    %v174 = vld [vmem:[#allocation6 + $0x170] sm:$0xf]
    %v175 = vld [vmem:[#allocation6 + $0x174] sm:$0xf]
    %v176 = vld [vmem:[#allocation6 + $0x178] sm:$0xf]
    %v177 = vld [vmem:[#allocation6 + $0x17c] sm:$0xf]
    %v178 = vld [vmem:[#allocation7] sm:$0xff]
    %v179 = vld [vmem:[#allocation7 + $0x8] sm:$0xff]
    %v180 = vld [vmem:[#allocation7 + $0x10] sm:$0xff]
    %v181 = vld [vmem:[#allocation7 + $0x18] sm:$0xff]
    %v182 = vld [vmem:[#allocation7 + $0x20] sm:$0xff]
    %v183 = vld [vmem:[#allocation7 + $0x28] sm:$0xff]
    %v184 = vld [vmem:[#allocation7 + $0x30] sm:$0xff]
    %v185 = vld [vmem:[#allocation7 + $0x38] sm:$0xff]
    %v186 = vld [vmem:[#allocation7 + $0x40] sm:$0xff]
    %v187 = vld [vmem:[#allocation7 + $0x48] sm:$0xff]
    %v188 = vld [vmem:[#allocation7 + $0x50] sm:$0xff]
    %v189 = vld [vmem:[#allocation7 + $0x58] sm:$0xff]
    %v190 = vld [vmem:[#allocation7 + $0x60] sm:$0xff]
    %v191 = vld [vmem:[#allocation7 + $0x68] sm:$0xff]
    %v192 = vld [vmem:[#allocation7 + $0x70] sm:$0xff]
    %v193 = vld [vmem:[#allocation7 + $0x78] sm:$0xff]
    %v194 = vld [vmem:[#allocation7 + $0x80] sm:$0xff]
    %v195 = vld [vmem:[#allocation7 + $0x88] sm:$0xff]
    %v196 = vld [vmem:[#allocation7 + $0x90] sm:$0xff]
    %v197 = vld [vmem:[#allocation7 + $0x98] sm:$0xff]
    %v198 = vld [vmem:[#allocation7 + $0xa0] sm:$0xff]
    %v199 = vld [vmem:[#allocation7 + $0xa8] sm:$0xff]
    %v200 = vld [vmem:[#allocation7 + $0xb0] sm:$0xff]
    %v201 = vld [vmem:[#allocation7 + $0xb8] sm:$0xff]
    %v202 = vld [vmem:[#allocation7 + $0xc0] sm:$0xff]
    %v203 = vld [vmem:[#allocation7 + $0xc8] sm:$0xff]
    %v204 = vld [vmem:[#allocation7 + $0xd0] sm:$0xff]
    %v205 = vld [vmem:[#allocation7 + $0xd8] sm:$0xff]
    %v206 = vld [vmem:[#allocation7 + $0xe0] sm:$0xff]
    %v207 = vld [vmem:[#allocation7 + $0xe8] sm:$0xff]
    %v208 = vld [vmem:[#allocation7 + $0xf0] sm:$0xff]
    %v209 = vld [vmem:[#allocation7 + $0xf8] sm:$0xff]
    %v210 = vld [vmem:[#allocation7 + $0x100] sm:$0xff]
    %v211 = vld [vmem:[#allocation7 + $0x108] sm:$0xff]
    %v212 = vld [vmem:[#allocation7 + $0x110] sm:$0xff]
    %v213 = vld [vmem:[#allocation7 + $0x118] sm:$0xff]
    %v214 = vld [vmem:[#allocation7 + $0x120] sm:$0xff]
    %v215 = vld [vmem:[#allocation7 + $0x128] sm:$0xff]
    %v216 = vld [vmem:[#allocation7 + $0x130] sm:$0xff]
    %v217 = vld [vmem:[#allocation7 + $0x138] sm:$0xff]
    %v218 = vld [vmem:[#allocation7 + $0x140] sm:$0xff]
    %v219 = vld [vmem:[#allocation7 + $0x148] sm:$0xff]
    %v220 = vld [vmem:[#allocation7 + $0x150] sm:$0xff]
    %v221 = vld [vmem:[#allocation7 + $0x158] sm:$0xff]
    %v222 = vld [vmem:[#allocation7 + $0x160] sm:$0xff]
    %v223 = vld [vmem:[#allocation7 + $0x168] sm:$0xff]
    %v224 = vld [vmem:[#allocation7 + $0x170] sm:$0xff]
    %v225 = vld [vmem:[#allocation7 + $0x178] sm:$0xff]
    %v226 = vld [vmem:[#allocation7 + $0x180] sm:$0xff]
    %v227 = vld [vmem:[#allocation7 + $0x188] sm:$0xff]
    %v228 = vld [vmem:[#allocation7 + $0x190] sm:$0xff]
    %v229 = vld [vmem:[#allocation7 + $0x198] sm:$0xff]
    %v230 = vld [vmem:[#allocation7 + $0x1a0] sm:$0xff]
    %v231 = vld [vmem:[#allocation7 + $0x1a8] sm:$0xff]
    %v232 = vld [vmem:[#allocation7 + $0x1b0] sm:$0xff]
    %v233 = vld [vmem:[#allocation7 + $0x1b8] sm:$0xff]
    %v234 = vld [vmem:[#allocation7 + $0x1c0] sm:$0xff]
    %v235 = vld [vmem:[#allocation7 + $0x1c8] sm:$0xff]
    %v236 = vld [vmem:[#allocation7 + $0x1d0] sm:$0xff]
    %v237 = vld [vmem:[#allocation7 + $0x1d8] sm:$0xff]
    %v238 = vld [vmem:[#allocation7 + $0x1e0] sm:$0xff]
    %v239 = vld [vmem:[#allocation7 + $0x1e8] sm:$0xff]
    %v240 = vld [vmem:[#allocation7 + $0x1f0] sm:$0xff]
    %v241 = vld [vmem:[#allocation7 + $0x1f8] sm:$0xff]
    %v242 = vld [vmem:[#allocation7 + $0x200] sm:$0xff]
    %v243 = vld [vmem:[#allocation7 + $0x208] sm:$0xff]
    %v244 = vld [vmem:[#allocation7 + $0x210] sm:$0xff]
    %v245 = vld [vmem:[#allocation7 + $0x218] sm:$0xff]
    %v246 = vld [vmem:[#allocation7 + $0x220] sm:$0xff]
    %v247 = vld [vmem:[#allocation7 + $0x228] sm:$0xff]
    %v248 = vld [vmem:[#allocation7 + $0x230] sm:$0xff]
    %v249 = vld [vmem:[#allocation7 + $0x238] sm:$0xff]
    %v250 = vld [vmem:[#allocation7 + $0x240] sm:$0xff]
    %v251 = vld [vmem:[#allocation7 + $0x248] sm:$0xff]
    %v252 = vld [vmem:[#allocation7 + $0x250] sm:$0xff]
    %v253 = vld [vmem:[#allocation7 + $0x258] sm:$0xff]
    %v254 = vld [vmem:[#allocation7 + $0x260] sm:$0xff]
    %v255 = vld [vmem:[#allocation7 + $0x268] sm:$0xff]
    %v256 = vld [vmem:[#allocation7 + $0x270] sm:$0xff]
    %v257 = vld [vmem:[#allocation7 + $0x278] sm:$0xff]
    %v258 = vld [vmem:[#allocation7 + $0x280] sm:$0xff]
    %v259 = vld [vmem:[#allocation7 + $0x288] sm:$0xff]
    %v260 = vld [vmem:[#allocation7 + $0x290] sm:$0xff]
    %v261 = vld [vmem:[#allocation7 + $0x298] sm:$0xff]
    %v262 = vld [vmem:[#allocation7 + $0x2a0] sm:$0xff]
    %v263 = vld [vmem:[#allocation7 + $0x2a8] sm:$0xff]
    %v264 = vld [vmem:[#allocation7 + $0x2b0] sm:$0xff]
    %v265 = vld [vmem:[#allocation7 + $0x2b8] sm:$0xff]
    %v266 = vld [vmem:[#allocation7 + $0x2c0] sm:$0xff]
    %v267 = vld [vmem:[#allocation7 + $0x2c8] sm:$0xff]
    %v268 = vld [vmem:[#allocation7 + $0x2d0] sm:$0xff]
    %v269 = vld [vmem:[#allocation7 + $0x2d8] sm:$0xff]
    %v270 = vld [vmem:[#allocation7 + $0x2e0] sm:$0xff]
    %v271 = vld [vmem:[#allocation7 + $0x2e8] sm:$0xff]
    %v272 = vld [vmem:[#allocation7 + $0x2f0] sm:$0xff]
    %v273 = vld [vmem:[#allocation7 + $0x2f8] sm:$0xff]
    %v274 = vld [vmem:[#allocation7 + $0x300] sm:$0xff]
    %v275 = vld [vmem:[#allocation7 + $0x308] sm:$0xff]
    %v276 = vld [vmem:[#allocation7 + $0x310] sm:$0xff]
    %v277 = vld [vmem:[#allocation7 + $0x318] sm:$0xff]
    %v278 = vld [vmem:[#allocation7 + $0x320] sm:$0xff]
    %v279 = vld [vmem:[#allocation7 + $0x328] sm:$0xff]
    %v280 = vld [vmem:[#allocation7 + $0x330] sm:$0xff]
    %v281 = vld [vmem:[#allocation7 + $0x338] sm:$0xff]
    %v282 = vld [vmem:[#allocation7 + $0x340] sm:$0xff]
    %v283 = vld [vmem:[#allocation7 + $0x348] sm:$0xff]
    %v284 = vld [vmem:[#allocation7 + $0x350] sm:$0xff]
    %v285 = vld [vmem:[#allocation7 + $0x358] sm:$0xff]
    %v286 = vld [vmem:[#allocation7 + $0x360] sm:$0xff]
    %v287 = vld [vmem:[#allocation7 + $0x368] sm:$0xff]
    %v288 = vld [vmem:[#allocation7 + $0x370] sm:$0xff]
    %v289 = vld [vmem:[#allocation7 + $0x378] sm:$0xff]
    %v290 = vld [vmem:[%s5] sm:$0xff]
    %v291 = vld [vmem:[%s5 + $0x8] sm:$0xff]
    %v292 = vld [vmem:[%s5 + $0x10] sm:$0xff]
    %v293 = vld [vmem:[%s5 + $0x18] sm:$0xff]
    %v294 = vld [vmem:[%s5 + $0x20] sm:$0xff]
    %v295 = vld [vmem:[%s5 + $0x28] sm:$0xff]
    %v296 = vld [vmem:[%s5 + $0x30] sm:$0xff]
    %v297 = vld [vmem:[%s5 + $0x38] sm:$0xff]
    %v298 = vld [vmem:[%s5 + $0x40] sm:$0xff]
    %v299 = vld [vmem:[%s5 + $0x48] sm:$0xff]
    %v300 = vld [vmem:[%s5 + $0x50] sm:$0xff]
    %v301 = vld [vmem:[%s5 + $0x58] sm:$0xff]
    %v302 = vld [vmem:[%s5 + $0x60] sm:$0xff]
    %v303 = vld [vmem:[%s5 + $0x68] sm:$0xff]
    %v304 = vld [vmem:[%s5 + $0x70] sm:$0xff]
    %v305 = vld [vmem:[%s5 + $0x78] sm:$0xff]
    %v306 = vld [vmem:[%s5 + $0x80] sm:$0xff]
    %v307 = vld [vmem:[%s5 + $0x88] sm:$0xff]
    %v308 = vld [vmem:[%s5 + $0x90] sm:$0xff]
    %v309 = vld [vmem:[%s5 + $0x98] sm:$0xff]
    %v310 = vld [vmem:[%s5 + $0xa0] sm:$0xff]
    %v311 = vld [vmem:[%s5 + $0xa8] sm:$0xff]
    %v312 = vld [vmem:[%s5 + $0xb0] sm:$0xff]
    %v313 = vld [vmem:[%s5 + $0xb8] sm:$0xff]
    %v314 = vld [vmem:[%s5 + $0xc0] sm:$0xff]
    %v315 = vld [vmem:[%s5 + $0xc8] sm:$0xff]
    %v316 = vld [vmem:[%s5 + $0xd0] sm:$0xff]
    %v317 = vld [vmem:[%s5 + $0xd8] sm:$0xff]
    %v318 = vld [vmem:[%s5 + $0xe0] sm:$0xff]
    %v319 = vld [vmem:[%s5 + $0xe8] sm:$0xff]
    %v320 = vld [vmem:[%s5 + $0xf0] sm:$0xff]
    %v321 = vld [vmem:[%s5 + $0xf8] sm:$0xff]
    %v322 = vld [vmem:[%s5 + $0x100] sm:$0xff]
    %v323 = vld [vmem:[%s5 + $0x108] sm:$0xff]
    %v324 = vld [vmem:[%s5 + $0x110] sm:$0xff]
    %v325 = vld [vmem:[%s5 + $0x118] sm:$0xff]
    %v326 = vld [vmem:[%s5 + $0x120] sm:$0xff]
    %v327 = vld [vmem:[%s5 + $0x128] sm:$0xff]
    %v328 = vld [vmem:[%s5 + $0x130] sm:$0xff]
    %v329 = vld [vmem:[%s5 + $0x138] sm:$0xff]
    %v330 = vld [vmem:[%s5 + $0x140] sm:$0xff]
    %v331 = vld [vmem:[%s5 + $0x148] sm:$0xff]
    %v332 = vld [vmem:[%s5 + $0x150] sm:$0xff]
    %v333 = vld [vmem:[%s5 + $0x158] sm:$0xff]
    %v334 = vld [vmem:[%s5 + $0x160] sm:$0xff]
    %v335 = vld [vmem:[%s5 + $0x168] sm:$0xff]
    %v336 = vld [vmem:[%s5 + $0x170] sm:$0xff]
    %v337 = vld [vmem:[%s5 + $0x178] sm:$0xff]
    %v338 = vld [vmem:[%s5 + $0x180] sm:$0xff]
    %v339 = vld [vmem:[%s5 + $0x188] sm:$0xff]
    %v340 = vld [vmem:[%s5 + $0x190] sm:$0xff]
    %v341 = vld [vmem:[%s5 + $0x198] sm:$0xff]
    %v342 = vld [vmem:[%s5 + $0x1a0] sm:$0xff]
    %v343 = vld [vmem:[%s5 + $0x1a8] sm:$0xff]
    %v344 = vld [vmem:[%s5 + $0x1b0] sm:$0xff]
    %v345 = vld [vmem:[%s5 + $0x1b8] sm:$0xff]
    %v346 = vld [vmem:[%s5 + $0x1c0] sm:$0xff]
    %v347 = vld [vmem:[%s5 + $0x1c8] sm:$0xff]
    %v348 = vld [vmem:[%s5 + $0x1d0] sm:$0xff]
    %v349 = vld [vmem:[%s5 + $0x1d8] sm:$0xff]
    %v350 = vld [vmem:[%s5 + $0x1e0] sm:$0xff]
    %v351 = vld [vmem:[%s5 + $0x1e8] sm:$0xff]
    %v352 = vld [vmem:[%s5 + $0x1f0] sm:$0xff]
    %v353 = vld [vmem:[%s5 + $0x1f8] sm:$0xff]
    %v354 = vld [vmem:[%s5 + $0x200] sm:$0xff]
    %v355 = vld [vmem:[%s5 + $0x208] sm:$0xff]
    %v356 = vld [vmem:[%s5 + $0x210] sm:$0xff]
    %v357 = vld [vmem:[%s5 + $0x218] sm:$0xff]
    %v358 = vld [vmem:[%s5 + $0x220] sm:$0xff]
    %v359 = vld [vmem:[%s5 + $0x228] sm:$0xff]
    %v360 = vld [vmem:[%s5 + $0x230] sm:$0xff]
    %v361 = vld [vmem:[%s5 + $0x238] sm:$0xff]
    %v362 = vld [vmem:[%s5 + $0x240] sm:$0xff]
    %v363 = vld [vmem:[%s5 + $0x248] sm:$0xff]
    %v364 = vld [vmem:[%s5 + $0x250] sm:$0xff]
    %v365 = vld [vmem:[%s5 + $0x258] sm:$0xff]
    %v366 = vld [vmem:[%s5 + $0x260] sm:$0xff]
    %v367 = vld [vmem:[%s5 + $0x268] sm:$0xff]
    %v368 = vld [vmem:[%s5 + $0x270] sm:$0xff]
    %v369 = vld [vmem:[%s5 + $0x278] sm:$0xff]
    %v370 = vld [vmem:[%s5 + $0x280] sm:$0xff]
    %v371 = vld [vmem:[%s5 + $0x288] sm:$0xff]
    %v372 = vld [vmem:[%s5 + $0x290] sm:$0xff]
    %v373 = vld [vmem:[%s5 + $0x298] sm:$0xff]
    %v374 = vld [vmem:[%s5 + $0x2a0] sm:$0xff]
    %v375 = vld [vmem:[%s5 + $0x2a8] sm:$0xff]
    %v376 = vld [vmem:[%s5 + $0x2b0] sm:$0xff]
    %v377 = vld [vmem:[%s5 + $0x2b8] sm:$0xff]
    %v378 = vld [vmem:[%s5 + $0x2c0] sm:$0xff]
    %v379 = vld [vmem:[%s5 + $0x2c8] sm:$0xff]
    %v380 = vld [vmem:[%s5 + $0x2d0] sm:$0xff]
    %v381 = vld [vmem:[%s5 + $0x2d8] sm:$0xff]
    %v382 = vld [vmem:[%s5 + $0x2e0] sm:$0xff]
    %v383 = vld [vmem:[%s5 + $0x2e8] sm:$0xff]
    %v384 = vld [vmem:[%s5 + $0x2f0] sm:$0xff]
    %v385 = vld [vmem:[%s5 + $0x2f8] sm:$0xff]
    %v386 = vld [vmem:[%s0] sm:$0xff]
    %v387 = vld [vmem:[%s0 + $0x8] sm:$0xff]
    %v388 = vld [vmem:[%s0 + $0x10] sm:$0xff]
    %v389 = vld [vmem:[%s0 + $0x18] sm:$0xff]
    %v390 = vld [vmem:[%s0 + $0x20] sm:$0xff]
    %v391 = vld [vmem:[%s0 + $0x28] sm:$0xff]
    %v392 = vld [vmem:[%s0 + $0x30] sm:$0xff]
    %v393 = vld [vmem:[%s0 + $0x38] sm:$0xff]
    %v394 = vld [vmem:[%s0 + $0x40] sm:$0xff]
    %v395 = vld [vmem:[%s0 + $0x48] sm:$0xff]
    %v396 = vld [vmem:[%s0 + $0x50] sm:$0xff]
    %v397 = vld [vmem:[%s0 + $0x58] sm:$0xff]
    %v398 = vld [vmem:[%s0 + $0x60] sm:$0xff]
    %v399 = vld [vmem:[%s0 + $0x68] sm:$0xff]
    %v400 = vld [vmem:[%s0 + $0x70] sm:$0xff]
    %v401 = vld [vmem:[%s0 + $0x78] sm:$0xff]
    %v402 = vld [vmem:[%s0 + $0x80] sm:$0xff]
    %v403 = vld [vmem:[%s0 + $0x88] sm:$0xff]
    %v404 = vld [vmem:[%s0 + $0x90] sm:$0xff]
    %v405 = vld [vmem:[%s0 + $0x98] sm:$0xff]
    %v406 = vld [vmem:[%s0 + $0xa0] sm:$0xff]
    %v407 = vld [vmem:[%s0 + $0xa8] sm:$0xff]
    %v408 = vld [vmem:[%s0 + $0xb0] sm:$0xff]
    %v409 = vld [vmem:[%s0 + $0xb8] sm:$0xff]
    %v410 = vld [vmem:[%s0 + $0xc0] sm:$0xff]
    %v411 = vld [vmem:[%s0 + $0xc8] sm:$0xff]
    %v412 = vld [vmem:[%s0 + $0xd0] sm:$0xff]
    %v413 = vld [vmem:[%s0 + $0xd8] sm:$0xff]
    %v414 = vld [vmem:[%s0 + $0xe0] sm:$0xff]
    %v415 = vld [vmem:[%s0 + $0xe8] sm:$0xff]
    %v416 = vld [vmem:[%s0 + $0xf0] sm:$0xff]
    %v417 = vld [vmem:[%s0 + $0xf8] sm:$0xff]
    %v418 = vld [vmem:[%s6] sm:$0x1]
    %v420 = vlaneseq
    %v421 = vshrl.u32 %v420, 7
    %v422 = vsub.s32 0, %v421
    %v423 = vrot.slane %v418, %v422
    %v457 = vunpack.c.l.b16 %v386
    %v458 = vunpack.c.h.b16 %v386
    %v459 = vunpack.c.l.b16 %v387
    %v460 = vunpack.c.h.b16 %v387
    %v461 = vunpack.c.l.b16 %v388
    %v462 = vunpack.c.h.b16 %v388
    %v463 = vunpack.c.l.b16 %v389
    %v464 = vunpack.c.h.b16 %v389
    %v465 = vunpack.c.l.b16 %v390
    %v466 = vunpack.c.h.b16 %v390
    %v467 = vunpack.c.l.b16 %v391
    %v468 = vunpack.c.h.b16 %v391
    %v469 = vunpack.c.l.b16 %v392
    %v470 = vunpack.c.h.b16 %v392
    %v471 = vunpack.c.l.b16 %v393
    %v472 = vunpack.c.h.b16 %v393
    %v473 = vunpack.c.l.b16 %v394
    %v474 = vunpack.c.h.b16 %v394
    %v475 = vunpack.c.l.b16 %v395
    %v476 = vunpack.c.h.b16 %v395
    %v477 = vunpack.c.l.b16 %v396
    %v478 = vunpack.c.h.b16 %v396
    %v479 = vunpack.c.l.b16 %v397
    %v480 = vunpack.c.h.b16 %v397
    %v481 = vunpack.c.l.b16 %v398
    %v482 = vunpack.c.h.b16 %v398
    %v483 = vunpack.c.l.b16 %v399
    %v484 = vunpack.c.h.b16 %v399
    %v485 = vunpack.c.l.b16 %v400
    %v486 = vunpack.c.h.b16 %v400
    %v487 = vunpack.c.l.b16 %v401
    %v488 = vunpack.c.h.b16 %v401
    %v489 = vunpack.c.l.b16 %v402
    %v490 = vunpack.c.h.b16 %v402
    %v491 = vunpack.c.l.b16 %v403
    %v492 = vunpack.c.h.b16 %v403
    %v493 = vunpack.c.l.b16 %v404
    %v494 = vunpack.c.h.b16 %v404
    %v495 = vunpack.c.l.b16 %v405
    %v496 = vunpack.c.h.b16 %v405
    %v497 = vunpack.c.l.b16 %v406
    %v498 = vunpack.c.h.b16 %v406
    %v499 = vunpack.c.l.b16 %v407
    %v500 = vunpack.c.h.b16 %v407
    %v501 = vunpack.c.l.b16 %v408
    %v502 = vunpack.c.h.b16 %v408
    %v503 = vunpack.c.l.b16 %v409
    %v504 = vunpack.c.h.b16 %v409
    %v505 = vunpack.c.l.b16 %v410
    %v506 = vunpack.c.h.b16 %v410
    %v507 = vunpack.c.l.b16 %v411
    %v508 = vunpack.c.h.b16 %v411
    %v509 = vunpack.c.l.b16 %v412
    %v510 = vunpack.c.h.b16 %v412
    %v511 = vunpack.c.l.b16 %v413
    %v512 = vunpack.c.h.b16 %v413
    %v513 = vunpack.c.l.b16 %v414
    %v514 = vunpack.c.h.b16 %v414
    %v515 = vunpack.c.l.b16 %v415
    %v516 = vunpack.c.h.b16 %v415
    %v517 = vunpack.c.l.b16 %v416
    %v518 = vunpack.c.h.b16 %v416
    %v519 = vunpack.c.l.b16 %v417
    %v520 = vunpack.c.h.b16 %v417
    %v521 = vpack.c.b16 %v459, %v457
    %v522 = vpack.c.b16 %v460, %v458
    %v523 = vpack.c.b16 %v463, %v461
    %v524 = vpack.c.b16 %v464, %v462
    %v525 = vpack.c.b16 %v467, %v465
    %v526 = vpack.c.b16 %v468, %v466
    %v527 = vpack.c.b16 %v471, %v469
    %v528 = vpack.c.b16 %v472, %v470
    %v529 = vpack.c.b16 %v475, %v473
    %v530 = vpack.c.b16 %v476, %v474
    %v531 = vpack.c.b16 %v479, %v477
    %v532 = vpack.c.b16 %v480, %v478
    %v533 = vpack.c.b16 %v483, %v481
    %v534 = vpack.c.b16 %v484, %v482
    %v535 = vpack.c.b16 %v487, %v485
    %v536 = vpack.c.b16 %v488, %v486
    %v537 = vpack.c.b16 %v491, %v489
    %v538 = vpack.c.b16 %v492, %v490
    %v539 = vpack.c.b16 %v495, %v493
    %v540 = vpack.c.b16 %v496, %v494
    %v541 = vpack.c.b16 %v499, %v497
    %v542 = vpack.c.b16 %v500, %v498
    %v543 = vpack.c.b16 %v503, %v501
    %v544 = vpack.c.b16 %v504, %v502
    %v545 = vpack.c.b16 %v507, %v505
    %v546 = vpack.c.b16 %v508, %v506
    %v547 = vpack.c.b16 %v511, %v509
    %v548 = vpack.c.b16 %v512, %v510
    %v549 = vpack.c.b16 %v515, %v513
    %v550 = vpack.c.b16 %v516, %v514
    %v551 = vpack.c.b16 %v519, %v517
    %v552 = vpack.c.b16 %v520, %v518
    %v617 = vunpack.c.l.b16 %v82
    %v618 = vunpack.c.l.b16 %v83
    %v619 = vunpack.c.l.b16 %v84
    %v620 = vunpack.c.l.b16 %v85
    %v621 = vunpack.c.l.b16 %v86
    %v622 = vunpack.c.l.b16 %v87
    %v623 = vunpack.c.l.b16 %v88
    %v624 = vunpack.c.l.b16 %v89
    %v625 = vunpack.c.l.b16 %v90
    %v626 = vunpack.c.l.b16 %v91
    %v627 = vunpack.c.l.b16 %v92
    %v628 = vunpack.c.l.b16 %v93
    %v629 = vunpack.c.l.b16 %v94
    %v630 = vunpack.c.l.b16 %v95
    %v631 = vunpack.c.l.b16 %v96
    %v632 = vunpack.c.l.b16 %v97
    %v633 = vunpack.c.l.b16 %v98
    %v634 = vunpack.c.l.b16 %v99
    %v635 = vunpack.c.l.b16 %v100
    %v636 = vunpack.c.l.b16 %v101
    %v637 = vunpack.c.l.b16 %v102
    %v638 = vunpack.c.l.b16 %v103
    %v639 = vunpack.c.l.b16 %v104
    %v640 = vunpack.c.l.b16 %v105
    %v641 = vunpack.c.l.b16 %v106
    %v642 = vunpack.c.l.b16 %v107
    %v643 = vunpack.c.l.b16 %v108
    %v644 = vunpack.c.l.b16 %v109
    %v645 = vunpack.c.l.b16 %v110
    %v646 = vunpack.c.l.b16 %v111
    %v647 = vunpack.c.l.b16 %v112
    %v648 = vunpack.c.l.b16 %v113
    %v649 = vpack.c.b16 %v618, %v617
    %v650 = vpack.c.b16 %v620, %v619
    %v651 = vpack.c.b16 %v622, %v621
    %v652 = vpack.c.b16 %v624, %v623
    %v653 = vpack.c.b16 %v626, %v625
    %v654 = vpack.c.b16 %v628, %v627
    %v655 = vpack.c.b16 %v630, %v629
    %v656 = vpack.c.b16 %v632, %v631
    %v657 = vpack.c.b16 %v634, %v633
    %v658 = vpack.c.b16 %v636, %v635
    %v659 = vpack.c.b16 %v638, %v637
    %v660 = vpack.c.b16 %v640, %v639
    %v661 = vpack.c.b16 %v642, %v641
    %v662 = vpack.c.b16 %v644, %v643
    %v663 = vpack.c.b16 %v646, %v645
    %v664 = vpack.c.b16 %v648, %v647
    %681 = vmatprep.subr.bf16.mxu0 0
    %682 = vmatpush1.bf16.msra.mxu0 %v649
    %683 = vmatprep.subr.bf16.mxu0 0
    %684 = vmatpush1.bf16.msra.mxu0 %v650
    %685 = vmatprep.subr.bf16.mxu0 0
    %686 = vmatpush1.bf16.msra.mxu0 %v651
    %687 = vmatprep.subr.bf16.mxu0 0
    %688 = vmatpush1.bf16.msra.mxu0 %v652
    %689 = vmatprep.subr.bf16.mxu0 0
    %690 = vmatpush1.bf16.msra.mxu0 %v653
    %691 = vmatprep.subr.bf16.mxu0 0
    %692 = vmatpush1.bf16.msra.mxu0 %v654
    %693 = vmatprep.subr.bf16.mxu0 0
    %694 = vmatpush1.bf16.msra.mxu0 %v655
    %695 = vmatprep.subr.bf16.mxu0 0
    %696 = vmatpush1.bf16.msra.mxu0 %v656
    %697 = vmatprep.subr.bf16.mxu0 0
    %698 = vmatpush1.bf16.msra.mxu0 %v657
    %699 = vmatprep.subr.bf16.mxu0 0
    %700 = vmatpush1.bf16.msra.mxu0 %v658
    %701 = vmatprep.subr.bf16.mxu0 0
    %702 = vmatpush1.bf16.msra.mxu0 %v659
    %703 = vmatprep.subr.bf16.mxu0 0
    %704 = vmatpush1.bf16.msra.mxu0 %v660
    %705 = vmatprep.subr.bf16.mxu0 0
    %706 = vmatpush1.bf16.msra.mxu0 %v661
    %707 = vmatprep.subr.bf16.mxu0 0
    %708 = vmatpush1.bf16.msra.mxu0 %v662
    %709 = vmatprep.subr.bf16.mxu0 0
    %710 = vmatpush1.bf16.msra.mxu0 %v663
    %711 = vmatprep.subr.bf16.mxu0 0
    %712 = vmatpush1.bf16.msra.mxu0 %v664
    %713 = vmatprep.mubr.bf16.mxu0 %v522
    %714 = vmatmul.mubr.bf16.gmra.mrb[0].mxu0 %v521
    %v715 = vpop.f32.mrb[0].mxu0
    %v716 = vadd.f32 %v423, %v715
    %v717 = vpop.f32.mrb[0].mxu0
    %v718 = vpop.f32.mrb[0].mxu0
    %v719 = vadd.f32 %v423, %v718
    %v720 = vpop.f32.mrb[0].mxu0
    %721 = vmatprep.mubr.bf16.mxu0 %v524
    %722 = vmatmul.mubr.bf16.gmra.mrb[0].mxu0 %v523
    %v723 = vpop.f32.mrb[0].mxu0
    %v724 = vadd.f32 %v423, %v723
    %v725 = vpop.f32.mrb[0].mxu0
    %v726 = vpop.f32.mrb[0].mxu0
    %v727 = vadd.f32 %v423, %v726
    %v728 = vpop.f32.mrb[0].mxu0
    %729 = vmatprep.mubr.bf16.mxu0 %v526
    %730 = vmatmul.mubr.bf16.gmra.mrb[0].mxu0 %v525
    %v731 = vpop.f32.mrb[0].mxu0
    %v732 = vadd.f32 %v423, %v731
    %v733 = vpop.f32.mrb[0].mxu0
    %v734 = vpop.f32.mrb[0].mxu0
    %v735 = vadd.f32 %v423, %v734
    %v736 = vpop.f32.mrb[0].mxu0
    %737 = vmatprep.mubr.bf16.mxu0 %v528
    %738 = vmatmul.mubr.bf16.gmra.mrb[0].mxu0 %v527
    %v739 = vpop.f32.mrb[0].mxu0
    %v740 = vadd.f32 %v423, %v739
    %v741 = vpop.f32.mrb[0].mxu0
    %v742 = vpop.f32.mrb[0].mxu0
    %v743 = vadd.f32 %v423, %v742
    %v744 = vpop.f32.mrb[0].mxu0
    %745 = vmatprep.mubr.bf16.mxu0 %v530
    %746 = vmatmul.mubr.bf16.gmra.mrb[0].mxu0 %v529
    %v747 = vpop.f32.mrb[0].mxu0
    %v748 = vadd.f32 %v423, %v747
    %v749 = vpop.f32.mrb[0].mxu0
    %v750 = vpop.f32.mrb[0].mxu0
    %v751 = vadd.f32 %v423, %v750
    %v752 = vpop.f32.mrb[0].mxu0
    %753 = vmatprep.mubr.bf16.mxu0 %v532
    %754 = vmatmul.mubr.bf16.gmra.mrb[0].mxu0 %v531
    %v755 = vpop.f32.mrb[0].mxu0
    %v756 = vadd.f32 %v423, %v755
    %v757 = vpop.f32.mrb[0].mxu0
    %v758 = vpop.f32.mrb[0].mxu0
    %v759 = vadd.f32 %v423, %v758
    %v760 = vpop.f32.mrb[0].mxu0
    %761 = vmatprep.mubr.bf16.mxu0 %v534
    %762 = vmatmul.mubr.bf16.gmra.mrb[0].mxu0 %v533
    %v763 = vpop.f32.mrb[0].mxu0
    %v764 = vadd.f32 %v423, %v763
    %v765 = vpop.f32.mrb[0].mxu0
    %v766 = vpop.f32.mrb[0].mxu0
    %v767 = vadd.f32 %v423, %v766
    %v768 = vpop.f32.mrb[0].mxu0
    %769 = vmatprep.mubr.bf16.mxu0 %v536
    %770 = vmatmul.mubr.bf16.gmra.mrb[0].mxu0 %v535
    %v771 = vpop.f32.mrb[0].mxu0
    %v772 = vadd.f32 %v423, %v771
    %v773 = vpop.f32.mrb[0].mxu0
    %v774 = vpop.f32.mrb[0].mxu0
    %v775 = vadd.f32 %v423, %v774
    %v776 = vpop.f32.mrb[0].mxu0
    %777 = vmatprep.mubr.bf16.mxu0 %v538
    %778 = vmatmul.mubr.bf16.gmra.mrb[0].mxu0 %v537
    %v779 = vpop.f32.mrb[0].mxu0
    %v780 = vadd.f32 %v423, %v779
    %v781 = vpop.f32.mrb[0].mxu0
    %v782 = vpop.f32.mrb[0].mxu0
    %v783 = vadd.f32 %v423, %v782
    %v784 = vpop.f32.mrb[0].mxu0
    %785 = vmatprep.mubr.bf16.mxu0 %v540
    %786 = vmatmul.mubr.bf16.gmra.mrb[0].mxu0 %v539
    %v787 = vpop.f32.mrb[0].mxu0
    %v788 = vadd.f32 %v423, %v787
    %v789 = vpop.f32.mrb[0].mxu0
    %v790 = vpop.f32.mrb[0].mxu0
    %v791 = vadd.f32 %v423, %v790
    %v792 = vpop.f32.mrb[0].mxu0
    %793 = vmatprep.mubr.bf16.mxu0 %v542
    %794 = vmatmul.mubr.bf16.gmra.mrb[0].mxu0 %v541
    %v795 = vpop.f32.mrb[0].mxu0
    %v796 = vadd.f32 %v423, %v795
    %v797 = vpop.f32.mrb[0].mxu0
    %v798 = vpop.f32.mrb[0].mxu0
    %v799 = vadd.f32 %v423, %v798
    %v800 = vpop.f32.mrb[0].mxu0
    %801 = vmatprep.mubr.bf16.mxu0 %v544
    %802 = vmatmul.mubr.bf16.gmra.mrb[0].mxu0 %v543
    %v803 = vpop.f32.mrb[0].mxu0
    %v804 = vadd.f32 %v423, %v803
    %v805 = vpop.f32.mrb[0].mxu0
    %v806 = vpop.f32.mrb[0].mxu0
    %v807 = vadd.f32 %v423, %v806
    %v808 = vpop.f32.mrb[0].mxu0
    %809 = vmatprep.mubr.bf16.mxu0 %v546
    %810 = vmatmul.mubr.bf16.gmra.mrb[0].mxu0 %v545
    %v811 = vpop.f32.mrb[0].mxu0
    %v812 = vadd.f32 %v423, %v811
    %v813 = vpop.f32.mrb[0].mxu0
    %v814 = vpop.f32.mrb[0].mxu0
    %v815 = vadd.f32 %v423, %v814
    %v816 = vpop.f32.mrb[0].mxu0
    %817 = vmatprep.mubr.bf16.mxu0 %v548
    %818 = vmatmul.mubr.bf16.gmra.mrb[0].mxu0 %v547
    %v819 = vpop.f32.mrb[0].mxu0
    %v820 = vadd.f32 %v423, %v819
    %v821 = vpop.f32.mrb[0].mxu0
    %v822 = vpop.f32.mrb[0].mxu0
    %v823 = vadd.f32 %v423, %v822
    %v824 = vpop.f32.mrb[0].mxu0
    %825 = vmatprep.mubr.bf16.mxu0 %v550
    %826 = vmatmul.mubr.bf16.gmra.mrb[0].mxu0 %v549
    %v827 = vpop.f32.mrb[0].mxu0
    %v828 = vadd.f32 %v423, %v827
    %v829 = vpop.f32.mrb[0].mxu0
    %v830 = vpop.f32.mrb[0].mxu0
    %v831 = vadd.f32 %v423, %v830
    %v832 = vpop.f32.mrb[0].mxu0
    %833 = vmatprep.mubr.bf16.mxu0 %v552
    %834 = vmatmul.mubr.bf16.gmra.mrb[0].mxu0 %v551
    %v835 = vpop.f32.mrb[0].mxu0
    %v836 = vadd.f32 %v423, %v835
    %v837 = vpop.f32.mrb[0].mxu0
    %v838 = vpop.f32.mrb[0].mxu0
    %v839 = vadd.f32 %v423, %v838
    %v840 = vpop.f32.mrb[0].mxu0
    %841 = vdwg.mxu0
    %v842 = vld [vmem:[#allocation2] sm:$0xff]
    %v843 = vld [vmem:[#allocation2 + $0x8] sm:$0xff]
    %v844 = vld [vmem:[#allocation2 + $0x10] sm:$0xff]
    %v845 = vld [vmem:[#allocation2 + $0x18] sm:$0xff]
    %v846 = vld [vmem:[#allocation2 + $0x20] sm:$0xff]
    %v847 = vld [vmem:[#allocation2 + $0x28] sm:$0xff]
    %v848 = vld [vmem:[#allocation2 + $0x30] sm:$0xff]
    %v849 = vld [vmem:[#allocation2 + $0x38] sm:$0xff]
    %v850 = vld [vmem:[#allocation2 + $0x40] sm:$0xff]
    %v851 = vld [vmem:[#allocation2 + $0x48] sm:$0xff]
    %v852 = vld [vmem:[#allocation2 + $0x50] sm:$0xff]
    %v853 = vld [vmem:[#allocation2 + $0x58] sm:$0xff]
    %v854 = vld [vmem:[#allocation2 + $0x60] sm:$0xff]
    %v855 = vld [vmem:[#allocation2 + $0x68] sm:$0xff]
    %v856 = vld [vmem:[#allocation2 + $0x70] sm:$0xff]
    %v857 = vld [vmem:[#allocation2 + $0x78] sm:$0xff]
    %v858 = vld [vmem:[#allocation2 + $0x80] sm:$0xff]
    %v859 = vld [vmem:[#allocation2 + $0x88] sm:$0xff]
    %v860 = vld [vmem:[#allocation2 + $0x90] sm:$0xff]
    %v861 = vld [vmem:[#allocation2 + $0x98] sm:$0xff]
    %v862 = vld [vmem:[#allocation2 + $0xa0] sm:$0xff]
    %v863 = vld [vmem:[#allocation2 + $0xa8] sm:$0xff]
    %v864 = vld [vmem:[#allocation2 + $0xb0] sm:$0xff]
    %v865 = vld [vmem:[#allocation2 + $0xb8] sm:$0xff]
    %v866 = vld [vmem:[#allocation2 + $0xc0] sm:$0xff]
    %v867 = vld [vmem:[#allocation2 + $0xc8] sm:$0xff]
    %v868 = vld [vmem:[#allocation2 + $0xd0] sm:$0xff]
    %v869 = vld [vmem:[#allocation2 + $0xd8] sm:$0xff]
    %v870 = vld [vmem:[#allocation2 + $0xe0] sm:$0xff]
    %v871 = vld [vmem:[#allocation2 + $0xe8] sm:$0xff]
    %v872 = vld [vmem:[#allocation2 + $0xf0] sm:$0xff]
    %v873 = vld [vmem:[#allocation2 + $0xf8] sm:$0xff]
    %v874 = vsub.f32 %v716, %v842
    %v875 = vsub.f32 %v719, %v843
    %v876 = vsub.f32 %v724, %v844
    %v877 = vsub.f32 %v727, %v845
    %v878 = vsub.f32 %v732, %v846
    %v879 = vsub.f32 %v735, %v847
    %v880 = vsub.f32 %v740, %v848
    %v881 = vsub.f32 %v743, %v849
    %v882 = vsub.f32 %v748, %v850
    %v883 = vsub.f32 %v751, %v851
    %v884 = vsub.f32 %v756, %v852
    %v885 = vsub.f32 %v759, %v853
    %v886 = vsub.f32 %v764, %v854
    %v887 = vsub.f32 %v767, %v855
    %v888 = vsub.f32 %v772, %v856
    %v889 = vsub.f32 %v775, %v857
    %v890 = vsub.f32 %v780, %v858
    %v891 = vsub.f32 %v783, %v859
    %v892 = vsub.f32 %v788, %v860
    %v893 = vsub.f32 %v791, %v861
    %v894 = vsub.f32 %v796, %v862
    %v895 = vsub.f32 %v799, %v863
    %v896 = vsub.f32 %v804, %v864
    %v897 = vsub.f32 %v807, %v865
    %v898 = vsub.f32 %v812, %v866
    %v899 = vsub.f32 %v815, %v867
    %v900 = vsub.f32 %v820, %v868
    %v901 = vsub.f32 %v823, %v869
    %v902 = vsub.f32 %v828, %v870
    %v903 = vsub.f32 %v831, %v871
    %v904 = vsub.f32 %v836, %v872
    %v905 = vsub.f32 %v839, %v873
    %v906 = vpack.c.bf16 %v875, %v874
    %v907 = vpack.c.bf16 %v877, %v876
    %v908 = vpack.c.bf16 %v879, %v878
    %v909 = vpack.c.bf16 %v881, %v880
    %v910 = vpack.c.bf16 %v883, %v882
    %v911 = vpack.c.bf16 %v885, %v884
    %v912 = vpack.c.bf16 %v887, %v886
    %v913 = vpack.c.bf16 %v889, %v888
    %v914 = vpack.c.bf16 %v891, %v890
    %v915 = vpack.c.bf16 %v893, %v892
    %v916 = vpack.c.bf16 %v895, %v894
    %v917 = vpack.c.bf16 %v897, %v896
    %v918 = vpack.c.bf16 %v899, %v898
    %v919 = vpack.c.bf16 %v901, %v900
    %v920 = vpack.c.bf16 %v903, %v902
    %v921 = vpack.c.bf16 %v905, %v904
    %v922 = vld [vmem:[%s6 + $0x1] sm:$0xf]
    %v924 = vlaneseq
    %v925 = vshrl.u32 %v924, 7
    %v926 = vsub.s32 0, %v925
    %v927 = vrot.slane %v922, %v926
    %v928 = vlaneseq
    %v929 = vshrl.u32 %v928, 7
    %v930 = vsub.s32 1, %v929
    %v931 = vrot.slane %v922, %v930
    %v932 = vlaneseq
    %v933 = vshrl.u32 %v932, 7
    %v934 = vsub.s32 2, %v933
    %v935 = vrot.slane %v922, %v934
    %v936 = vlaneseq
    %v937 = vshrl.u32 %v936, 7
    %v938 = vsub.s32 3, %v937
    %v939 = vrot.slane %v922, %v938
    %v976 = vunpack.c.l.b16 %v290
    %v977 = vunpack.c.h.b16 %v290
    %v978 = vunpack.c.l.b16 %v291
    %v979 = vunpack.c.h.b16 %v291
    %v980 = vunpack.c.l.b16 %v292
    %v981 = vunpack.c.h.b16 %v292
    %v982 = vunpack.c.l.b16 %v293
    %v983 = vunpack.c.h.b16 %v293
    %v984 = vunpack.c.l.b16 %v294
    %v985 = vunpack.c.h.b16 %v294
    %v986 = vunpack.c.l.b16 %v295
    %v987 = vunpack.c.h.b16 %v295
    %v988 = vunpack.c.l.b16 %v296
    %v989 = vunpack.c.h.b16 %v296
    %v990 = vunpack.c.l.b16 %v297
    %v991 = vunpack.c.h.b16 %v297
    %v992 = vunpack.c.l.b16 %v298
    %v993 = vunpack.c.h.b16 %v298
    %v994 = vunpack.c.l.b16 %v299
    %v995 = vunpack.c.h.b16 %v299
    %v996 = vunpack.c.l.b16 %v300
    %v997 = vunpack.c.h.b16 %v300
    %v998 = vunpack.c.l.b16 %v301
    %v999 = vunpack.c.h.b16 %v301
    %v1000 = vunpack.c.l.b16 %v302
    %v1001 = vunpack.c.h.b16 %v302
    %v1002 = vunpack.c.l.b16 %v303
    %v1003 = vunpack.c.h.b16 %v303
    %v1004 = vunpack.c.l.b16 %v304
    %v1005 = vunpack.c.h.b16 %v304
    %v1006 = vunpack.c.l.b16 %v305
    %v1007 = vunpack.c.h.b16 %v305
    %v1008 = vunpack.c.l.b16 %v306
    %v1009 = vunpack.c.h.b16 %v306
    %v1010 = vunpack.c.l.b16 %v307
    %v1011 = vunpack.c.h.b16 %v307
    %v1012 = vunpack.c.l.b16 %v308
    %v1013 = vunpack.c.h.b16 %v308
    %v1014 = vunpack.c.l.b16 %v309
    %v1015 = vunpack.c.h.b16 %v309
    %v1016 = vunpack.c.l.b16 %v310
    %v1017 = vunpack.c.h.b16 %v310
    %v1018 = vunpack.c.l.b16 %v311
    %v1019 = vunpack.c.h.b16 %v311
    %v1020 = vunpack.c.l.b16 %v312
    %v1021 = vunpack.c.h.b16 %v312
    %v1022 = vunpack.c.l.b16 %v313
    %v1023 = vunpack.c.h.b16 %v313
    %v1024 = vunpack.c.l.b16 %v314
    %v1025 = vunpack.c.h.b16 %v314
    %v1026 = vunpack.c.l.b16 %v315
    %v1027 = vunpack.c.h.b16 %v315
    %v1028 = vunpack.c.l.b16 %v316
    %v1029 = vunpack.c.h.b16 %v316
    %v1030 = vunpack.c.l.b16 %v317
    %v1031 = vunpack.c.h.b16 %v317
    %v1032 = vunpack.c.l.b16 %v318
    %v1033 = vunpack.c.h.b16 %v318
    %v1034 = vunpack.c.l.b16 %v319
    %v1035 = vunpack.c.h.b16 %v319
    %v1036 = vunpack.c.l.b16 %v320
    %v1037 = vunpack.c.h.b16 %v320
    %v1038 = vunpack.c.l.b16 %v321
    %v1039 = vunpack.c.h.b16 %v321
    %v1040 = vpack.c.b16 %v980, %v976
    %v1041 = vpack.c.b16 %v981, %v977
    %v1042 = vpack.c.b16 %v982, %v978
    %v1043 = vpack.c.b16 %v983, %v979
    %v1044 = vpack.c.b16 %v988, %v984
    %v1045 = vpack.c.b16 %v989, %v985
    %v1046 = vpack.c.b16 %v990, %v986
    %v1047 = vpack.c.b16 %v991, %v987
    %v1048 = vpack.c.b16 %v996, %v992
    %v1049 = vpack.c.b16 %v997, %v993
    %v1050 = vpack.c.b16 %v998, %v994
    %v1051 = vpack.c.b16 %v999, %v995
    %v1052 = vpack.c.b16 %v1004, %v1000
    %v1053 = vpack.c.b16 %v1005, %v1001
    %v1054 = vpack.c.b16 %v1006, %v1002
    %v1055 = vpack.c.b16 %v1007, %v1003
    %v1056 = vpack.c.b16 %v1012, %v1008
    %v1057 = vpack.c.b16 %v1013, %v1009
    %v1058 = vpack.c.b16 %v1014, %v1010
    %v1059 = vpack.c.b16 %v1015, %v1011
    %v1060 = vpack.c.b16 %v1020, %v1016
    %v1061 = vpack.c.b16 %v1021, %v1017
    %v1062 = vpack.c.b16 %v1022, %v1018
    %v1063 = vpack.c.b16 %v1023, %v1019
    %v1064 = vpack.c.b16 %v1028, %v1024
    %v1065 = vpack.c.b16 %v1029, %v1025
    %v1066 = vpack.c.b16 %v1030, %v1026
    %v1067 = vpack.c.b16 %v1031, %v1027
    %v1068 = vpack.c.b16 %v1036, %v1032
    %v1069 = vpack.c.b16 %v1037, %v1033
    %v1070 = vpack.c.b16 %v1038, %v1034
    %v1071 = vpack.c.b16 %v1039, %v1035
    %1104 = vmatprep.subr.bf16.mxu0 %v1041
    %1105 = vmatpush1.bf16.msra.mxu0 %v1040
    %1106 = vmatprep.subr.bf16.mxu0 %v1045
    %1107 = vmatpush1.bf16.msra.mxu0 %v1044
    %1108 = vmatprep.subr.bf16.mxu0 %v1049
    %1109 = vmatpush1.bf16.msra.mxu0 %v1048
    %1110 = vmatprep.subr.bf16.mxu0 %v1053
    %1111 = vmatpush1.bf16.msra.mxu0 %v1052
    %1112 = vmatprep.subr.bf16.mxu0 %v1057
    %1113 = vmatpush1.bf16.msra.mxu0 %v1056
    %1114 = vmatprep.subr.bf16.mxu0 %v1061
    %1115 = vmatpush1.bf16.msra.mxu0 %v1060
    %1116 = vmatprep.subr.bf16.mxu0 %v1065
    %1117 = vmatpush1.bf16.msra.mxu0 %v1064
    %1118 = vmatprep.subr.bf16.mxu0 %v1069
    %1119 = vmatpush1.bf16.msra.mxu0 %v1068
    %1120 = vmatprep.subr.bf16.mxu0 0
    %1121 = vmatpush1.bf16.msra.mxu0 0
    %1122 = vmatprep.subr.bf16.mxu0 0
    %1123 = vmatpush1.bf16.msra.mxu0 0
    %1124 = vmatprep.subr.bf16.mxu0 0
    %1125 = vmatpush1.bf16.msra.mxu0 0
    %1126 = vmatprep.subr.bf16.mxu0 0
    %1127 = vmatpush1.bf16.msra.mxu0 0
    %1128 = vmatprep.subr.bf16.mxu0 0
    %1129 = vmatpush1.bf16.msra.mxu0 0
    %1130 = vmatprep.subr.bf16.mxu0 0
    %1131 = vmatpush1.bf16.msra.mxu0 0
    %1132 = vmatprep.subr.bf16.mxu0 0
    %1133 = vmatpush1.bf16.msra.mxu0 0
    %1134 = vmatprep.subr.bf16.mxu0 0
    %1135 = vmatpush1.bf16.msra.mxu0 0
    %1136 = vmatprep.mubr.bf16.mxu0 0
    %1137 = vmatmul.mubr.bf16.gmra.mrb[0].mxu0 %v906
    %v1138 = vpop.f32.mrb[0].mxu0
    %v1139 = vadd.f32 %v927, %v1138
    %v1140 = vpop.f32.mrb[0].mxu0
    %v1141 = vadd.f32 %v931, %v1140
    %v1142 = vpop.f32.mrb[0].mxu0
    %v1143 = vadd.f32 %v927, %v1142
    %v1144 = vpop.f32.mrb[0].mxu0
    %v1145 = vadd.f32 %v931, %v1144
    %1146 = vmatprep.mubr.bf16.mxu0 0
    %1147 = vmatmul.mubr.bf16.gmra.mrb[0].mxu0 %v907
    %v1148 = vpop.f32.mrb[0].mxu0
    %v1149 = vadd.f32 %v927, %v1148
    %v1150 = vpop.f32.mrb[0].mxu0
    %v1151 = vadd.f32 %v931, %v1150
    %v1152 = vpop.f32.mrb[0].mxu0
    %v1153 = vadd.f32 %v927, %v1152
    %v1154 = vpop.f32.mrb[0].mxu0
    %v1155 = vadd.f32 %v931, %v1154
    %1156 = vmatprep.mubr.bf16.mxu0 0
    %1157 = vmatmul.mubr.bf16.gmra.mrb[0].mxu0 %v908
    %v1158 = vpop.f32.mrb[0].mxu0
    %v1159 = vadd.f32 %v927, %v1158
    %v1160 = vpop.f32.mrb[0].mxu0
    %v1161 = vadd.f32 %v931, %v1160
    %v1162 = vpop.f32.mrb[0].mxu0
    %v1163 = vadd.f32 %v927, %v1162
    %v1164 = vpop.f32.mrb[0].mxu0
    %v1165 = vadd.f32 %v931, %v1164
    %1166 = vmatprep.mubr.bf16.mxu0 0
    %1167 = vmatmul.mubr.bf16.gmra.mrb[0].mxu0 %v909
    %v1168 = vpop.f32.mrb[0].mxu0
    %v1169 = vadd.f32 %v927, %v1168
    %v1170 = vpop.f32.mrb[0].mxu0
    %v1171 = vadd.f32 %v931, %v1170
    %v1172 = vpop.f32.mrb[0].mxu0
    %v1173 = vadd.f32 %v927, %v1172
    %v1174 = vpop.f32.mrb[0].mxu0
    %v1175 = vadd.f32 %v931, %v1174
    %1176 = vmatprep.mubr.bf16.mxu0 0
    %1177 = vmatmul.mubr.bf16.gmra.mrb[0].mxu0 %v910
    %v1178 = vpop.f32.mrb[0].mxu0
    %v1179 = vadd.f32 %v927, %v1178
    %v1180 = vpop.f32.mrb[0].mxu0
    %v1181 = vadd.f32 %v931, %v1180
    %v1182 = vpop.f32.mrb[0].mxu0
    %v1183 = vadd.f32 %v927, %v1182
    %v1184 = vpop.f32.mrb[0].mxu0
    %v1185 = vadd.f32 %v931, %v1184
    %1186 = vmatprep.mubr.bf16.mxu0 0
    %1187 = vmatmul.mubr.bf16.gmra.mrb[0].mxu0 %v911
    %v1188 = vpop.f32.mrb[0].mxu0
    %v1189 = vadd.f32 %v927, %v1188
    %v1190 = vpop.f32.mrb[0].mxu0
    %v1191 = vadd.f32 %v931, %v1190
    %v1192 = vpop.f32.mrb[0].mxu0
    %v1193 = vadd.f32 %v927, %v1192
    %v1194 = vpop.f32.mrb[0].mxu0
    %v1195 = vadd.f32 %v931, %v1194
    %1196 = vmatprep.mubr.bf16.mxu0 0
    %1197 = vmatmul.mubr.bf16.gmra.mrb[0].mxu0 %v912
    %v1198 = vpop.f32.mrb[0].mxu0
    %v1199 = vadd.f32 %v927, %v1198
    %v1200 = vpop.f32.mrb[0].mxu0
    %v1201 = vadd.f32 %v931, %v1200
    %v1202 = vpop.f32.mrb[0].mxu0
    %v1203 = vadd.f32 %v927, %v1202
    %v1204 = vpop.f32.mrb[0].mxu0
    %v1205 = vadd.f32 %v931, %v1204
    %1206 = vmatprep.mubr.bf16.mxu0 0
    %1207 = vmatmul.mubr.bf16.gmra.mrb[0].mxu0 %v913
    %v1208 = vpop.f32.mrb[0].mxu0
    %v1209 = vadd.f32 %v927, %v1208
    %v1210 = vpop.f32.mrb[0].mxu0
    %v1211 = vadd.f32 %v931, %v1210
    %v1212 = vpop.f32.mrb[0].mxu0
    %v1213 = vadd.f32 %v927, %v1212
    %v1214 = vpop.f32.mrb[0].mxu0
    %v1215 = vadd.f32 %v931, %v1214
    %1216 = vmatprep.mubr.bf16.mxu0 0
    %1217 = vmatmul.mubr.bf16.gmra.mrb[0].mxu0 %v914
    %v1218 = vpop.f32.mrb[0].mxu0
    %v1219 = vadd.f32 %v927, %v1218
    %v1220 = vpop.f32.mrb[0].mxu0
    %v1221 = vadd.f32 %v931, %v1220
    %v1222 = vpop.f32.mrb[0].mxu0
    %v1223 = vadd.f32 %v927, %v1222
    %v1224 = vpop.f32.mrb[0].mxu0
    %v1225 = vadd.f32 %v931, %v1224
    %1226 = vmatprep.mubr.bf16.mxu0 0
    %1227 = vmatmul.mubr.bf16.gmra.mrb[0].mxu0 %v915
    %v1228 = vpop.f32.mrb[0].mxu0
    %v1229 = vadd.f32 %v927, %v1228
    %v1230 = vpop.f32.mrb[0].mxu0
    %v1231 = vadd.f32 %v931, %v1230
    %v1232 = vpop.f32.mrb[0].mxu0
    %v1233 = vadd.f32 %v927, %v1232
    %v1234 = vpop.f32.mrb[0].mxu0
    %v1235 = vadd.f32 %v931, %v1234
    %1236 = vmatprep.mubr.bf16.mxu0 0
    %1237 = vmatmul.mubr.bf16.gmra.mrb[0].mxu0 %v916
    %v1238 = vpop.f32.mrb[0].mxu0
    %v1239 = vadd.f32 %v927, %v1238
    %v1240 = vpop.f32.mrb[0].mxu0
    %v1241 = vadd.f32 %v931, %v1240
    %v1242 = vpop.f32.mrb[0].mxu0
    %v1243 = vadd.f32 %v927, %v1242
    %v1244 = vpop.f32.mrb[0].mxu0
    %v1245 = vadd.f32 %v931, %v1244
    %1246 = vmatprep.mubr.bf16.mxu0 0
    %1247 = vmatmul.mubr.bf16.gmra.mrb[0].mxu0 %v917
    %v1248 = vpop.f32.mrb[0].mxu0
    %v1249 = vadd.f32 %v927, %v1248
    %v1250 = vpop.f32.mrb[0].mxu0
    %v1251 = vadd.f32 %v931, %v1250
    %v1252 = vpop.f32.mrb[0].mxu0
    %v1253 = vadd.f32 %v927, %v1252
    %v1254 = vpop.f32.mrb[0].mxu0
    %v1255 = vadd.f32 %v931, %v1254
    %1256 = vmatprep.mubr.bf16.mxu0 0
    %1257 = vmatmul.mubr.bf16.gmra.mrb[0].mxu0 %v918
    %v1258 = vpop.f32.mrb[0].mxu0
    %v1259 = vadd.f32 %v927, %v1258
    %v1260 = vpop.f32.mrb[0].mxu0
    %v1261 = vadd.f32 %v931, %v1260
    %v1262 = vpop.f32.mrb[0].mxu0
    %v1263 = vadd.f32 %v927, %v1262
    %v1264 = vpop.f32.mrb[0].mxu0
    %v1265 = vadd.f32 %v931, %v1264
    %1266 = vmatprep.mubr.bf16.mxu0 0
    %1267 = vmatmul.mubr.bf16.gmra.mrb[0].mxu0 %v919
    %v1268 = vpop.f32.mrb[0].mxu0
    %v1269 = vadd.f32 %v927, %v1268
    %v1270 = vpop.f32.mrb[0].mxu0
    %v1271 = vadd.f32 %v931, %v1270
    %v1272 = vpop.f32.mrb[0].mxu0
    %v1273 = vadd.f32 %v927, %v1272
    %v1274 = vpop.f32.mrb[0].mxu0
    %v1275 = vadd.f32 %v931, %v1274
    %1276 = vmatprep.mubr.bf16.mxu0 0
    %1277 = vmatmul.mubr.bf16.gmra.mrb[0].mxu0 %v920
    %v1278 = vpop.f32.mrb[0].mxu0
    %v1279 = vadd.f32 %v927, %v1278
    %v1280 = vpop.f32.mrb[0].mxu0
    %v1281 = vadd.f32 %v931, %v1280
    %v1282 = vpop.f32.mrb[0].mxu0
    %v1283 = vadd.f32 %v927, %v1282
    %v1284 = vpop.f32.mrb[0].mxu0
    %v1285 = vadd.f32 %v931, %v1284
    %1286 = vmatprep.mubr.bf16.mxu0 0
    %1287 = vmatmul.mubr.bf16.gmra.mrb[0].mxu0 %v921
    %v1288 = vpop.f32.mrb[0].mxu0
    %v1289 = vadd.f32 %v927, %v1288
    %v1290 = vpop.f32.mrb[0].mxu0
    %v1291 = vadd.f32 %v931, %v1290
    %v1292 = vpop.f32.mrb[0].mxu0
    %v1293 = vadd.f32 %v927, %v1292
    %v1294 = vpop.f32.mrb[0].mxu0
    %v1295 = vadd.f32 %v931, %v1294
    %1296 = vdwg.mxu0
    %1297 = vmatprep.subr.bf16.mxu0 %v1043
    %1298 = vmatpush1.bf16.msra.mxu0 %v1042
    %1299 = vmatprep.subr.bf16.mxu0 %v1047
    %1300 = vmatpush1.bf16.msra.mxu0 %v1046
    %1301 = vmatprep.subr.bf16.mxu0 %v1051
    %1302 = vmatpush1.bf16.msra.mxu0 %v1050
    %1303 = vmatprep.subr.bf16.mxu0 %v1055
    %1304 = vmatpush1.bf16.msra.mxu0 %v1054
    %1305 = vmatprep.subr.bf16.mxu0 %v1059
    %1306 = vmatpush1.bf16.msra.mxu0 %v1058
    %1307 = vmatprep.subr.bf16.mxu0 %v1063
    %1308 = vmatpush1.bf16.msra.mxu0 %v1062
    %1309 = vmatprep.subr.bf16.mxu0 %v1067
    %1310 = vmatpush1.bf16.msra.mxu0 %v1066
    %1311 = vmatprep.subr.bf16.mxu0 %v1071
    %1312 = vmatpush1.bf16.msra.mxu0 %v1070
    %1313 = vmatprep.subr.bf16.mxu0 0
    %1314 = vmatpush1.bf16.msra.mxu0 0
    %1315 = vmatprep.subr.bf16.mxu0 0
    %1316 = vmatpush1.bf16.msra.mxu0 0
    %1317 = vmatprep.subr.bf16.mxu0 0
    %1318 = vmatpush1.bf16.msra.mxu0 0
    %1319 = vmatprep.subr.bf16.mxu0 0
    %1320 = vmatpush1.bf16.msra.mxu0 0
    %1321 = vmatprep.subr.bf16.mxu0 0
    %1322 = vmatpush1.bf16.msra.mxu0 0
    %1323 = vmatprep.subr.bf16.mxu0 0
    %1324 = vmatpush1.bf16.msra.mxu0 0
    %1325 = vmatprep.subr.bf16.mxu0 0
    %1326 = vmatpush1.bf16.msra.mxu0 0
    %1327 = vmatprep.subr.bf16.mxu0 0
    %1328 = vmatpush1.bf16.msra.mxu0 0
    %1329 = vmatprep.mubr.bf16.mxu0 0
    %1330 = vmatmul.mubr.bf16.gmra.mrb[0].mxu0 %v906
    %v1331 = vpop.f32.mrb[0].mxu0
    %v1332 = vadd.f32 %v935, %v1331
    %v1333 = vpop.f32.mrb[0].mxu0
    %v1334 = vadd.f32 %v939, %v1333
    %v1335 = vpop.f32.mrb[0].mxu0
    %v1336 = vadd.f32 %v935, %v1335
    %v1337 = vpop.f32.mrb[0].mxu0
    %v1338 = vadd.f32 %v939, %v1337
    %1339 = vmatprep.mubr.bf16.mxu0 0
    %1340 = vmatmul.mubr.bf16.gmra.mrb[0].mxu0 %v907
    %v1341 = vpop.f32.mrb[0].mxu0
    %v1342 = vadd.f32 %v935, %v1341
    %v1343 = vpop.f32.mrb[0].mxu0
    %v1344 = vadd.f32 %v939, %v1343
    %v1345 = vpop.f32.mrb[0].mxu0
    %v1346 = vadd.f32 %v935, %v1345
    %v1347 = vpop.f32.mrb[0].mxu0
    %v1348 = vadd.f32 %v939, %v1347
    %1349 = vmatprep.mubr.bf16.mxu0 0
    %1350 = vmatmul.mubr.bf16.gmra.mrb[0].mxu0 %v908
    %v1351 = vpop.f32.mrb[0].mxu0
    %v1352 = vadd.f32 %v935, %v1351
    %v1353 = vpop.f32.mrb[0].mxu0
    %v1354 = vadd.f32 %v939, %v1353
    %v1355 = vpop.f32.mrb[0].mxu0
    %v1356 = vadd.f32 %v935, %v1355
    %v1357 = vpop.f32.mrb[0].mxu0
    %v1358 = vadd.f32 %v939, %v1357
    %1359 = vmatprep.mubr.bf16.mxu0 0
    %1360 = vmatmul.mubr.bf16.gmra.mrb[0].mxu0 %v909
    %v1361 = vpop.f32.mrb[0].mxu0
    %v1362 = vadd.f32 %v935, %v1361
    %v1363 = vpop.f32.mrb[0].mxu0
    %v1364 = vadd.f32 %v939, %v1363
    %v1365 = vpop.f32.mrb[0].mxu0
    %v1366 = vadd.f32 %v935, %v1365
    %v1367 = vpop.f32.mrb[0].mxu0
    %v1368 = vadd.f32 %v939, %v1367
    %1369 = vmatprep.mubr.bf16.mxu0 0
    %1370 = vmatmul.mubr.bf16.gmra.mrb[0].mxu0 %v910
    %v1371 = vpop.f32.mrb[0].mxu0
    %v1372 = vadd.f32 %v935, %v1371
    %v1373 = vpop.f32.mrb[0].mxu0
    %v1374 = vadd.f32 %v939, %v1373
    %v1375 = vpop.f32.mrb[0].mxu0
    %v1376 = vadd.f32 %v935, %v1375
    %v1377 = vpop.f32.mrb[0].mxu0
    %v1378 = vadd.f32 %v939, %v1377
    %1379 = vmatprep.mubr.bf16.mxu0 0
    %1380 = vmatmul.mubr.bf16.gmra.mrb[0].mxu0 %v911
    %v1381 = vpop.f32.mrb[0].mxu0
    %v1382 = vadd.f32 %v935, %v1381
    %v1383 = vpop.f32.mrb[0].mxu0
    %v1384 = vadd.f32 %v939, %v1383
    %v1385 = vpop.f32.mrb[0].mxu0
    %v1386 = vadd.f32 %v935, %v1385
    %v1387 = vpop.f32.mrb[0].mxu0
    %v1388 = vadd.f32 %v939, %v1387
    %1389 = vmatprep.mubr.bf16.mxu0 0
    %1390 = vmatmul.mubr.bf16.gmra.mrb[0].mxu0 %v912
    %v1391 = vpop.f32.mrb[0].mxu0
    %v1392 = vadd.f32 %v935, %v1391
    %v1393 = vpop.f32.mrb[0].mxu0
    %v1394 = vadd.f32 %v939, %v1393
    %v1395 = vpop.f32.mrb[0].mxu0
    %v1396 = vadd.f32 %v935, %v1395
    %v1397 = vpop.f32.mrb[0].mxu0
    %v1398 = vadd.f32 %v939, %v1397
    %1399 = vmatprep.mubr.bf16.mxu0 0
    %1400 = vmatmul.mubr.bf16.gmra.mrb[0].mxu0 %v913
    %v1401 = vpop.f32.mrb[0].mxu0
    %v1402 = vadd.f32 %v935, %v1401
    %v1403 = vpop.f32.mrb[0].mxu0
    %v1404 = vadd.f32 %v939, %v1403
    %v1405 = vpop.f32.mrb[0].mxu0
    %v1406 = vadd.f32 %v935, %v1405
    %v1407 = vpop.f32.mrb[0].mxu0
    %v1408 = vadd.f32 %v939, %v1407
    %1409 = vmatprep.mubr.bf16.mxu0 0
    %1410 = vmatmul.mubr.bf16.gmra.mrb[0].mxu0 %v914
    %v1411 = vpop.f32.mrb[0].mxu0
    %v1412 = vadd.f32 %v935, %v1411
    %v1413 = vpop.f32.mrb[0].mxu0
    %v1414 = vadd.f32 %v939, %v1413
    %v1415 = vpop.f32.mrb[0].mxu0
    %v1416 = vadd.f32 %v935, %v1415
    %v1417 = vpop.f32.mrb[0].mxu0
    %v1418 = vadd.f32 %v939, %v1417
    %1419 = vmatprep.mubr.bf16.mxu0 0
    %1420 = vmatmul.mubr.bf16.gmra.mrb[0].mxu0 %v915
    %v1421 = vpop.f32.mrb[0].mxu0
    %v1422 = vadd.f32 %v935, %v1421
    %v1423 = vpop.f32.mrb[0].mxu0
    %v1424 = vadd.f32 %v939, %v1423
    %v1425 = vpop.f32.mrb[0].mxu0
    %v1426 = vadd.f32 %v935, %v1425
    %v1427 = vpop.f32.mrb[0].mxu0
    %v1428 = vadd.f32 %v939, %v1427
    %1429 = vmatprep.mubr.bf16.mxu0 0
    %1430 = vmatmul.mubr.bf16.gmra.mrb[0].mxu0 %v916
    %v1431 = vpop.f32.mrb[0].mxu0
    %v1432 = vadd.f32 %v935, %v1431
    %v1433 = vpop.f32.mrb[0].mxu0
    %v1434 = vadd.f32 %v939, %v1433
    %v1435 = vpop.f32.mrb[0].mxu0
    %v1436 = vadd.f32 %v935, %v1435
    %v1437 = vpop.f32.mrb[0].mxu0
    %v1438 = vadd.f32 %v939, %v1437
    %1439 = vmatprep.mubr.bf16.mxu0 0
    %1440 = vmatmul.mubr.bf16.gmra.mrb[0].mxu0 %v917
    %v1441 = vpop.f32.mrb[0].mxu0
    %v1442 = vadd.f32 %v935, %v1441
    %v1443 = vpop.f32.mrb[0].mxu0
    %v1444 = vadd.f32 %v939, %v1443
    %v1445 = vpop.f32.mrb[0].mxu0
    %v1446 = vadd.f32 %v935, %v1445
    %v1447 = vpop.f32.mrb[0].mxu0
    %v1448 = vadd.f32 %v939, %v1447
    %1449 = vmatprep.mubr.bf16.mxu0 0
    %1450 = vmatmul.mubr.bf16.gmra.mrb[0].mxu0 %v918
    %v1451 = vpop.f32.mrb[0].mxu0
    %v1452 = vadd.f32 %v935, %v1451
    %v1453 = vpop.f32.mrb[0].mxu0
    %v1454 = vadd.f32 %v939, %v1453
    %v1455 = vpop.f32.mrb[0].mxu0
    %v1456 = vadd.f32 %v935, %v1455
    %v1457 = vpop.f32.mrb[0].mxu0
    %v1458 = vadd.f32 %v939, %v1457
    %1459 = vmatprep.mubr.bf16.mxu0 0
    %1460 = vmatmul.mubr.bf16.gmra.mrb[0].mxu0 %v919
    %v1461 = vpop.f32.mrb[0].mxu0
    %v1462 = vadd.f32 %v935, %v1461
    %v1463 = vpop.f32.mrb[0].mxu0
    %v1464 = vadd.f32 %v939, %v1463
    %v1465 = vpop.f32.mrb[0].mxu0
    %v1466 = vadd.f32 %v935, %v1465
    %v1467 = vpop.f32.mrb[0].mxu0
    %v1468 = vadd.f32 %v939, %v1467
    %1469 = vmatprep.mubr.bf16.mxu0 0
    %1470 = vmatmul.mubr.bf16.gmra.mrb[0].mxu0 %v920
    %v1471 = vpop.f32.mrb[0].mxu0
    %v1472 = vadd.f32 %v935, %v1471
    %v1473 = vpop.f32.mrb[0].mxu0
    %v1474 = vadd.f32 %v939, %v1473
    %v1475 = vpop.f32.mrb[0].mxu0
    %v1476 = vadd.f32 %v935, %v1475
    %v1477 = vpop.f32.mrb[0].mxu0
    %v1478 = vadd.f32 %v939, %v1477
    %1479 = vmatprep.mubr.bf16.mxu0 0
    %1480 = vmatmul.mubr.bf16.gmra.mrb[0].mxu0 %v921
    %v1481 = vpop.f32.mrb[0].mxu0
    %v1482 = vadd.f32 %v935, %v1481
    %v1483 = vpop.f32.mrb[0].mxu0
    %v1484 = vadd.f32 %v939, %v1483
    %v1485 = vpop.f32.mrb[0].mxu0
    %v1486 = vadd.f32 %v935, %v1485
    %v1487 = vpop.f32.mrb[0].mxu0
    %v1488 = vadd.f32 %v939, %v1487
    %1489 = vdwg.mxu0
    %v1490 = vmax.f32 %v1139, 0.0
    %v1491 = vmax.f32 %v1141, 0.0
    %v1492 = vmax.f32 %v1332, 0.0
    %v1493 = vmax.f32 %v1334, 0.0
    %v1494 = vmax.f32 %v1143, 0.0
    %v1495 = vmax.f32 %v1145, 0.0
    %v1496 = vmax.f32 %v1336, 0.0
    %v1497 = vmax.f32 %v1338, 0.0
    %v1498 = vmax.f32 %v1149, 0.0
    %v1499 = vmax.f32 %v1151, 0.0
    %v1500 = vmax.f32 %v1342, 0.0
    %v1501 = vmax.f32 %v1344, 0.0
    %v1502 = vmax.f32 %v1153, 0.0
    %v1503 = vmax.f32 %v1155, 0.0
    %v1504 = vmax.f32 %v1346, 0.0
    %v1505 = vmax.f32 %v1348, 0.0
    %v1506 = vmax.f32 %v1159, 0.0
    %v1507 = vmax.f32 %v1161, 0.0
    %v1508 = vmax.f32 %v1352, 0.0
    %v1509 = vmax.f32 %v1354, 0.0
    %v1510 = vmax.f32 %v1163, 0.0
    %v1511 = vmax.f32 %v1165, 0.0
    %v1512 = vmax.f32 %v1356, 0.0
    %v1513 = vmax.f32 %v1358, 0.0
    %v1514 = vmax.f32 %v1169, 0.0
    %v1515 = vmax.f32 %v1171, 0.0
    %v1516 = vmax.f32 %v1362, 0.0
    %v1517 = vmax.f32 %v1364, 0.0
    %v1518 = vmax.f32 %v1173, 0.0
    %v1519 = vmax.f32 %v1175, 0.0
    %v1520 = vmax.f32 %v1366, 0.0
    %v1521 = vmax.f32 %v1368, 0.0
    %v1522 = vmax.f32 %v1179, 0.0
    %v1523 = vmax.f32 %v1181, 0.0
    %v1524 = vmax.f32 %v1372, 0.0
    %v1525 = vmax.f32 %v1374, 0.0
    %v1526 = vmax.f32 %v1183, 0.0
    %v1527 = vmax.f32 %v1185, 0.0
    %v1528 = vmax.f32 %v1376, 0.0
    %v1529 = vmax.f32 %v1378, 0.0
    %v1530 = vmax.f32 %v1189, 0.0
    %v1531 = vmax.f32 %v1191, 0.0
    %v1532 = vmax.f32 %v1382, 0.0
    %v1533 = vmax.f32 %v1384, 0.0
    %v1534 = vmax.f32 %v1193, 0.0
    %v1535 = vmax.f32 %v1195, 0.0
    %v1536 = vmax.f32 %v1386, 0.0
    %v1537 = vmax.f32 %v1388, 0.0
    %v1538 = vmax.f32 %v1199, 0.0
    %v1539 = vmax.f32 %v1201, 0.0
    %v1540 = vmax.f32 %v1392, 0.0
    %v1541 = vmax.f32 %v1394, 0.0
    %v1542 = vmax.f32 %v1203, 0.0
    %v1543 = vmax.f32 %v1205, 0.0
    %v1544 = vmax.f32 %v1396, 0.0
    %v1545 = vmax.f32 %v1398, 0.0
    %v1546 = vmax.f32 %v1209, 0.0
    %v1547 = vmax.f32 %v1211, 0.0
    %v1548 = vmax.f32 %v1402, 0.0
    %v1549 = vmax.f32 %v1404, 0.0
    %v1550 = vmax.f32 %v1213, 0.0
    %v1551 = vmax.f32 %v1215, 0.0
    %v1552 = vmax.f32 %v1406, 0.0
    %v1553 = vmax.f32 %v1408, 0.0
    %v1554 = vmax.f32 %v1219, 0.0
    %v1555 = vmax.f32 %v1221, 0.0
    %v1556 = vmax.f32 %v1412, 0.0
    %v1557 = vmax.f32 %v1414, 0.0
    %v1558 = vmax.f32 %v1223, 0.0
    %v1559 = vmax.f32 %v1225, 0.0
    %v1560 = vmax.f32 %v1416, 0.0
    %v1561 = vmax.f32 %v1418, 0.0
    %v1562 = vmax.f32 %v1229, 0.0
    %v1563 = vmax.f32 %v1231, 0.0
    %v1564 = vmax.f32 %v1422, 0.0
    %v1565 = vmax.f32 %v1424, 0.0
    %v1566 = vmax.f32 %v1233, 0.0
    %v1567 = vmax.f32 %v1235, 0.0
    %v1568 = vmax.f32 %v1426, 0.0
    %v1569 = vmax.f32 %v1428, 0.0
    %v1570 = vmax.f32 %v1239, 0.0
    %v1571 = vmax.f32 %v1241, 0.0
    %v1572 = vmax.f32 %v1432, 0.0
    %v1573 = vmax.f32 %v1434, 0.0
    %v1574 = vmax.f32 %v1243, 0.0
    %v1575 = vmax.f32 %v1245, 0.0
    %v1576 = vmax.f32 %v1436, 0.0
    %v1577 = vmax.f32 %v1438, 0.0
    %v1578 = vmax.f32 %v1249, 0.0
    %v1579 = vmax.f32 %v1251, 0.0
    %v1580 = vmax.f32 %v1442, 0.0
    %v1581 = vmax.f32 %v1444, 0.0
    %v1582 = vmax.f32 %v1253, 0.0
    %v1583 = vmax.f32 %v1255, 0.0
    %v1584 = vmax.f32 %v1446, 0.0
    %v1585 = vmax.f32 %v1448, 0.0
    %v1586 = vmax.f32 %v1259, 0.0
    %v1587 = vmax.f32 %v1261, 0.0
    %v1588 = vmax.f32 %v1452, 0.0
    %v1589 = vmax.f32 %v1454, 0.0
    %v1590 = vmax.f32 %v1263, 0.0
    %v1591 = vmax.f32 %v1265, 0.0
    %v1592 = vmax.f32 %v1456, 0.0
    %v1593 = vmax.f32 %v1458, 0.0
    %v1594 = vmax.f32 %v1269, 0.0
    %v1595 = vmax.f32 %v1271, 0.0
    %v1596 = vmax.f32 %v1462, 0.0
    %v1597 = vmax.f32 %v1464, 0.0
    %v1598 = vmax.f32 %v1273, 0.0
    %v1599 = vmax.f32 %v1275, 0.0
    %v1600 = vmax.f32 %v1466, 0.0
    %v1601 = vmax.f32 %v1468, 0.0
    %v1602 = vmax.f32 %v1279, 0.0
    %v1603 = vmax.f32 %v1281, 0.0
    %v1604 = vmax.f32 %v1472, 0.0
    %v1605 = vmax.f32 %v1474, 0.0
    %v1606 = vmax.f32 %v1283, 0.0
    %v1607 = vmax.f32 %v1285, 0.0
    %v1608 = vmax.f32 %v1476, 0.0
    %v1609 = vmax.f32 %v1478, 0.0
    %v1610 = vmax.f32 %v1289, 0.0
    %v1611 = vmax.f32 %v1291, 0.0
    %v1612 = vmax.f32 %v1482, 0.0
    %v1613 = vmax.f32 %v1484, 0.0
    %v1614 = vmax.f32 %v1293, 0.0
    %v1615 = vmax.f32 %v1295, 0.0
    %v1616 = vmax.f32 %v1486, 0.0
    %v1617 = vmax.f32 %v1488, 0.0
    %v1618 = vpack.c.bf16 %v1494, %v1490
    %v1619 = vpack.c.bf16 %v1495, %v1491
    %v1620 = vpack.c.bf16 %v1496, %v1492
    %v1621 = vpack.c.bf16 %v1497, %v1493
    %v1622 = vpack.c.bf16 %v1502, %v1498
    %v1623 = vpack.c.bf16 %v1503, %v1499
    %v1624 = vpack.c.bf16 %v1504, %v1500
    %v1625 = vpack.c.bf16 %v1505, %v1501
    %v1626 = vpack.c.bf16 %v1510, %v1506
    %v1627 = vpack.c.bf16 %v1511, %v1507
    %v1628 = vpack.c.bf16 %v1512, %v1508
    %v1629 = vpack.c.bf16 %v1513, %v1509
    %v1630 = vpack.c.bf16 %v1518, %v1514
    %v1631 = vpack.c.bf16 %v1519, %v1515
    %v1632 = vpack.c.bf16 %v1520, %v1516
    %v1633 = vpack.c.bf16 %v1521, %v1517
    %v1634 = vpack.c.bf16 %v1526, %v1522
    %v1635 = vpack.c.bf16 %v1527, %v1523
    %v1636 = vpack.c.bf16 %v1528, %v1524
    %v1637 = vpack.c.bf16 %v1529, %v1525
    %v1638 = vpack.c.bf16 %v1534, %v1530
    %v1639 = vpack.c.bf16 %v1535, %v1531
    %v1640 = vpack.c.bf16 %v1536, %v1532
    %v1641 = vpack.c.bf16 %v1537, %v1533
    %v1642 = vpack.c.bf16 %v1542, %v1538
    %v1643 = vpack.c.bf16 %v1543, %v1539
    %v1644 = vpack.c.bf16 %v1544, %v1540
    %v1645 = vpack.c.bf16 %v1545, %v1541
    %v1646 = vpack.c.bf16 %v1550, %v1546
    %v1647 = vpack.c.bf16 %v1551, %v1547
    %v1648 = vpack.c.bf16 %v1552, %v1548
    %v1649 = vpack.c.bf16 %v1553, %v1549
    %v1650 = vpack.c.bf16 %v1558, %v1554
    %v1651 = vpack.c.bf16 %v1559, %v1555
    %v1652 = vpack.c.bf16 %v1560, %v1556
    %v1653 = vpack.c.bf16 %v1561, %v1557
    %v1654 = vpack.c.bf16 %v1566, %v1562
    %v1655 = vpack.c.bf16 %v1567, %v1563
    %v1656 = vpack.c.bf16 %v1568, %v1564
    %v1657 = vpack.c.bf16 %v1569, %v1565
    %v1658 = vpack.c.bf16 %v1574, %v1570
    %v1659 = vpack.c.bf16 %v1575, %v1571
    %v1660 = vpack.c.bf16 %v1576, %v1572
    %v1661 = vpack.c.bf16 %v1577, %v1573
    %v1662 = vpack.c.bf16 %v1582, %v1578
    %v1663 = vpack.c.bf16 %v1583, %v1579
    %v1664 = vpack.c.bf16 %v1584, %v1580
    %v1665 = vpack.c.bf16 %v1585, %v1581
    %v1666 = vpack.c.bf16 %v1590, %v1586
    %v1667 = vpack.c.bf16 %v1591, %v1587
    %v1668 = vpack.c.bf16 %v1592, %v1588
    %v1669 = vpack.c.bf16 %v1593, %v1589
    %v1670 = vpack.c.bf16 %v1598, %v1594
    %v1671 = vpack.c.bf16 %v1599, %v1595
    %v1672 = vpack.c.bf16 %v1600, %v1596
    %v1673 = vpack.c.bf16 %v1601, %v1597
    %v1674 = vpack.c.bf16 %v1606, %v1602
    %v1675 = vpack.c.bf16 %v1607, %v1603
    %v1676 = vpack.c.bf16 %v1608, %v1604
    %v1677 = vpack.c.bf16 %v1609, %v1605
    %v1678 = vpack.c.bf16 %v1614, %v1610
    %v1679 = vpack.c.bf16 %v1615, %v1611
    %v1680 = vpack.c.bf16 %v1616, %v1612
    %v1681 = vpack.c.bf16 %v1617, %v1613
    %v1682 = vld [vmem:[%s6 + $0x5] sm:$0x3]
    %v1684 = vlaneseq
    %v1685 = vshrl.u32 %v1684, 7
    %v1686 = vsub.s32 0, %v1685
    %v1687 = vrot.slane %v1682, %v1686
    %v1688 = vlaneseq
    %v1689 = vshrl.u32 %v1688, 7
    %v1690 = vsub.s32 1, %v1689
    %v1691 = vrot.slane %v1682, %v1690
    %v1758 = vunpack.c.l.b16 %v178
    %v1759 = vunpack.c.h.b16 %v178
    %v1760 = vunpack.c.l.b16 %v179
    %v1761 = vunpack.c.h.b16 %v179
    %v1762 = vunpack.c.l.b16 %v180
    %v1763 = vunpack.c.h.b16 %v180
    %v1764 = vunpack.c.l.b16 %v181
    %v1765 = vunpack.c.h.b16 %v181
    %v1766 = vunpack.c.l.b16 %v182
    %v1767 = vunpack.c.h.b16 %v182
    %v1768 = vunpack.c.l.b16 %v183
    %v1769 = vunpack.c.h.b16 %v183
    %v1770 = vunpack.c.l.b16 %v184
    %v1771 = vunpack.c.h.b16 %v184
    %v1772 = vunpack.c.l.b16 %v185
    %v1773 = vunpack.c.h.b16 %v185
    %v1774 = vunpack.c.l.b16 %v186
    %v1775 = vunpack.c.h.b16 %v186
    %v1776 = vunpack.c.l.b16 %v187
    %v1777 = vunpack.c.h.b16 %v187
    %v1778 = vunpack.c.l.b16 %v188
    %v1779 = vunpack.c.h.b16 %v188
    %v1780 = vunpack.c.l.b16 %v189
    %v1781 = vunpack.c.h.b16 %v189
    %v1782 = vunpack.c.l.b16 %v190
    %v1783 = vunpack.c.h.b16 %v190
    %v1784 = vunpack.c.l.b16 %v191
    %v1785 = vunpack.c.h.b16 %v191
    %v1786 = vunpack.c.l.b16 %v192
    %v1787 = vunpack.c.h.b16 %v192
    %v1788 = vunpack.c.l.b16 %v193
    %v1789 = vunpack.c.h.b16 %v193
    %v1790 = vunpack.c.l.b16 %v194
    %v1791 = vunpack.c.h.b16 %v194
    %v1792 = vunpack.c.l.b16 %v195
    %v1793 = vunpack.c.h.b16 %v195
    %v1794 = vunpack.c.l.b16 %v196
    %v1795 = vunpack.c.h.b16 %v196
    %v1796 = vunpack.c.l.b16 %v197
    %v1797 = vunpack.c.h.b16 %v197
    %v1798 = vunpack.c.l.b16 %v198
    %v1799 = vunpack.c.h.b16 %v198
    %v1800 = vunpack.c.l.b16 %v199
    %v1801 = vunpack.c.h.b16 %v199
    %v1802 = vunpack.c.l.b16 %v200
    %v1803 = vunpack.c.h.b16 %v200
    %v1804 = vunpack.c.l.b16 %v201
    %v1805 = vunpack.c.h.b16 %v201
    %v1806 = vunpack.c.l.b16 %v202
    %v1807 = vunpack.c.h.b16 %v202
    %v1808 = vunpack.c.l.b16 %v203
    %v1809 = vunpack.c.h.b16 %v203
    %v1810 = vunpack.c.l.b16 %v204
    %v1811 = vunpack.c.h.b16 %v204
    %v1812 = vunpack.c.l.b16 %v205
    %v1813 = vunpack.c.h.b16 %v205
    %v1814 = vunpack.c.l.b16 %v206
    %v1815 = vunpack.c.h.b16 %v206
    %v1816 = vunpack.c.l.b16 %v207
    %v1817 = vunpack.c.h.b16 %v207
    %v1818 = vunpack.c.l.b16 %v208
    %v1819 = vunpack.c.h.b16 %v208
    %v1820 = vunpack.c.l.b16 %v209
    %v1821 = vunpack.c.h.b16 %v209
    %v1822 = vunpack.c.l.b16 %v210
    %v1823 = vunpack.c.h.b16 %v210
    %v1824 = vunpack.c.l.b16 %v211
    %v1825 = vunpack.c.h.b16 %v211
    %v1826 = vunpack.c.l.b16 %v212
    %v1827 = vunpack.c.h.b16 %v212
    %v1828 = vunpack.c.l.b16 %v213
    %v1829 = vunpack.c.h.b16 %v213
    %v1830 = vunpack.c.l.b16 %v214
    %v1831 = vunpack.c.h.b16 %v214
    %v1832 = vunpack.c.l.b16 %v215
    %v1833 = vunpack.c.h.b16 %v215
    %v1834 = vunpack.c.l.b16 %v216
    %v1835 = vunpack.c.h.b16 %v216
    %v1836 = vunpack.c.l.b16 %v217
    %v1837 = vunpack.c.h.b16 %v217
    %v1838 = vunpack.c.l.b16 %v218
    %v1839 = vunpack.c.h.b16 %v218
    %v1840 = vunpack.c.l.b16 %v219
    %v1841 = vunpack.c.h.b16 %v219
    %v1842 = vunpack.c.l.b16 %v220
    %v1843 = vunpack.c.h.b16 %v220
    %v1844 = vunpack.c.l.b16 %v221
    %v1845 = vunpack.c.h.b16 %v221
    %v1846 = vunpack.c.l.b16 %v222
    %v1847 = vunpack.c.h.b16 %v222
    %v1848 = vunpack.c.l.b16 %v223
    %v1849 = vunpack.c.h.b16 %v223
    %v1850 = vunpack.c.l.b16 %v224
    %v1851 = vunpack.c.h.b16 %v224
    %v1852 = vunpack.c.l.b16 %v225
    %v1853 = vunpack.c.h.b16 %v225
    %v1854 = vunpack.c.l.b16 %v226
    %v1855 = vunpack.c.h.b16 %v226
    %v1856 = vunpack.c.l.b16 %v227
    %v1857 = vunpack.c.h.b16 %v227
    %v1858 = vunpack.c.l.b16 %v228
    %v1859 = vunpack.c.h.b16 %v228
    %v1860 = vunpack.c.l.b16 %v229
    %v1861 = vunpack.c.h.b16 %v229
    %v1862 = vunpack.c.l.b16 %v230
    %v1863 = vunpack.c.h.b16 %v230
    %v1864 = vunpack.c.l.b16 %v231
    %v1865 = vunpack.c.h.b16 %v231
    %v1866 = vunpack.c.l.b16 %v232
    %v1867 = vunpack.c.h.b16 %v232
    %v1868 = vunpack.c.l.b16 %v233
    %v1869 = vunpack.c.h.b16 %v233
    %v1870 = vunpack.c.l.b16 %v234
    %v1871 = vunpack.c.h.b16 %v234
    %v1872 = vunpack.c.l.b16 %v235
    %v1873 = vunpack.c.h.b16 %v235
    %v1874 = vunpack.c.l.b16 %v236
    %v1875 = vunpack.c.h.b16 %v236
    %v1876 = vunpack.c.l.b16 %v237
    %v1877 = vunpack.c.h.b16 %v237
    %v1878 = vunpack.c.l.b16 %v238
    %v1879 = vunpack.c.h.b16 %v238
    %v1880 = vunpack.c.l.b16 %v239
    %v1881 = vunpack.c.h.b16 %v239
    %v1882 = vunpack.c.l.b16 %v240
    %v1883 = vunpack.c.h.b16 %v240
    %v1884 = vunpack.c.l.b16 %v241
    %v1885 = vunpack.c.h.b16 %v241
    %v1886 = vpack.c.b16 %v1760, %v1758
    %v1887 = vpack.c.b16 %v1761, %v1759
    %v1888 = vpack.c.b16 %v1764, %v1762
    %v1889 = vpack.c.b16 %v1765, %v1763
    %v1890 = vpack.c.b16 %v1768, %v1766
    %v1891 = vpack.c.b16 %v1769, %v1767
    %v1892 = vpack.c.b16 %v1772, %v1770
    %v1893 = vpack.c.b16 %v1773, %v1771
    %v1894 = vpack.c.b16 %v1776, %v1774
    %v1895 = vpack.c.b16 %v1777, %v1775
    %v1896 = vpack.c.b16 %v1780, %v1778
    %v1897 = vpack.c.b16 %v1781, %v1779
    %v1898 = vpack.c.b16 %v1784, %v1782
    %v1899 = vpack.c.b16 %v1785, %v1783
    %v1900 = vpack.c.b16 %v1788, %v1786
    %v1901 = vpack.c.b16 %v1789, %v1787
    %v1902 = vpack.c.b16 %v1792, %v1790
    %v1903 = vpack.c.b16 %v1793, %v1791
    %v1904 = vpack.c.b16 %v1796, %v1794
    %v1905 = vpack.c.b16 %v1797, %v1795
    %v1906 = vpack.c.b16 %v1800, %v1798
    %v1907 = vpack.c.b16 %v1801, %v1799
    %v1908 = vpack.c.b16 %v1804, %v1802
    %v1909 = vpack.c.b16 %v1805, %v1803
    %v1910 = vpack.c.b16 %v1808, %v1806
    %v1911 = vpack.c.b16 %v1809, %v1807
    %v1912 = vpack.c.b16 %v1812, %v1810
    %v1913 = vpack.c.b16 %v1813, %v1811
    %v1914 = vpack.c.b16 %v1816, %v1814
    %v1915 = vpack.c.b16 %v1817, %v1815
    %v1916 = vpack.c.b16 %v1820, %v1818
    %v1917 = vpack.c.b16 %v1821, %v1819
    %v1918 = vpack.c.b16 %v1824, %v1822
    %v1919 = vpack.c.b16 %v1825, %v1823
    %v1920 = vpack.c.b16 %v1828, %v1826
    %v1921 = vpack.c.b16 %v1829, %v1827
    %v1922 = vpack.c.b16 %v1832, %v1830
    %v1923 = vpack.c.b16 %v1833, %v1831
    %v1924 = vpack.c.b16 %v1836, %v1834
    %v1925 = vpack.c.b16 %v1837, %v1835
    %v1926 = vpack.c.b16 %v1840, %v1838
    %v1927 = vpack.c.b16 %v1841, %v1839
    %v1928 = vpack.c.b16 %v1844, %v1842
    %v1929 = vpack.c.b16 %v1845, %v1843
    %v1930 = vpack.c.b16 %v1848, %v1846
    %v1931 = vpack.c.b16 %v1849, %v1847
    %v1932 = vpack.c.b16 %v1852, %v1850
    %v1933 = vpack.c.b16 %v1853, %v1851
    %v1934 = vpack.c.b16 %v1856, %v1854
    %v1935 = vpack.c.b16 %v1857, %v1855
    %v1936 = vpack.c.b16 %v1860, %v1858
    %v1937 = vpack.c.b16 %v1861, %v1859
    %v1938 = vpack.c.b16 %v1864, %v1862
    %v1939 = vpack.c.b16 %v1865, %v1863
    %v1940 = vpack.c.b16 %v1868, %v1866
    %v1941 = vpack.c.b16 %v1869, %v1867
    %v1942 = vpack.c.b16 %v1872, %v1870
    %v1943 = vpack.c.b16 %v1873, %v1871
    %v1944 = vpack.c.b16 %v1876, %v1874
    %v1945 = vpack.c.b16 %v1877, %v1875
    %v1946 = vpack.c.b16 %v1880, %v1878
    %v1947 = vpack.c.b16 %v1881, %v1879
    %v1948 = vpack.c.b16 %v1884, %v1882
    %v1949 = vpack.c.b16 %v1885, %v1883
    %2014 = vmatprep.subr.bf16.mxu0 %v1887
    %2015 = vmatpush1.bf16.msra.mxu0 %v1886
    %2016 = vmatprep.subr.bf16.mxu0 %v1889
    %2017 = vmatpush1.bf16.msra.mxu0 %v1888
    %2018 = vmatprep.subr.bf16.mxu0 %v1891
    %2019 = vmatpush1.bf16.msra.mxu0 %v1890
    %2020 = vmatprep.subr.bf16.mxu0 %v1893
    %2021 = vmatpush1.bf16.msra.mxu0 %v1892
    %2022 = vmatprep.subr.bf16.mxu0 %v1895
    %2023 = vmatpush1.bf16.msra.mxu0 %v1894
    %2024 = vmatprep.subr.bf16.mxu0 %v1897
    %2025 = vmatpush1.bf16.msra.mxu0 %v1896
    %2026 = vmatprep.subr.bf16.mxu0 %v1899
    %2027 = vmatpush1.bf16.msra.mxu0 %v1898
    %2028 = vmatprep.subr.bf16.mxu0 %v1901
    %2029 = vmatpush1.bf16.msra.mxu0 %v1900
    %2030 = vmatprep.subr.bf16.mxu0 %v1903
    %2031 = vmatpush1.bf16.msra.mxu0 %v1902
    %2032 = vmatprep.subr.bf16.mxu0 %v1905
    %2033 = vmatpush1.bf16.msra.mxu0 %v1904
    %2034 = vmatprep.subr.bf16.mxu0 %v1907
    %2035 = vmatpush1.bf16.msra.mxu0 %v1906
    %2036 = vmatprep.subr.bf16.mxu0 %v1909
    %2037 = vmatpush1.bf16.msra.mxu0 %v1908
    %2038 = vmatprep.subr.bf16.mxu0 %v1911
    %2039 = vmatpush1.bf16.msra.mxu0 %v1910
    %2040 = vmatprep.subr.bf16.mxu0 %v1913
    %2041 = vmatpush1.bf16.msra.mxu0 %v1912
    %2042 = vmatprep.subr.bf16.mxu0 %v1915
    %2043 = vmatpush1.bf16.msra.mxu0 %v1914
    %2044 = vmatprep.subr.bf16.mxu0 %v1917
    %2045 = vmatpush1.bf16.msra.mxu0 %v1916
    %2046 = vmatprep.mubr.bf16.mxu0 %v1619
    %2047 = vmatmul.mubr.bf16.gmra.mrb[0].mxu0 %v1618
    %v2048 = vpop.f32.mrb[0].mxu0
    %v2049 = vadd.f32 %v1687, %v2048
    %v2050 = vpop.f32.mrb[0].mxu0
    %v2051 = vadd.f32 %v1691, %v2050
    %v2052 = vpop.f32.mrb[0].mxu0
    %v2053 = vadd.f32 %v1687, %v2052
    %v2054 = vpop.f32.mrb[0].mxu0
    %v2055 = vadd.f32 %v1691, %v2054
    %2056 = vmatprep.mubr.bf16.mxu0 %v1623
    %2057 = vmatmul.mubr.bf16.gmra.mrb[0].mxu0 %v1622
    %v2058 = vpop.f32.mrb[0].mxu0
    %v2059 = vadd.f32 %v1687, %v2058
    %v2060 = vpop.f32.mrb[0].mxu0
    %v2061 = vadd.f32 %v1691, %v2060
    %v2062 = vpop.f32.mrb[0].mxu0
    %v2063 = vadd.f32 %v1687, %v2062
    %v2064 = vpop.f32.mrb[0].mxu0
    %v2065 = vadd.f32 %v1691, %v2064
    %2066 = vmatprep.mubr.bf16.mxu0 %v1627
    %2067 = vmatmul.mubr.bf16.gmra.mrb[0].mxu0 %v1626
    %v2068 = vpop.f32.mrb[0].mxu0
    %v2069 = vadd.f32 %v1687, %v2068
    %v2070 = vpop.f32.mrb[0].mxu0
    %v2071 = vadd.f32 %v1691, %v2070
    %v2072 = vpop.f32.mrb[0].mxu0
    %v2073 = vadd.f32 %v1687, %v2072
    %v2074 = vpop.f32.mrb[0].mxu0
    %v2075 = vadd.f32 %v1691, %v2074
    %2076 = vmatprep.mubr.bf16.mxu0 %v1631
    %2077 = vmatmul.mubr.bf16.gmra.mrb[0].mxu0 %v1630
    %v2078 = vpop.f32.mrb[0].mxu0
    %v2079 = vadd.f32 %v1687, %v2078
    %v2080 = vpop.f32.mrb[0].mxu0
    %v2081 = vadd.f32 %v1691, %v2080
    %v2082 = vpop.f32.mrb[0].mxu0
    %v2083 = vadd.f32 %v1687, %v2082
    %v2084 = vpop.f32.mrb[0].mxu0
    %v2085 = vadd.f32 %v1691, %v2084
    %2086 = vmatprep.mubr.bf16.mxu0 %v1635
    %2087 = vmatmul.mubr.bf16.gmra.mrb[0].mxu0 %v1634
    %v2088 = vpop.f32.mrb[0].mxu0
    %v2089 = vadd.f32 %v1687, %v2088
    %v2090 = vpop.f32.mrb[0].mxu0
    %v2091 = vadd.f32 %v1691, %v2090
    %v2092 = vpop.f32.mrb[0].mxu0
    %v2093 = vadd.f32 %v1687, %v2092
    %v2094 = vpop.f32.mrb[0].mxu0
    %v2095 = vadd.f32 %v1691, %v2094
    %2096 = vmatprep.mubr.bf16.mxu0 %v1639
    %2097 = vmatmul.mubr.bf16.gmra.mrb[0].mxu0 %v1638
    %v2098 = vpop.f32.mrb[0].mxu0
    %v2099 = vadd.f32 %v1687, %v2098
    %v2100 = vpop.f32.mrb[0].mxu0
    %v2101 = vadd.f32 %v1691, %v2100
    %v2102 = vpop.f32.mrb[0].mxu0
    %v2103 = vadd.f32 %v1687, %v2102
    %v2104 = vpop.f32.mrb[0].mxu0
    %v2105 = vadd.f32 %v1691, %v2104
    %2106 = vmatprep.mubr.bf16.mxu0 %v1643
    %2107 = vmatmul.mubr.bf16.gmra.mrb[0].mxu0 %v1642
    %v2108 = vpop.f32.mrb[0].mxu0
    %v2109 = vadd.f32 %v1687, %v2108
    %v2110 = vpop.f32.mrb[0].mxu0
    %v2111 = vadd.f32 %v1691, %v2110
    %v2112 = vpop.f32.mrb[0].mxu0
    %v2113 = vadd.f32 %v1687, %v2112
    %v2114 = vpop.f32.mrb[0].mxu0
    %v2115 = vadd.f32 %v1691, %v2114
    %2116 = vmatprep.mubr.bf16.mxu0 %v1647
    %2117 = vmatmul.mubr.bf16.gmra.mrb[0].mxu0 %v1646
    %v2118 = vpop.f32.mrb[0].mxu0
    %v2119 = vadd.f32 %v1687, %v2118
    %v2120 = vpop.f32.mrb[0].mxu0
    %v2121 = vadd.f32 %v1691, %v2120
    %v2122 = vpop.f32.mrb[0].mxu0
    %v2123 = vadd.f32 %v1687, %v2122
    %v2124 = vpop.f32.mrb[0].mxu0
    %v2125 = vadd.f32 %v1691, %v2124
    %2126 = vmatprep.mubr.bf16.mxu0 %v1651
    %2127 = vmatmul.mubr.bf16.gmra.mrb[0].mxu0 %v1650
    %v2128 = vpop.f32.mrb[0].mxu0
    %v2129 = vadd.f32 %v1687, %v2128
    %v2130 = vpop.f32.mrb[0].mxu0
    %v2131 = vadd.f32 %v1691, %v2130
    %v2132 = vpop.f32.mrb[0].mxu0
    %v2133 = vadd.f32 %v1687, %v2132
    %v2134 = vpop.f32.mrb[0].mxu0
    %v2135 = vadd.f32 %v1691, %v2134
    %2136 = vmatprep.mubr.bf16.mxu0 %v1655
    %2137 = vmatmul.mubr.bf16.gmra.mrb[0].mxu0 %v1654
    %v2138 = vpop.f32.mrb[0].mxu0
    %v2139 = vadd.f32 %v1687, %v2138
    %v2140 = vpop.f32.mrb[0].mxu0
    %v2141 = vadd.f32 %v1691, %v2140
    %v2142 = vpop.f32.mrb[0].mxu0
    %v2143 = vadd.f32 %v1687, %v2142
    %v2144 = vpop.f32.mrb[0].mxu0
    %v2145 = vadd.f32 %v1691, %v2144
    %2146 = vmatprep.mubr.bf16.mxu0 %v1659
    %2147 = vmatmul.mubr.bf16.gmra.mrb[0].mxu0 %v1658
    %v2148 = vpop.f32.mrb[0].mxu0
    %v2149 = vadd.f32 %v1687, %v2148
    %v2150 = vpop.f32.mrb[0].mxu0
    %v2151 = vadd.f32 %v1691, %v2150
    %v2152 = vpop.f32.mrb[0].mxu0
    %v2153 = vadd.f32 %v1687, %v2152
    %v2154 = vpop.f32.mrb[0].mxu0
    %v2155 = vadd.f32 %v1691, %v2154
    %2156 = vmatprep.mubr.bf16.mxu0 %v1663
    %2157 = vmatmul.mubr.bf16.gmra.mrb[0].mxu0 %v1662
    %v2158 = vpop.f32.mrb[0].mxu0
    %v2159 = vadd.f32 %v1687, %v2158
    %v2160 = vpop.f32.mrb[0].mxu0
    %v2161 = vadd.f32 %v1691, %v2160
    %v2162 = vpop.f32.mrb[0].mxu0
    %v2163 = vadd.f32 %v1687, %v2162
    %v2164 = vpop.f32.mrb[0].mxu0
    %v2165 = vadd.f32 %v1691, %v2164
    %2166 = vmatprep.mubr.bf16.mxu0 %v1667
    %2167 = vmatmul.mubr.bf16.gmra.mrb[0].mxu0 %v1666
    %v2168 = vpop.f32.mrb[0].mxu0
    %v2169 = vadd.f32 %v1687, %v2168
    %v2170 = vpop.f32.mrb[0].mxu0
    %v2171 = vadd.f32 %v1691, %v2170
    %v2172 = vpop.f32.mrb[0].mxu0
    %v2173 = vadd.f32 %v1687, %v2172
    %v2174 = vpop.f32.mrb[0].mxu0
    %v2175 = vadd.f32 %v1691, %v2174
    %2176 = vmatprep.mubr.bf16.mxu0 %v1671
    %2177 = vmatmul.mubr.bf16.gmra.mrb[0].mxu0 %v1670
    %v2178 = vpop.f32.mrb[0].mxu0
    %v2179 = vadd.f32 %v1687, %v2178
    %v2180 = vpop.f32.mrb[0].mxu0
    %v2181 = vadd.f32 %v1691, %v2180
    %v2182 = vpop.f32.mrb[0].mxu0
    %v2183 = vadd.f32 %v1687, %v2182
    %v2184 = vpop.f32.mrb[0].mxu0
    %v2185 = vadd.f32 %v1691, %v2184
    %2186 = vmatprep.mubr.bf16.mxu0 %v1675
    %2187 = vmatmul.mubr.bf16.gmra.mrb[0].mxu0 %v1674
    %v2188 = vpop.f32.mrb[0].mxu0
    %v2189 = vadd.f32 %v1687, %v2188
    %v2190 = vpop.f32.mrb[0].mxu0
    %v2191 = vadd.f32 %v1691, %v2190
    %v2192 = vpop.f32.mrb[0].mxu0
    %v2193 = vadd.f32 %v1687, %v2192
    %v2194 = vpop.f32.mrb[0].mxu0
    %v2195 = vadd.f32 %v1691, %v2194
    %2196 = vmatprep.mubr.bf16.mxu0 %v1679
    %2197 = vmatmul.mubr.bf16.gmra.mrb[0].mxu0 %v1678
    %v2198 = vpop.f32.mrb[0].mxu0
    %v2199 = vadd.f32 %v1687, %v2198
    %v2200 = vpop.f32.mrb[0].mxu0
    %v2201 = vadd.f32 %v1691, %v2200
    %v2202 = vpop.f32.mrb[0].mxu0
    %v2203 = vadd.f32 %v1687, %v2202
    %v2204 = vpop.f32.mrb[0].mxu0
    %v2205 = vadd.f32 %v1691, %v2204
    %2206 = vdwg.mxu0
    %2207 = vmatprep.subr.bf16.mxu0 %v1919
    %2208 = vmatpush1.bf16.msra.mxu0 %v1918
    %2209 = vmatprep.subr.bf16.mxu0 %v1921
    %2210 = vmatpush1.bf16.msra.mxu0 %v1920
    %2211 = vmatprep.subr.bf16.mxu0 %v1923
    %2212 = vmatpush1.bf16.msra.mxu0 %v1922
    %2213 = vmatprep.subr.bf16.mxu0 %v1925
    %2214 = vmatpush1.bf16.msra.mxu0 %v1924
    %2215 = vmatprep.subr.bf16.mxu0 %v1927
    %2216 = vmatpush1.bf16.msra.mxu0 %v1926
    %2217 = vmatprep.subr.bf16.mxu0 %v1929
    %2218 = vmatpush1.bf16.msra.mxu0 %v1928
    %2219 = vmatprep.subr.bf16.mxu0 %v1931
    %2220 = vmatpush1.bf16.msra.mxu0 %v1930
    %2221 = vmatprep.subr.bf16.mxu0 %v1933
    %2222 = vmatpush1.bf16.msra.mxu0 %v1932
    %2223 = vmatprep.subr.bf16.mxu0 %v1935
    %2224 = vmatpush1.bf16.msra.mxu0 %v1934
    %2225 = vmatprep.subr.bf16.mxu0 %v1937
    %2226 = vmatpush1.bf16.msra.mxu0 %v1936
    %2227 = vmatprep.subr.bf16.mxu0 %v1939
    %2228 = vmatpush1.bf16.msra.mxu0 %v1938
    %2229 = vmatprep.subr.bf16.mxu0 %v1941
    %2230 = vmatpush1.bf16.msra.mxu0 %v1940
    %2231 = vmatprep.subr.bf16.mxu0 %v1943
    %2232 = vmatpush1.bf16.msra.mxu0 %v1942
    %2233 = vmatprep.subr.bf16.mxu0 %v1945
    %2234 = vmatpush1.bf16.msra.mxu0 %v1944
    %2235 = vmatprep.subr.bf16.mxu0 %v1947
    %2236 = vmatpush1.bf16.msra.mxu0 %v1946
    %2237 = vmatprep.subr.bf16.mxu0 %v1949
    %2238 = vmatpush1.bf16.msra.mxu0 %v1948
    %2239 = vmatprep.mubr.bf16.mxu0 %v1621
    %2240 = vmatmul.mubr.bf16.gmra.mrb[0].mxu0 %v1620
    %v2241 = vpop.f32.mrb[0].mxu0
    %v2242 = vadd.f32 %v2049, %v2241
    %v2243 = vpop.f32.mrb[0].mxu0
    %v2244 = vadd.f32 %v2051, %v2243
    %v2245 = vpop.f32.mrb[0].mxu0
    %v2246 = vadd.f32 %v2053, %v2245
    %v2247 = vpop.f32.mrb[0].mxu0
    %v2248 = vadd.f32 %v2055, %v2247
    %2249 = vmatprep.mubr.bf16.mxu0 %v1625
    %2250 = vmatmul.mubr.bf16.gmra.mrb[0].mxu0 %v1624
    %v2251 = vpop.f32.mrb[0].mxu0
    %v2252 = vadd.f32 %v2059, %v2251
    %v2253 = vpop.f32.mrb[0].mxu0
    %v2254 = vadd.f32 %v2061, %v2253
    %v2255 = vpop.f32.mrb[0].mxu0
    %v2256 = vadd.f32 %v2063, %v2255
    %v2257 = vpop.f32.mrb[0].mxu0
    %v2258 = vadd.f32 %v2065, %v2257
    %2259 = vmatprep.mubr.bf16.mxu0 %v1629
    %2260 = vmatmul.mubr.bf16.gmra.mrb[0].mxu0 %v1628
    %v2261 = vpop.f32.mrb[0].mxu0
    %v2262 = vadd.f32 %v2069, %v2261
    %v2263 = vpop.f32.mrb[0].mxu0
    %v2264 = vadd.f32 %v2071, %v2263
    %v2265 = vpop.f32.mrb[0].mxu0
    %v2266 = vadd.f32 %v2073, %v2265
    %v2267 = vpop.f32.mrb[0].mxu0
    %v2268 = vadd.f32 %v2075, %v2267
    %2269 = vmatprep.mubr.bf16.mxu0 %v1633
    %2270 = vmatmul.mubr.bf16.gmra.mrb[0].mxu0 %v1632
    %v2271 = vpop.f32.mrb[0].mxu0
    %v2272 = vadd.f32 %v2079, %v2271
    %v2273 = vpop.f32.mrb[0].mxu0
    %v2274 = vadd.f32 %v2081, %v2273
    %v2275 = vpop.f32.mrb[0].mxu0
    %v2276 = vadd.f32 %v2083, %v2275
    %v2277 = vpop.f32.mrb[0].mxu0
    %v2278 = vadd.f32 %v2085, %v2277
    %2279 = vmatprep.mubr.bf16.mxu0 %v1637
    %2280 = vmatmul.mubr.bf16.gmra.mrb[0].mxu0 %v1636
    %v2281 = vpop.f32.mrb[0].mxu0
    %v2282 = vadd.f32 %v2089, %v2281
    %v2283 = vpop.f32.mrb[0].mxu0
    %v2284 = vadd.f32 %v2091, %v2283
    %v2285 = vpop.f32.mrb[0].mxu0
    %v2286 = vadd.f32 %v2093, %v2285
    %v2287 = vpop.f32.mrb[0].mxu0
    %v2288 = vadd.f32 %v2095, %v2287
    %2289 = vmatprep.mubr.bf16.mxu0 %v1641
    %2290 = vmatmul.mubr.bf16.gmra.mrb[0].mxu0 %v1640
    %v2291 = vpop.f32.mrb[0].mxu0
    %v2292 = vadd.f32 %v2099, %v2291
    %v2293 = vpop.f32.mrb[0].mxu0
    %v2294 = vadd.f32 %v2101, %v2293
    %v2295 = vpop.f32.mrb[0].mxu0
    %v2296 = vadd.f32 %v2103, %v2295
    %v2297 = vpop.f32.mrb[0].mxu0
    %v2298 = vadd.f32 %v2105, %v2297
    %2299 = vmatprep.mubr.bf16.mxu0 %v1645
    %2300 = vmatmul.mubr.bf16.gmra.mrb[0].mxu0 %v1644
    %v2301 = vpop.f32.mrb[0].mxu0
    %v2302 = vadd.f32 %v2109, %v2301
    %v2303 = vpop.f32.mrb[0].mxu0
    %v2304 = vadd.f32 %v2111, %v2303
    %v2305 = vpop.f32.mrb[0].mxu0
    %v2306 = vadd.f32 %v2113, %v2305
    %v2307 = vpop.f32.mrb[0].mxu0
    %v2308 = vadd.f32 %v2115, %v2307
    %2309 = vmatprep.mubr.bf16.mxu0 %v1649
    %2310 = vmatmul.mubr.bf16.gmra.mrb[0].mxu0 %v1648
    %v2311 = vpop.f32.mrb[0].mxu0
    %v2312 = vadd.f32 %v2119, %v2311
    %v2313 = vpop.f32.mrb[0].mxu0
    %v2314 = vadd.f32 %v2121, %v2313
    %v2315 = vpop.f32.mrb[0].mxu0
    %v2316 = vadd.f32 %v2123, %v2315
    %v2317 = vpop.f32.mrb[0].mxu0
    %v2318 = vadd.f32 %v2125, %v2317
    %2319 = vmatprep.mubr.bf16.mxu0 %v1653
    %2320 = vmatmul.mubr.bf16.gmra.mrb[0].mxu0 %v1652
    %v2321 = vpop.f32.mrb[0].mxu0
    %v2322 = vadd.f32 %v2129, %v2321
    %v2323 = vpop.f32.mrb[0].mxu0
    %v2324 = vadd.f32 %v2131, %v2323
    %v2325 = vpop.f32.mrb[0].mxu0
    %v2326 = vadd.f32 %v2133, %v2325
    %v2327 = vpop.f32.mrb[0].mxu0
    %v2328 = vadd.f32 %v2135, %v2327
    %2329 = vmatprep.mubr.bf16.mxu0 %v1657
    %2330 = vmatmul.mubr.bf16.gmra.mrb[0].mxu0 %v1656
    %v2331 = vpop.f32.mrb[0].mxu0
    %v2332 = vadd.f32 %v2139, %v2331
    %v2333 = vpop.f32.mrb[0].mxu0
    %v2334 = vadd.f32 %v2141, %v2333
    %v2335 = vpop.f32.mrb[0].mxu0
    %v2336 = vadd.f32 %v2143, %v2335
    %v2337 = vpop.f32.mrb[0].mxu0
    %v2338 = vadd.f32 %v2145, %v2337
    %2339 = vmatprep.mubr.bf16.mxu0 %v1661
    %2340 = vmatmul.mubr.bf16.gmra.mrb[0].mxu0 %v1660
    %v2341 = vpop.f32.mrb[0].mxu0
    %v2342 = vadd.f32 %v2149, %v2341
    %v2343 = vpop.f32.mrb[0].mxu0
    %v2344 = vadd.f32 %v2151, %v2343
    %v2345 = vpop.f32.mrb[0].mxu0
    %v2346 = vadd.f32 %v2153, %v2345
    %v2347 = vpop.f32.mrb[0].mxu0
    %v2348 = vadd.f32 %v2155, %v2347
    %2349 = vmatprep.mubr.bf16.mxu0 %v1665
    %2350 = vmatmul.mubr.bf16.gmra.mrb[0].mxu0 %v1664
    %v2351 = vpop.f32.mrb[0].mxu0
    %v2352 = vadd.f32 %v2159, %v2351
    %v2353 = vpop.f32.mrb[0].mxu0
    %v2354 = vadd.f32 %v2161, %v2353
    %v2355 = vpop.f32.mrb[0].mxu0
    %v2356 = vadd.f32 %v2163, %v2355
    %v2357 = vpop.f32.mrb[0].mxu0
    %v2358 = vadd.f32 %v2165, %v2357
    %2359 = vmatprep.mubr.bf16.mxu0 %v1669
    %2360 = vmatmul.mubr.bf16.gmra.mrb[0].mxu0 %v1668
    %v2361 = vpop.f32.mrb[0].mxu0
    %v2362 = vadd.f32 %v2169, %v2361
    %v2363 = vpop.f32.mrb[0].mxu0
    %v2364 = vadd.f32 %v2171, %v2363
    %v2365 = vpop.f32.mrb[0].mxu0
    %v2366 = vadd.f32 %v2173, %v2365
    %v2367 = vpop.f32.mrb[0].mxu0
    %v2368 = vadd.f32 %v2175, %v2367
    %2369 = vmatprep.mubr.bf16.mxu0 %v1673
    %2370 = vmatmul.mubr.bf16.gmra.mrb[0].mxu0 %v1672
    %v2371 = vpop.f32.mrb[0].mxu0
    %v2372 = vadd.f32 %v2179, %v2371
    %v2373 = vpop.f32.mrb[0].mxu0
    %v2374 = vadd.f32 %v2181, %v2373
    %v2375 = vpop.f32.mrb[0].mxu0
    %v2376 = vadd.f32 %v2183, %v2375
    %v2377 = vpop.f32.mrb[0].mxu0
    %v2378 = vadd.f32 %v2185, %v2377
    %2379 = vmatprep.mubr.bf16.mxu0 %v1677
    %2380 = vmatmul.mubr.bf16.gmra.mrb[0].mxu0 %v1676
    %v2381 = vpop.f32.mrb[0].mxu0
    %v2382 = vadd.f32 %v2189, %v2381
    %v2383 = vpop.f32.mrb[0].mxu0
    %v2384 = vadd.f32 %v2191, %v2383
    %v2385 = vpop.f32.mrb[0].mxu0
    %v2386 = vadd.f32 %v2193, %v2385
    %v2387 = vpop.f32.mrb[0].mxu0
    %v2388 = vadd.f32 %v2195, %v2387
    %2389 = vmatprep.mubr.bf16.mxu0 %v1681
    %2390 = vmatmul.mubr.bf16.gmra.mrb[0].mxu0 %v1680
    %v2391 = vpop.f32.mrb[0].mxu0
    %v2392 = vadd.f32 %v2199, %v2391
    %v2393 = vpop.f32.mrb[0].mxu0
    %v2394 = vadd.f32 %v2201, %v2393
    %v2395 = vpop.f32.mrb[0].mxu0
    %v2396 = vadd.f32 %v2203, %v2395
    %v2397 = vpop.f32.mrb[0].mxu0
    %v2398 = vadd.f32 %v2205, %v2397
    %2399 = vdwg.mxu0
    %v2400 = vmax.f32 %v2242, 0.0
    %v2401 = vmax.f32 %v2244, 0.0
    %v2402 = vmax.f32 %v2246, 0.0
    %v2403 = vmax.f32 %v2248, 0.0
    %v2404 = vmax.f32 %v2252, 0.0
    %v2405 = vmax.f32 %v2254, 0.0
    %v2406 = vmax.f32 %v2256, 0.0
    %v2407 = vmax.f32 %v2258, 0.0
    %v2408 = vmax.f32 %v2262, 0.0
    %v2409 = vmax.f32 %v2264, 0.0
    %v2410 = vmax.f32 %v2266, 0.0
    %v2411 = vmax.f32 %v2268, 0.0
    %v2412 = vmax.f32 %v2272, 0.0
    %v2413 = vmax.f32 %v2274, 0.0
    %v2414 = vmax.f32 %v2276, 0.0
    %v2415 = vmax.f32 %v2278, 0.0
    %v2416 = vmax.f32 %v2282, 0.0
    %v2417 = vmax.f32 %v2284, 0.0
    %v2418 = vmax.f32 %v2286, 0.0
    %v2419 = vmax.f32 %v2288, 0.0
    %v2420 = vmax.f32 %v2292, 0.0
    %v2421 = vmax.f32 %v2294, 0.0
    %v2422 = vmax.f32 %v2296, 0.0
    %v2423 = vmax.f32 %v2298, 0.0
    %v2424 = vmax.f32 %v2302, 0.0
    %v2425 = vmax.f32 %v2304, 0.0
    %v2426 = vmax.f32 %v2306, 0.0
    %v2427 = vmax.f32 %v2308, 0.0
    %v2428 = vmax.f32 %v2312, 0.0
    %v2429 = vmax.f32 %v2314, 0.0
    %v2430 = vmax.f32 %v2316, 0.0
    %v2431 = vmax.f32 %v2318, 0.0
    %v2432 = vmax.f32 %v2322, 0.0
    %v2433 = vmax.f32 %v2324, 0.0
    %v2434 = vmax.f32 %v2326, 0.0
    %v2435 = vmax.f32 %v2328, 0.0
    %v2436 = vmax.f32 %v2332, 0.0
    %v2437 = vmax.f32 %v2334, 0.0
    %v2438 = vmax.f32 %v2336, 0.0
    %v2439 = vmax.f32 %v2338, 0.0
    %v2440 = vmax.f32 %v2342, 0.0
    %v2441 = vmax.f32 %v2344, 0.0
    %v2442 = vmax.f32 %v2346, 0.0
    %v2443 = vmax.f32 %v2348, 0.0
    %v2444 = vmax.f32 %v2352, 0.0
    %v2445 = vmax.f32 %v2354, 0.0
    %v2446 = vmax.f32 %v2356, 0.0
    %v2447 = vmax.f32 %v2358, 0.0
    %v2448 = vmax.f32 %v2362, 0.0
    %v2449 = vmax.f32 %v2364, 0.0
    %v2450 = vmax.f32 %v2366, 0.0
    %v2451 = vmax.f32 %v2368, 0.0
    %v2452 = vmax.f32 %v2372, 0.0
    %v2453 = vmax.f32 %v2374, 0.0
    %v2454 = vmax.f32 %v2376, 0.0
    %v2455 = vmax.f32 %v2378, 0.0
    %v2456 = vmax.f32 %v2382, 0.0
    %v2457 = vmax.f32 %v2384, 0.0
    %v2458 = vmax.f32 %v2386, 0.0
    %v2459 = vmax.f32 %v2388, 0.0
    %v2460 = vmax.f32 %v2392, 0.0
    %v2461 = vmax.f32 %v2394, 0.0
    %v2462 = vmax.f32 %v2396, 0.0
    %v2463 = vmax.f32 %v2398, 0.0
    %v2464 = vpack.c.bf16 %v2402, %v2400
    %v2465 = vpack.c.bf16 %v2403, %v2401
    %v2466 = vpack.c.bf16 %v2406, %v2404
    %v2467 = vpack.c.bf16 %v2407, %v2405
    %v2468 = vpack.c.bf16 %v2410, %v2408
    %v2469 = vpack.c.bf16 %v2411, %v2409
    %v2470 = vpack.c.bf16 %v2414, %v2412
    %v2471 = vpack.c.bf16 %v2415, %v2413
    %v2472 = vpack.c.bf16 %v2418, %v2416
    %v2473 = vpack.c.bf16 %v2419, %v2417
    %v2474 = vpack.c.bf16 %v2422, %v2420
    %v2475 = vpack.c.bf16 %v2423, %v2421
    %v2476 = vpack.c.bf16 %v2426, %v2424
    %v2477 = vpack.c.bf16 %v2427, %v2425
    %v2478 = vpack.c.bf16 %v2430, %v2428
    %v2479 = vpack.c.bf16 %v2431, %v2429
    %v2480 = vpack.c.bf16 %v2434, %v2432
    %v2481 = vpack.c.bf16 %v2435, %v2433
    %v2482 = vpack.c.bf16 %v2438, %v2436
    %v2483 = vpack.c.bf16 %v2439, %v2437
    %v2484 = vpack.c.bf16 %v2442, %v2440
    %v2485 = vpack.c.bf16 %v2443, %v2441
    %v2486 = vpack.c.bf16 %v2446, %v2444
    %v2487 = vpack.c.bf16 %v2447, %v2445
    %v2488 = vpack.c.bf16 %v2450, %v2448
    %v2489 = vpack.c.bf16 %v2451, %v2449
    %v2490 = vpack.c.bf16 %v2454, %v2452
    %v2491 = vpack.c.bf16 %v2455, %v2453
    %v2492 = vpack.c.bf16 %v2458, %v2456
    %v2493 = vpack.c.bf16 %v2459, %v2457
    %v2494 = vpack.c.bf16 %v2462, %v2460
    %v2495 = vpack.c.bf16 %v2463, %v2461
    %v2496 = vld [vmem:[%s6 + $0x7] sm:$0x3]
    %v2498 = vlaneseq
    %v2499 = vshrl.u32 %v2498, 7
    %v2500 = vsub.s32 0, %v2499
    %v2501 = vrot.slane %v2496, %v2500
    %v2502 = vlaneseq
    %v2503 = vshrl.u32 %v2502, 7
    %v2504 = vsub.s32 1, %v2503
    %v2505 = vrot.slane %v2496, %v2504
    %v2540 = vunpack.c.l.b16 %v242
    %v2541 = vunpack.c.h.b16 %v242
    %v2542 = vunpack.c.l.b16 %v243
    %v2543 = vunpack.c.h.b16 %v243
    %v2544 = vunpack.c.l.b16 %v244
    %v2545 = vunpack.c.h.b16 %v244
    %v2546 = vunpack.c.l.b16 %v245
    %v2547 = vunpack.c.h.b16 %v245
    %v2548 = vunpack.c.l.b16 %v246
    %v2549 = vunpack.c.h.b16 %v246
    %v2550 = vunpack.c.l.b16 %v247
    %v2551 = vunpack.c.h.b16 %v247
    %v2552 = vunpack.c.l.b16 %v248
    %v2553 = vunpack.c.h.b16 %v248
    %v2554 = vunpack.c.l.b16 %v249
    %v2555 = vunpack.c.h.b16 %v249
    %v2556 = vunpack.c.l.b16 %v250
    %v2557 = vunpack.c.h.b16 %v250
    %v2558 = vunpack.c.l.b16 %v251
    %v2559 = vunpack.c.h.b16 %v251
    %v2560 = vunpack.c.l.b16 %v252
    %v2561 = vunpack.c.h.b16 %v252
    %v2562 = vunpack.c.l.b16 %v253
    %v2563 = vunpack.c.h.b16 %v253
    %v2564 = vunpack.c.l.b16 %v254
    %v2565 = vunpack.c.h.b16 %v254
    %v2566 = vunpack.c.l.b16 %v255
    %v2567 = vunpack.c.h.b16 %v255
    %v2568 = vunpack.c.l.b16 %v256
    %v2569 = vunpack.c.h.b16 %v256
    %v2570 = vunpack.c.l.b16 %v257
    %v2571 = vunpack.c.h.b16 %v257
    %v2572 = vunpack.c.l.b16 %v258
    %v2573 = vunpack.c.h.b16 %v258
    %v2574 = vunpack.c.l.b16 %v259
    %v2575 = vunpack.c.h.b16 %v259
    %v2576 = vunpack.c.l.b16 %v260
    %v2577 = vunpack.c.h.b16 %v260
    %v2578 = vunpack.c.l.b16 %v261
    %v2579 = vunpack.c.h.b16 %v261
    %v2580 = vunpack.c.l.b16 %v262
    %v2581 = vunpack.c.h.b16 %v262
    %v2582 = vunpack.c.l.b16 %v263
    %v2583 = vunpack.c.h.b16 %v263
    %v2584 = vunpack.c.l.b16 %v264
    %v2585 = vunpack.c.h.b16 %v264
    %v2586 = vunpack.c.l.b16 %v265
    %v2587 = vunpack.c.h.b16 %v265
    %v2588 = vunpack.c.l.b16 %v266
    %v2589 = vunpack.c.h.b16 %v266
    %v2590 = vunpack.c.l.b16 %v267
    %v2591 = vunpack.c.h.b16 %v267
    %v2592 = vunpack.c.l.b16 %v268
    %v2593 = vunpack.c.h.b16 %v268
    %v2594 = vunpack.c.l.b16 %v269
    %v2595 = vunpack.c.h.b16 %v269
    %v2596 = vunpack.c.l.b16 %v270
    %v2597 = vunpack.c.h.b16 %v270
    %v2598 = vunpack.c.l.b16 %v271
    %v2599 = vunpack.c.h.b16 %v271
    %v2600 = vunpack.c.l.b16 %v272
    %v2601 = vunpack.c.h.b16 %v272
    %v2602 = vunpack.c.l.b16 %v273
    %v2603 = vunpack.c.h.b16 %v273
    %v2604 = vpack.c.b16 %v2542, %v2540
    %v2605 = vpack.c.b16 %v2543, %v2541
    %v2606 = vpack.c.b16 %v2546, %v2544
    %v2607 = vpack.c.b16 %v2547, %v2545
    %v2608 = vpack.c.b16 %v2550, %v2548
    %v2609 = vpack.c.b16 %v2551, %v2549
    %v2610 = vpack.c.b16 %v2554, %v2552
    %v2611 = vpack.c.b16 %v2555, %v2553
    %v2612 = vpack.c.b16 %v2558, %v2556
    %v2613 = vpack.c.b16 %v2559, %v2557
    %v2614 = vpack.c.b16 %v2562, %v2560
    %v2615 = vpack.c.b16 %v2563, %v2561
    %v2616 = vpack.c.b16 %v2566, %v2564
    %v2617 = vpack.c.b16 %v2567, %v2565
    %v2618 = vpack.c.b16 %v2570, %v2568
    %v2619 = vpack.c.b16 %v2571, %v2569
    %v2620 = vpack.c.b16 %v2574, %v2572
    %v2621 = vpack.c.b16 %v2575, %v2573
    %v2622 = vpack.c.b16 %v2578, %v2576
    %v2623 = vpack.c.b16 %v2579, %v2577
    %v2624 = vpack.c.b16 %v2582, %v2580
    %v2625 = vpack.c.b16 %v2583, %v2581
    %v2626 = vpack.c.b16 %v2586, %v2584
    %v2627 = vpack.c.b16 %v2587, %v2585
    %v2628 = vpack.c.b16 %v2590, %v2588
    %v2629 = vpack.c.b16 %v2591, %v2589
    %v2630 = vpack.c.b16 %v2594, %v2592
    %v2631 = vpack.c.b16 %v2595, %v2593
    %v2632 = vpack.c.b16 %v2598, %v2596
    %v2633 = vpack.c.b16 %v2599, %v2597
    %v2634 = vpack.c.b16 %v2602, %v2600
    %v2635 = vpack.c.b16 %v2603, %v2601
    %2668 = vmatprep.subr.bf16.mxu0 %v2605
    %2669 = vmatpush1.bf16.msra.mxu0 %v2604
    %2670 = vmatprep.subr.bf16.mxu0 %v2607
    %2671 = vmatpush1.bf16.msra.mxu0 %v2606
    %2672 = vmatprep.subr.bf16.mxu0 %v2609
    %2673 = vmatpush1.bf16.msra.mxu0 %v2608
    %2674 = vmatprep.subr.bf16.mxu0 %v2611
    %2675 = vmatpush1.bf16.msra.mxu0 %v2610
    %2676 = vmatprep.subr.bf16.mxu0 %v2613
    %2677 = vmatpush1.bf16.msra.mxu0 %v2612
    %2678 = vmatprep.subr.bf16.mxu0 %v2615
    %2679 = vmatpush1.bf16.msra.mxu0 %v2614
    %2680 = vmatprep.subr.bf16.mxu0 %v2617
    %2681 = vmatpush1.bf16.msra.mxu0 %v2616
    %2682 = vmatprep.subr.bf16.mxu0 %v2619
    %2683 = vmatpush1.bf16.msra.mxu0 %v2618
    %2684 = vmatprep.subr.bf16.mxu0 %v2621
    %2685 = vmatpush1.bf16.msra.mxu0 %v2620
    %2686 = vmatprep.subr.bf16.mxu0 %v2623
    %2687 = vmatpush1.bf16.msra.mxu0 %v2622
    %2688 = vmatprep.subr.bf16.mxu0 %v2625
    %2689 = vmatpush1.bf16.msra.mxu0 %v2624
    %2690 = vmatprep.subr.bf16.mxu0 %v2627
    %2691 = vmatpush1.bf16.msra.mxu0 %v2626
    %2692 = vmatprep.subr.bf16.mxu0 %v2629
    %2693 = vmatpush1.bf16.msra.mxu0 %v2628
    %2694 = vmatprep.subr.bf16.mxu0 %v2631
    %2695 = vmatpush1.bf16.msra.mxu0 %v2630
    %2696 = vmatprep.subr.bf16.mxu0 %v2633
    %2697 = vmatpush1.bf16.msra.mxu0 %v2632
    %2698 = vmatprep.subr.bf16.mxu0 %v2635
    %2699 = vmatpush1.bf16.msra.mxu0 %v2634
    %2700 = vmatprep.mubr.bf16.mxu0 %v2465
    %2701 = vmatmul.mubr.bf16.gmra.mrb[0].mxu0 %v2464
    %v2702 = vpop.f32.mrb[0].mxu0
    %v2703 = vadd.f32 %v2501, %v2702
    %v2704 = vpop.f32.mrb[0].mxu0
    %v2705 = vadd.f32 %v2505, %v2704
    %v2706 = vpop.f32.mrb[0].mxu0
    %v2707 = vadd.f32 %v2501, %v2706
    %v2708 = vpop.f32.mrb[0].mxu0
    %v2709 = vadd.f32 %v2505, %v2708
    %2710 = vmatprep.mubr.bf16.mxu0 %v2467
    %2711 = vmatmul.mubr.bf16.gmra.mrb[0].mxu0 %v2466
    %v2712 = vpop.f32.mrb[0].mxu0
    %v2713 = vadd.f32 %v2501, %v2712
    %v2714 = vpop.f32.mrb[0].mxu0
    %v2715 = vadd.f32 %v2505, %v2714
    %v2716 = vpop.f32.mrb[0].mxu0
    %v2717 = vadd.f32 %v2501, %v2716
    %v2718 = vpop.f32.mrb[0].mxu0
    %v2719 = vadd.f32 %v2505, %v2718
    %2720 = vmatprep.mubr.bf16.mxu0 %v2469
    %2721 = vmatmul.mubr.bf16.gmra.mrb[0].mxu0 %v2468
    %v2722 = vpop.f32.mrb[0].mxu0
    %v2723 = vadd.f32 %v2501, %v2722
    %v2724 = vpop.f32.mrb[0].mxu0
    %v2725 = vadd.f32 %v2505, %v2724
    %v2726 = vpop.f32.mrb[0].mxu0
    %v2727 = vadd.f32 %v2501, %v2726
    %v2728 = vpop.f32.mrb[0].mxu0
    %v2729 = vadd.f32 %v2505, %v2728
    %2730 = vmatprep.mubr.bf16.mxu0 %v2471
    %2731 = vmatmul.mubr.bf16.gmra.mrb[0].mxu0 %v2470
    %v2732 = vpop.f32.mrb[0].mxu0
    %v2733 = vadd.f32 %v2501, %v2732
    %v2734 = vpop.f32.mrb[0].mxu0
    %v2735 = vadd.f32 %v2505, %v2734
    %v2736 = vpop.f32.mrb[0].mxu0
    %v2737 = vadd.f32 %v2501, %v2736
    %v2738 = vpop.f32.mrb[0].mxu0
    %v2739 = vadd.f32 %v2505, %v2738
    %2740 = vmatprep.mubr.bf16.mxu0 %v2473
    %2741 = vmatmul.mubr.bf16.gmra.mrb[0].mxu0 %v2472
    %v2742 = vpop.f32.mrb[0].mxu0
    %v2743 = vadd.f32 %v2501, %v2742
    %v2744 = vpop.f32.mrb[0].mxu0
    %v2745 = vadd.f32 %v2505, %v2744
    %v2746 = vpop.f32.mrb[0].mxu0
    %v2747 = vadd.f32 %v2501, %v2746
    %v2748 = vpop.f32.mrb[0].mxu0
    %v2749 = vadd.f32 %v2505, %v2748
    %2750 = vmatprep.mubr.bf16.mxu0 %v2475
    %2751 = vmatmul.mubr.bf16.gmra.mrb[0].mxu0 %v2474
    %v2752 = vpop.f32.mrb[0].mxu0
    %v2753 = vadd.f32 %v2501, %v2752
    %v2754 = vpop.f32.mrb[0].mxu0
    %v2755 = vadd.f32 %v2505, %v2754
    %v2756 = vpop.f32.mrb[0].mxu0
    %v2757 = vadd.f32 %v2501, %v2756
    %v2758 = vpop.f32.mrb[0].mxu0
    %v2759 = vadd.f32 %v2505, %v2758
    %2760 = vmatprep.mubr.bf16.mxu0 %v2477
    %2761 = vmatmul.mubr.bf16.gmra.mrb[0].mxu0 %v2476
    %v2762 = vpop.f32.mrb[0].mxu0
    %v2763 = vadd.f32 %v2501, %v2762
    %v2764 = vpop.f32.mrb[0].mxu0
    %v2765 = vadd.f32 %v2505, %v2764
    %v2766 = vpop.f32.mrb[0].mxu0
    %v2767 = vadd.f32 %v2501, %v2766
    %v2768 = vpop.f32.mrb[0].mxu0
    %v2769 = vadd.f32 %v2505, %v2768
    %2770 = vmatprep.mubr.bf16.mxu0 %v2479
    %2771 = vmatmul.mubr.bf16.gmra.mrb[0].mxu0 %v2478
    %v2772 = vpop.f32.mrb[0].mxu0
    %v2773 = vadd.f32 %v2501, %v2772
    %v2774 = vpop.f32.mrb[0].mxu0
    %v2775 = vadd.f32 %v2505, %v2774
    %v2776 = vpop.f32.mrb[0].mxu0
    %v2777 = vadd.f32 %v2501, %v2776
    %v2778 = vpop.f32.mrb[0].mxu0
    %v2779 = vadd.f32 %v2505, %v2778
    %2780 = vmatprep.mubr.bf16.mxu0 %v2481
    %2781 = vmatmul.mubr.bf16.gmra.mrb[0].mxu0 %v2480
    %v2782 = vpop.f32.mrb[0].mxu0
    %v2783 = vadd.f32 %v2501, %v2782
    %v2784 = vpop.f32.mrb[0].mxu0
    %v2785 = vadd.f32 %v2505, %v2784
    %v2786 = vpop.f32.mrb[0].mxu0
    %v2787 = vadd.f32 %v2501, %v2786
    %v2788 = vpop.f32.mrb[0].mxu0
    %v2789 = vadd.f32 %v2505, %v2788
    %2790 = vmatprep.mubr.bf16.mxu0 %v2483
    %2791 = vmatmul.mubr.bf16.gmra.mrb[0].mxu0 %v2482
    %v2792 = vpop.f32.mrb[0].mxu0
    %v2793 = vadd.f32 %v2501, %v2792
    %v2794 = vpop.f32.mrb[0].mxu0
    %v2795 = vadd.f32 %v2505, %v2794
    %v2796 = vpop.f32.mrb[0].mxu0
    %v2797 = vadd.f32 %v2501, %v2796
    %v2798 = vpop.f32.mrb[0].mxu0
    %v2799 = vadd.f32 %v2505, %v2798
    %2800 = vmatprep.mubr.bf16.mxu0 %v2485
    %2801 = vmatmul.mubr.bf16.gmra.mrb[0].mxu0 %v2484
    %v2802 = vpop.f32.mrb[0].mxu0
    %v2803 = vadd.f32 %v2501, %v2802
    %v2804 = vpop.f32.mrb[0].mxu0
    %v2805 = vadd.f32 %v2505, %v2804
    %v2806 = vpop.f32.mrb[0].mxu0
    %v2807 = vadd.f32 %v2501, %v2806
    %v2808 = vpop.f32.mrb[0].mxu0
    %v2809 = vadd.f32 %v2505, %v2808
    %2810 = vmatprep.mubr.bf16.mxu0 %v2487
    %2811 = vmatmul.mubr.bf16.gmra.mrb[0].mxu0 %v2486
    %v2812 = vpop.f32.mrb[0].mxu0
    %v2813 = vadd.f32 %v2501, %v2812
    %v2814 = vpop.f32.mrb[0].mxu0
    %v2815 = vadd.f32 %v2505, %v2814
    %v2816 = vpop.f32.mrb[0].mxu0
    %v2817 = vadd.f32 %v2501, %v2816
    %v2818 = vpop.f32.mrb[0].mxu0
    %v2819 = vadd.f32 %v2505, %v2818
    %2820 = vmatprep.mubr.bf16.mxu0 %v2489
    %2821 = vmatmul.mubr.bf16.gmra.mrb[0].mxu0 %v2488
    %v2822 = vpop.f32.mrb[0].mxu0
    %v2823 = vadd.f32 %v2501, %v2822
    %v2824 = vpop.f32.mrb[0].mxu0
    %v2825 = vadd.f32 %v2505, %v2824
    %v2826 = vpop.f32.mrb[0].mxu0
    %v2827 = vadd.f32 %v2501, %v2826
    %v2828 = vpop.f32.mrb[0].mxu0
    %v2829 = vadd.f32 %v2505, %v2828
    %2830 = vmatprep.mubr.bf16.mxu0 %v2491
    %2831 = vmatmul.mubr.bf16.gmra.mrb[0].mxu0 %v2490
    %v2832 = vpop.f32.mrb[0].mxu0
    %v2833 = vadd.f32 %v2501, %v2832
    %v2834 = vpop.f32.mrb[0].mxu0
    %v2835 = vadd.f32 %v2505, %v2834
    %v2836 = vpop.f32.mrb[0].mxu0
    %v2837 = vadd.f32 %v2501, %v2836
    %v2838 = vpop.f32.mrb[0].mxu0
    %v2839 = vadd.f32 %v2505, %v2838
    %2840 = vmatprep.mubr.bf16.mxu0 %v2493
    %2841 = vmatmul.mubr.bf16.gmra.mrb[0].mxu0 %v2492
    %v2842 = vpop.f32.mrb[0].mxu0
    %v2843 = vadd.f32 %v2501, %v2842
    %v2844 = vpop.f32.mrb[0].mxu0
    %v2845 = vadd.f32 %v2505, %v2844
    %v2846 = vpop.f32.mrb[0].mxu0
    %v2847 = vadd.f32 %v2501, %v2846
    %v2848 = vpop.f32.mrb[0].mxu0
    %v2849 = vadd.f32 %v2505, %v2848
    %2850 = vmatprep.mubr.bf16.mxu0 %v2495
    %2851 = vmatmul.mubr.bf16.gmra.mrb[0].mxu0 %v2494
    %v2852 = vpop.f32.mrb[0].mxu0
    %v2853 = vadd.f32 %v2501, %v2852
    %v2854 = vpop.f32.mrb[0].mxu0
    %v2855 = vadd.f32 %v2505, %v2854
    %v2856 = vpop.f32.mrb[0].mxu0
    %v2857 = vadd.f32 %v2501, %v2856
    %v2858 = vpop.f32.mrb[0].mxu0
    %v2859 = vadd.f32 %v2505, %v2858
    %2860 = vdwg.mxu0
    %2861 = vst [vmem:[%s7 + $0x8] sm:$0xff] %v2703
    %2862 = vst [vmem:[%s7 + $0x10] sm:$0xff] %v2705
    %2863 = vst [vmem:[%s7 + $0x20] sm:$0xff] %v2707
    %2864 = vst [vmem:[%s7 + $0x28] sm:$0xff] %v2709
    %2865 = vst [vmem:[%s7 + $0x38] sm:$0xff] %v2713
    %2866 = vst [vmem:[%s7 + $0x40] sm:$0xff] %v2715
    %2867 = vst [vmem:[%s7 + $0x50] sm:$0xff] %v2717
    %2868 = vst [vmem:[%s7 + $0x58] sm:$0xff] %v2719
    %2869 = vst [vmem:[%s7 + $0x68] sm:$0xff] %v2723
    %2870 = vst [vmem:[%s7 + $0x70] sm:$0xff] %v2725
    %2871 = vst [vmem:[%s7 + $0x80] sm:$0xff] %v2727
    %2872 = vst [vmem:[%s7 + $0x88] sm:$0xff] %v2729
    %2873 = vst [vmem:[%s7 + $0x98] sm:$0xff] %v2733
    %2874 = vst [vmem:[%s7 + $0xa0] sm:$0xff] %v2735
    %2875 = vst [vmem:[%s7 + $0xb0] sm:$0xff] %v2737
    %2876 = vst [vmem:[%s7 + $0xb8] sm:$0xff] %v2739
    %2877 = vst [vmem:[%s7 + $0xc8] sm:$0xff] %v2743
    %2878 = vst [vmem:[%s7 + $0xd0] sm:$0xff] %v2745
    %2879 = vst [vmem:[%s7 + $0xe0] sm:$0xff] %v2747
    %2880 = vst [vmem:[%s7 + $0xe8] sm:$0xff] %v2749
    %2881 = vst [vmem:[%s7 + $0xf8] sm:$0xff] %v2753
    %2882 = vst [vmem:[%s7 + $0x100] sm:$0xff] %v2755
    %2883 = vst [vmem:[%s7 + $0x110] sm:$0xff] %v2757
    %2884 = vst [vmem:[%s7 + $0x118] sm:$0xff] %v2759
    %2885 = vst [vmem:[%s7 + $0x128] sm:$0xff] %v2763
    %2886 = vst [vmem:[%s7 + $0x130] sm:$0xff] %v2765
    %2887 = vst [vmem:[%s7 + $0x140] sm:$0xff] %v2767
    %2888 = vst [vmem:[%s7 + $0x148] sm:$0xff] %v2769
    %2889 = vst [vmem:[%s7 + $0x158] sm:$0xff] %v2773
    %2890 = vst [vmem:[%s7 + $0x160] sm:$0xff] %v2775
    %2891 = vst [vmem:[%s7 + $0x170] sm:$0xff] %v2777
    %2892 = vst [vmem:[%s7 + $0x178] sm:$0xff] %v2779
    %2893 = vst [vmem:[%s7 + $0x188] sm:$0xff] %v2783
    %2894 = vst [vmem:[%s7 + $0x190] sm:$0xff] %v2785
    %2895 = vst [vmem:[%s7 + $0x1a0] sm:$0xff] %v2787
    %2896 = vst [vmem:[%s7 + $0x1a8] sm:$0xff] %v2789
    %2897 = vst [vmem:[%s7 + $0x1b8] sm:$0xff] %v2793
    %2898 = vst [vmem:[%s7 + $0x1c0] sm:$0xff] %v2795
    %2899 = vst [vmem:[%s7 + $0x1d0] sm:$0xff] %v2797
    %2900 = vst [vmem:[%s7 + $0x1d8] sm:$0xff] %v2799
    %2901 = vst [vmem:[%s7 + $0x1e8] sm:$0xff] %v2803
    %2902 = vst [vmem:[%s7 + $0x1f0] sm:$0xff] %v2805
    %2903 = vst [vmem:[%s7 + $0x200] sm:$0xff] %v2807
    %2904 = vst [vmem:[%s7 + $0x208] sm:$0xff] %v2809
    %2905 = vst [vmem:[%s7 + $0x218] sm:$0xff] %v2813
    %2906 = vst [vmem:[%s7 + $0x220] sm:$0xff] %v2815
    %2907 = vst [vmem:[%s7 + $0x230] sm:$0xff] %v2817
    %2908 = vst [vmem:[%s7 + $0x238] sm:$0xff] %v2819
    %2909 = vst [vmem:[%s7 + $0x248] sm:$0xff] %v2823
    %2910 = vst [vmem:[%s7 + $0x250] sm:$0xff] %v2825
    %2911 = vst [vmem:[%s7 + $0x260] sm:$0xff] %v2827
    %2912 = vst [vmem:[%s7 + $0x268] sm:$0xff] %v2829
    %2913 = vst [vmem:[%s7 + $0x278] sm:$0xff] %v2833
    %2914 = vst [vmem:[%s7 + $0x280] sm:$0xff] %v2835
    %2915 = vst [vmem:[%s7 + $0x290] sm:$0xff] %v2837
    %2916 = vst [vmem:[%s7 + $0x298] sm:$0xff] %v2839
    %2917 = vst [vmem:[%s7 + $0x2a8] sm:$0xff] %v2843
    %2918 = vst [vmem:[%s7 + $0x2b0] sm:$0xff] %v2845
    %2919 = vst [vmem:[%s7 + $0x2c0] sm:$0xff] %v2847
    %2920 = vst [vmem:[%s7 + $0x2c8] sm:$0xff] %v2849
    %2921 = vst [vmem:[%s7 + $0x2d8] sm:$0xff] %v2853
    %2922 = vst [vmem:[%s7 + $0x2e0] sm:$0xff] %v2855
    %2923 = vst [vmem:[%s7 + $0x2f0] sm:$0xff] %v2857
    %2924 = vst [vmem:[%s7 + $0x2f8] sm:$0xff] %v2859
    %v2925 = vld [vmem:[#allocation4] sm:$0xff]
    %v2926 = vld [vmem:[#allocation4 + $0x8] sm:$0xff]
    %v2927 = vld [vmem:[#allocation4 + $0x10] sm:$0xff]
    %v2928 = vld [vmem:[#allocation4 + $0x18] sm:$0xff]
    %v2929 = vld [vmem:[#allocation4 + $0x20] sm:$0xff]
    %v2930 = vld [vmem:[#allocation4 + $0x28] sm:$0xff]
    %v2931 = vld [vmem:[#allocation4 + $0x30] sm:$0xff]
    %v2932 = vld [vmem:[#allocation4 + $0x38] sm:$0xff]
    %v2933 = vld [vmem:[#allocation4 + $0x40] sm:$0xff]
    %v2934 = vld [vmem:[#allocation4 + $0x48] sm:$0xff]
    %v2935 = vld [vmem:[#allocation4 + $0x50] sm:$0xff]
    %v2936 = vld [vmem:[#allocation4 + $0x58] sm:$0xff]
    %v2937 = vld [vmem:[#allocation4 + $0x60] sm:$0xff]
    %v2938 = vld [vmem:[#allocation4 + $0x68] sm:$0xff]
    %v2939 = vld [vmem:[#allocation4 + $0x70] sm:$0xff]
    %v2940 = vld [vmem:[#allocation4 + $0x78] sm:$0xff]
    %v2941 = vld [vmem:[#allocation4 + $0x80] sm:$0xff]
    %v2942 = vld [vmem:[#allocation4 + $0x88] sm:$0xff]
    %v2943 = vld [vmem:[#allocation4 + $0x90] sm:$0xff]
    %v2944 = vld [vmem:[#allocation4 + $0x98] sm:$0xff]
    %v2945 = vld [vmem:[#allocation4 + $0xa0] sm:$0xff]
    %v2946 = vld [vmem:[#allocation4 + $0xa8] sm:$0xff]
    %v2947 = vld [vmem:[#allocation4 + $0xb0] sm:$0xff]
    %v2948 = vld [vmem:[#allocation4 + $0xb8] sm:$0xff]
    %v2949 = vld [vmem:[#allocation4 + $0xc0] sm:$0xff]
    %v2950 = vld [vmem:[#allocation4 + $0xc8] sm:$0xff]
    %v2951 = vld [vmem:[#allocation4 + $0xd0] sm:$0xff]
    %v2952 = vld [vmem:[#allocation4 + $0xd8] sm:$0xff]
    %v2953 = vld [vmem:[#allocation4 + $0xe0] sm:$0xff]
    %v2954 = vld [vmem:[#allocation4 + $0xe8] sm:$0xff]
    %v2955 = vld [vmem:[#allocation4 + $0xf0] sm:$0xff]
    %v2956 = vld [vmem:[#allocation4 + $0xf8] sm:$0xff]
    %v2957 = vmul.f32 %v2705, 0.5
    %v2958 = vmul.f32 %v2709, 0.5
    %v2959 = vmul.f32 %v2715, 0.5
    %v2960 = vmul.f32 %v2719, 0.5
    %v2961 = vmul.f32 %v2725, 0.5
    %v2962 = vmul.f32 %v2729, 0.5
    %v2963 = vmul.f32 %v2735, 0.5
    %v2964 = vmul.f32 %v2739, 0.5
    %v2965 = vmul.f32 %v2745, 0.5
    %v2966 = vmul.f32 %v2749, 0.5
    %v2967 = vmul.f32 %v2755, 0.5
    %v2968 = vmul.f32 %v2759, 0.5
    %v2969 = vmul.f32 %v2765, 0.5
    %v2970 = vmul.f32 %v2769, 0.5
    %v2971 = vmul.f32 %v2775, 0.5
    %v2972 = vmul.f32 %v2779, 0.5
    %v2973 = vmul.f32 %v2785, 0.5
    %v2974 = vmul.f32 %v2789, 0.5
    %v2975 = vmul.f32 %v2795, 0.5
    %v2976 = vmul.f32 %v2799, 0.5
    %v2977 = vmul.f32 %v2805, 0.5
    %v2978 = vmul.f32 %v2809, 0.5
    %v2979 = vmul.f32 %v2815, 0.5
    %v2980 = vmul.f32 %v2819, 0.5
    %v2981 = vmul.f32 %v2825, 0.5
    %v2982 = vmul.f32 %v2829, 0.5
    %v2983 = vmul.f32 %v2835, 0.5
    %v2984 = vmul.f32 %v2839, 0.5
    %v2985 = vmul.f32 %v2845, 0.5
    %v2986 = vmul.f32 %v2849, 0.5
    %v2987 = vmul.f32 %v2855, 0.5
    %v2988 = vmul.f32 %v2859, 0.5
    %v2989 = vmul.f32 %v2957, 1.442695
    %v2990 = vpow.pop %v2989
    %v2991 = vmul.f32 %v2958, 1.442695
    %v2992 = vpow.pop %v2991
    %v2993 = vmul.f32 %v2959, 1.442695
    %v2994 = vpow.pop %v2993
    %v2995 = vmul.f32 %v2960, 1.442695
    %v2996 = vpow.pop %v2995
    %v2997 = vmul.f32 %v2961, 1.442695
    %v2998 = vpow.pop %v2997
    %v2999 = vmul.f32 %v2962, 1.442695
    %v3000 = vpow.pop %v2999
    %v3001 = vmul.f32 %v2963, 1.442695
    %v3002 = vpow.pop %v3001
    %v3003 = vmul.f32 %v2964, 1.442695
    %v3004 = vpow.pop %v3003
    %v3005 = vmul.f32 %v2965, 1.442695
    %v3006 = vpow.pop %v3005
    %v3007 = vmul.f32 %v2966, 1.442695
    %v3008 = vpow.pop %v3007
    %v3009 = vmul.f32 %v2967, 1.442695
    %v3010 = vpow.pop %v3009
    %v3011 = vmul.f32 %v2968, 1.442695
    %v3012 = vpow.pop %v3011
    %v3013 = vmul.f32 %v2969, 1.442695
    %v3014 = vpow.pop %v3013
    %v3015 = vmul.f32 %v2970, 1.442695
    %v3016 = vpow.pop %v3015
    %v3017 = vmul.f32 %v2971, 1.442695
    %v3018 = vpow.pop %v3017
    %v3019 = vmul.f32 %v2972, 1.442695
    %v3020 = vpow.pop %v3019
    %v3021 = vmul.f32 %v2973, 1.442695
    %v3022 = vpow.pop %v3021
    %v3023 = vmul.f32 %v2974, 1.442695
    %v3024 = vpow.pop %v3023
    %v3025 = vmul.f32 %v2975, 1.442695
    %v3026 = vpow.pop %v3025
    %v3027 = vmul.f32 %v2976, 1.442695
    %v3028 = vpow.pop %v3027
    %v3029 = vmul.f32 %v2977, 1.442695
    %v3030 = vpow.pop %v3029
    %v3031 = vmul.f32 %v2978, 1.442695
    %v3032 = vpow.pop %v3031
    %v3033 = vmul.f32 %v2979, 1.442695
    %v3034 = vpow.pop %v3033
    %v3035 = vmul.f32 %v2980, 1.442695
    %v3036 = vpow.pop %v3035
    %v3037 = vmul.f32 %v2981, 1.442695
    %v3038 = vpow.pop %v3037
    %v3039 = vmul.f32 %v2982, 1.442695
    %v3040 = vpow.pop %v3039
    %v3041 = vmul.f32 %v2983, 1.442695
    %v3042 = vpow.pop %v3041
    %v3043 = vmul.f32 %v2984, 1.442695
    %v3044 = vpow.pop %v3043
    %v3045 = vmul.f32 %v2985, 1.442695
    %v3046 = vpow.pop %v3045
    %v3047 = vmul.f32 %v2986, 1.442695
    %v3048 = vpow.pop %v3047
    %v3049 = vmul.f32 %v2987, 1.442695
    %v3050 = vpow.pop %v3049
    %v3051 = vmul.f32 %v2988, 1.442695
    %v3052 = vpow.pop %v3051
    %v3053 = vmul.f32 %v2925, %v2990
    %v3054 = vmul.f32 %v2926, %v2992
    %v3055 = vmul.f32 %v2927, %v2994
    %v3056 = vmul.f32 %v2928, %v2996
    %v3057 = vmul.f32 %v2929, %v2998
    %v3058 = vmul.f32 %v2930, %v3000
    %v3059 = vmul.f32 %v2931, %v3002
    %v3060 = vmul.f32 %v2932, %v3004
    %v3061 = vmul.f32 %v2933, %v3006
    %v3062 = vmul.f32 %v2934, %v3008
    %v3063 = vmul.f32 %v2935, %v3010
    %v3064 = vmul.f32 %v2936, %v3012
    %v3065 = vmul.f32 %v2937, %v3014
    %v3066 = vmul.f32 %v2938, %v3016
    %v3067 = vmul.f32 %v2939, %v3018
    %v3068 = vmul.f32 %v2940, %v3020
    %v3069 = vmul.f32 %v2941, %v3022
    %v3070 = vmul.f32 %v2942, %v3024
    %v3071 = vmul.f32 %v2943, %v3026
    %v3072 = vmul.f32 %v2944, %v3028
    %v3073 = vmul.f32 %v2945, %v3030
    %v3074 = vmul.f32 %v2946, %v3032
    %v3075 = vmul.f32 %v2947, %v3034
    %v3076 = vmul.f32 %v2948, %v3036
    %v3077 = vmul.f32 %v2949, %v3038
    %v3078 = vmul.f32 %v2950, %v3040
    %v3079 = vmul.f32 %v2951, %v3042
    %v3080 = vmul.f32 %v2952, %v3044
    %v3081 = vmul.f32 %v2953, %v3046
    %v3082 = vmul.f32 %v2954, %v3048
    %v3083 = vmul.f32 %v2955, %v3050
    %v3084 = vmul.f32 %v2956, %v3052
    %v3085 = vadd.f32 %v2703, %v3053
    %v3086 = vadd.f32 %v2707, %v3054
    %v3087 = vadd.f32 %v2713, %v3055
    %v3088 = vadd.f32 %v2717, %v3056
    %v3089 = vadd.f32 %v2723, %v3057
    %v3090 = vadd.f32 %v2727, %v3058
    %v3091 = vadd.f32 %v2733, %v3059
    %v3092 = vadd.f32 %v2737, %v3060
    %v3093 = vadd.f32 %v2743, %v3061
    %v3094 = vadd.f32 %v2747, %v3062
    %v3095 = vadd.f32 %v2753, %v3063
    %v3096 = vadd.f32 %v2757, %v3064
    %v3097 = vadd.f32 %v2763, %v3065
    %v3098 = vadd.f32 %v2767, %v3066
    %v3099 = vadd.f32 %v2773, %v3067
    %v3100 = vadd.f32 %v2777, %v3068
    %v3101 = vadd.f32 %v2783, %v3069
    %v3102 = vadd.f32 %v2787, %v3070
    %v3103 = vadd.f32 %v2793, %v3071
    %v3104 = vadd.f32 %v2797, %v3072
    %v3105 = vadd.f32 %v2803, %v3073
    %v3106 = vadd.f32 %v2807, %v3074
    %v3107 = vadd.f32 %v2813, %v3075
    %v3108 = vadd.f32 %v2817, %v3076
    %v3109 = vadd.f32 %v2823, %v3077
    %v3110 = vadd.f32 %v2827, %v3078
    %v3111 = vadd.f32 %v2833, %v3079
    %v3112 = vadd.f32 %v2837, %v3080
    %v3113 = vadd.f32 %v2843, %v3081
    %v3114 = vadd.f32 %v2847, %v3082
    %v3115 = vadd.f32 %v2853, %v3083
    %v3116 = vadd.f32 %v2857, %v3084
    %v3117 = vpack.c.bf16 %v3086, %v3085
    %v3118 = vpack.c.bf16 %v3088, %v3087
    %v3119 = vpack.c.bf16 %v3090, %v3089
    %v3120 = vpack.c.bf16 %v3092, %v3091
    %v3121 = vpack.c.bf16 %v3094, %v3093
    %v3122 = vpack.c.bf16 %v3096, %v3095
    %v3123 = vpack.c.bf16 %v3098, %v3097
    %v3124 = vpack.c.bf16 %v3100, %v3099
    %v3125 = vpack.c.bf16 %v3102, %v3101
    %v3126 = vpack.c.bf16 %v3104, %v3103
    %v3127 = vpack.c.bf16 %v3106, %v3105
    %v3128 = vpack.c.bf16 %v3108, %v3107
    %v3129 = vpack.c.bf16 %v3110, %v3109
    %v3130 = vpack.c.bf16 %v3112, %v3111
    %v3131 = vpack.c.bf16 %v3114, %v3113
    %v3132 = vpack.c.bf16 %v3116, %v3115
    %v3133 = vld [vmem:[%s6 + $0x9] sm:$0x3]
    %v3135 = vlaneseq
    %v3136 = vshrl.u32 %v3135, 7
    %v3137 = vsub.s32 0, %v3136
    %v3138 = vrot.slane %v3133, %v3137
    %v3139 = vlaneseq
    %v3140 = vshrl.u32 %v3139, 7
    %v3141 = vsub.s32 1, %v3140
    %v3142 = vrot.slane %v3133, %v3141
    %v3161 = vunpack.c.l.b16 %v274
    %v3162 = vunpack.c.h.b16 %v274
    %v3163 = vunpack.c.l.b16 %v275
    %v3164 = vunpack.c.h.b16 %v275
    %v3165 = vunpack.c.l.b16 %v276
    %v3166 = vunpack.c.h.b16 %v276
    %v3167 = vunpack.c.l.b16 %v277
    %v3168 = vunpack.c.h.b16 %v277
    %v3169 = vunpack.c.l.b16 %v278
    %v3170 = vunpack.c.h.b16 %v278
    %v3171 = vunpack.c.l.b16 %v279
    %v3172 = vunpack.c.h.b16 %v279
    %v3173 = vunpack.c.l.b16 %v280
    %v3174 = vunpack.c.h.b16 %v280
    %v3175 = vunpack.c.l.b16 %v281
    %v3176 = vunpack.c.h.b16 %v281
    %v3177 = vunpack.c.l.b16 %v282
    %v3178 = vunpack.c.h.b16 %v282
    %v3179 = vunpack.c.l.b16 %v283
    %v3180 = vunpack.c.h.b16 %v283
    %v3181 = vunpack.c.l.b16 %v284
    %v3182 = vunpack.c.h.b16 %v284
    %v3183 = vunpack.c.l.b16 %v285
    %v3184 = vunpack.c.h.b16 %v285
    %v3185 = vunpack.c.l.b16 %v286
    %v3186 = vunpack.c.h.b16 %v286
    %v3187 = vunpack.c.l.b16 %v287
    %v3188 = vunpack.c.h.b16 %v287
    %v3189 = vunpack.c.l.b16 %v288
    %v3190 = vunpack.c.h.b16 %v288
    %v3191 = vunpack.c.l.b16 %v289
    %v3192 = vunpack.c.h.b16 %v289
    %v3193 = vpack.c.b16 %v3163, %v3161
    %v3194 = vpack.c.b16 %v3164, %v3162
    %v3195 = vpack.c.b16 %v3167, %v3165
    %v3196 = vpack.c.b16 %v3168, %v3166
    %v3197 = vpack.c.b16 %v3171, %v3169
    %v3198 = vpack.c.b16 %v3172, %v3170
    %v3199 = vpack.c.b16 %v3175, %v3173
    %v3200 = vpack.c.b16 %v3176, %v3174
    %v3201 = vpack.c.b16 %v3179, %v3177
    %v3202 = vpack.c.b16 %v3180, %v3178
    %v3203 = vpack.c.b16 %v3183, %v3181
    %v3204 = vpack.c.b16 %v3184, %v3182
    %v3205 = vpack.c.b16 %v3187, %v3185
    %v3206 = vpack.c.b16 %v3188, %v3186
    %v3207 = vpack.c.b16 %v3191, %v3189
    %v3208 = vpack.c.b16 %v3192, %v3190
    %3225 = vmatprep.subr.bf16.mxu0 %v3194
    %3226 = vmatpush1.bf16.msra.mxu0 %v3193
    %3227 = vmatprep.subr.bf16.mxu0 %v3196
    %3228 = vmatpush1.bf16.msra.mxu0 %v3195
    %3229 = vmatprep.subr.bf16.mxu0 %v3198
    %3230 = vmatpush1.bf16.msra.mxu0 %v3197
    %3231 = vmatprep.subr.bf16.mxu0 %v3200
    %3232 = vmatpush1.bf16.msra.mxu0 %v3199
    %3233 = vmatprep.subr.bf16.mxu0 %v3202
    %3234 = vmatpush1.bf16.msra.mxu0 %v3201
    %3235 = vmatprep.subr.bf16.mxu0 %v3204
    %3236 = vmatpush1.bf16.msra.mxu0 %v3203
    %3237 = vmatprep.subr.bf16.mxu0 %v3206
    %3238 = vmatpush1.bf16.msra.mxu0 %v3205
    %3239 = vmatprep.subr.bf16.mxu0 %v3208
    %3240 = vmatpush1.bf16.msra.mxu0 %v3207
    %3241 = vmatprep.subr.bf16.mxu0 0
    %3242 = vmatpush1.bf16.msra.mxu0 0
    %3243 = vmatprep.subr.bf16.mxu0 0
    %3244 = vmatpush1.bf16.msra.mxu0 0
    %3245 = vmatprep.subr.bf16.mxu0 0
    %3246 = vmatpush1.bf16.msra.mxu0 0
    %3247 = vmatprep.subr.bf16.mxu0 0
    %3248 = vmatpush1.bf16.msra.mxu0 0
    %3249 = vmatprep.subr.bf16.mxu0 0
    %3250 = vmatpush1.bf16.msra.mxu0 0
    %3251 = vmatprep.subr.bf16.mxu0 0
    %3252 = vmatpush1.bf16.msra.mxu0 0
    %3253 = vmatprep.subr.bf16.mxu0 0
    %3254 = vmatpush1.bf16.msra.mxu0 0
    %3255 = vmatprep.subr.bf16.mxu0 0
    %3256 = vmatpush1.bf16.msra.mxu0 0
    %3257 = vmatprep.mubr.bf16.mxu0 0
    %3258 = vmatmul.mubr.bf16.gmra.mrb[0].mxu0 %v3117
    %v3259 = vpop.f32.mrb[0].mxu0
    %v3260 = vadd.f32 %v3138, %v3259
    %v3261 = vpop.f32.mrb[0].mxu0
    %v3262 = vadd.f32 %v3142, %v3261
    %v3263 = vpop.f32.mrb[0].mxu0
    %v3264 = vadd.f32 %v3138, %v3263
    %v3265 = vpop.f32.mrb[0].mxu0
    %v3266 = vadd.f32 %v3142, %v3265
    %3267 = vmatprep.mubr.bf16.mxu0 0
    %3268 = vmatmul.mubr.bf16.gmra.mrb[0].mxu0 %v3118
    %v3269 = vpop.f32.mrb[0].mxu0
    %v3270 = vadd.f32 %v3138, %v3269
    %v3271 = vpop.f32.mrb[0].mxu0
    %v3272 = vadd.f32 %v3142, %v3271
    %v3273 = vpop.f32.mrb[0].mxu0
    %v3274 = vadd.f32 %v3138, %v3273
    %v3275 = vpop.f32.mrb[0].mxu0
    %v3276 = vadd.f32 %v3142, %v3275
    %3277 = vmatprep.mubr.bf16.mxu0 0
    %3278 = vmatmul.mubr.bf16.gmra.mrb[0].mxu0 %v3119
    %v3279 = vpop.f32.mrb[0].mxu0
    %v3280 = vadd.f32 %v3138, %v3279
    %v3281 = vpop.f32.mrb[0].mxu0
    %v3282 = vadd.f32 %v3142, %v3281
    %v3283 = vpop.f32.mrb[0].mxu0
    %v3284 = vadd.f32 %v3138, %v3283
    %v3285 = vpop.f32.mrb[0].mxu0
    %v3286 = vadd.f32 %v3142, %v3285
    %3287 = vmatprep.mubr.bf16.mxu0 0
    %3288 = vmatmul.mubr.bf16.gmra.mrb[0].mxu0 %v3120
    %v3289 = vpop.f32.mrb[0].mxu0
    %v3290 = vadd.f32 %v3138, %v3289
    %v3291 = vpop.f32.mrb[0].mxu0
    %v3292 = vadd.f32 %v3142, %v3291
    %v3293 = vpop.f32.mrb[0].mxu0
    %v3294 = vadd.f32 %v3138, %v3293
    %v3295 = vpop.f32.mrb[0].mxu0
    %v3296 = vadd.f32 %v3142, %v3295
    %3297 = vmatprep.mubr.bf16.mxu0 0
    %3298 = vmatmul.mubr.bf16.gmra.mrb[0].mxu0 %v3121
    %v3299 = vpop.f32.mrb[0].mxu0
    %v3300 = vadd.f32 %v3138, %v3299
    %v3301 = vpop.f32.mrb[0].mxu0
    %v3302 = vadd.f32 %v3142, %v3301
    %v3303 = vpop.f32.mrb[0].mxu0
    %v3304 = vadd.f32 %v3138, %v3303
    %v3305 = vpop.f32.mrb[0].mxu0
    %v3306 = vadd.f32 %v3142, %v3305
    %3307 = vmatprep.mubr.bf16.mxu0 0
    %3308 = vmatmul.mubr.bf16.gmra.mrb[0].mxu0 %v3122
    %v3309 = vpop.f32.mrb[0].mxu0
    %v3310 = vadd.f32 %v3138, %v3309
    %v3311 = vpop.f32.mrb[0].mxu0
    %v3312 = vadd.f32 %v3142, %v3311
    %v3313 = vpop.f32.mrb[0].mxu0
    %v3314 = vadd.f32 %v3138, %v3313
    %v3315 = vpop.f32.mrb[0].mxu0
    %v3316 = vadd.f32 %v3142, %v3315
    %3317 = vmatprep.mubr.bf16.mxu0 0
    %3318 = vmatmul.mubr.bf16.gmra.mrb[0].mxu0 %v3123
    %v3319 = vpop.f32.mrb[0].mxu0
    %v3320 = vadd.f32 %v3138, %v3319
    %v3321 = vpop.f32.mrb[0].mxu0
    %v3322 = vadd.f32 %v3142, %v3321
    %v3323 = vpop.f32.mrb[0].mxu0
    %v3324 = vadd.f32 %v3138, %v3323
    %v3325 = vpop.f32.mrb[0].mxu0
    %v3326 = vadd.f32 %v3142, %v3325
    %3327 = vmatprep.mubr.bf16.mxu0 0
    %3328 = vmatmul.mubr.bf16.gmra.mrb[0].mxu0 %v3124
    %v3329 = vpop.f32.mrb[0].mxu0
    %v3330 = vadd.f32 %v3138, %v3329
    %v3331 = vpop.f32.mrb[0].mxu0
    %v3332 = vadd.f32 %v3142, %v3331
    %v3333 = vpop.f32.mrb[0].mxu0
    %v3334 = vadd.f32 %v3138, %v3333
    %v3335 = vpop.f32.mrb[0].mxu0
    %v3336 = vadd.f32 %v3142, %v3335
    %3337 = vmatprep.mubr.bf16.mxu0 0
    %3338 = vmatmul.mubr.bf16.gmra.mrb[0].mxu0 %v3125
    %v3339 = vpop.f32.mrb[0].mxu0
    %v3340 = vadd.f32 %v3138, %v3339
    %v3341 = vpop.f32.mrb[0].mxu0
    %v3342 = vadd.f32 %v3142, %v3341
    %v3343 = vpop.f32.mrb[0].mxu0
    %v3344 = vadd.f32 %v3138, %v3343
    %v3345 = vpop.f32.mrb[0].mxu0
    %v3346 = vadd.f32 %v3142, %v3345
    %3347 = vmatprep.mubr.bf16.mxu0 0
    %3348 = vmatmul.mubr.bf16.gmra.mrb[0].mxu0 %v3126
    %v3349 = vpop.f32.mrb[0].mxu0
    %v3350 = vadd.f32 %v3138, %v3349
    %v3351 = vpop.f32.mrb[0].mxu0
    %v3352 = vadd.f32 %v3142, %v3351
    %v3353 = vpop.f32.mrb[0].mxu0
    %v3354 = vadd.f32 %v3138, %v3353
    %v3355 = vpop.f32.mrb[0].mxu0
    %v3356 = vadd.f32 %v3142, %v3355
    %3357 = vmatprep.mubr.bf16.mxu0 0
    %3358 = vmatmul.mubr.bf16.gmra.mrb[0].mxu0 %v3127
    %v3359 = vpop.f32.mrb[0].mxu0
    %v3360 = vadd.f32 %v3138, %v3359
    %v3361 = vpop.f32.mrb[0].mxu0
    %v3362 = vadd.f32 %v3142, %v3361
    %v3363 = vpop.f32.mrb[0].mxu0
    %v3364 = vadd.f32 %v3138, %v3363
    %v3365 = vpop.f32.mrb[0].mxu0
    %v3366 = vadd.f32 %v3142, %v3365
    %3367 = vmatprep.mubr.bf16.mxu0 0
    %3368 = vmatmul.mubr.bf16.gmra.mrb[0].mxu0 %v3128
    %v3369 = vpop.f32.mrb[0].mxu0
    %v3370 = vadd.f32 %v3138, %v3369
    %v3371 = vpop.f32.mrb[0].mxu0
    %v3372 = vadd.f32 %v3142, %v3371
    %v3373 = vpop.f32.mrb[0].mxu0
    %v3374 = vadd.f32 %v3138, %v3373
    %v3375 = vpop.f32.mrb[0].mxu0
    %v3376 = vadd.f32 %v3142, %v3375
    %3377 = vmatprep.mubr.bf16.mxu0 0
    %3378 = vmatmul.mubr.bf16.gmra.mrb[0].mxu0 %v3129
    %v3379 = vpop.f32.mrb[0].mxu0
    %v3380 = vadd.f32 %v3138, %v3379
    %v3381 = vpop.f32.mrb[0].mxu0
    %v3382 = vadd.f32 %v3142, %v3381
    %v3383 = vpop.f32.mrb[0].mxu0
    %v3384 = vadd.f32 %v3138, %v3383
    %v3385 = vpop.f32.mrb[0].mxu0
    %v3386 = vadd.f32 %v3142, %v3385
    %3387 = vmatprep.mubr.bf16.mxu0 0
    %3388 = vmatmul.mubr.bf16.gmra.mrb[0].mxu0 %v3130
    %v3389 = vpop.f32.mrb[0].mxu0
    %v3390 = vadd.f32 %v3138, %v3389
    %v3391 = vpop.f32.mrb[0].mxu0
    %v3392 = vadd.f32 %v3142, %v3391
    %v3393 = vpop.f32.mrb[0].mxu0
    %v3394 = vadd.f32 %v3138, %v3393
    %v3395 = vpop.f32.mrb[0].mxu0
    %v3396 = vadd.f32 %v3142, %v3395
    %3397 = vmatprep.mubr.bf16.mxu0 0
    %3398 = vmatmul.mubr.bf16.gmra.mrb[0].mxu0 %v3131
    %v3399 = vpop.f32.mrb[0].mxu0
    %v3400 = vadd.f32 %v3138, %v3399
    %v3401 = vpop.f32.mrb[0].mxu0
    %v3402 = vadd.f32 %v3142, %v3401
    %v3403 = vpop.f32.mrb[0].mxu0
    %v3404 = vadd.f32 %v3138, %v3403
    %v3405 = vpop.f32.mrb[0].mxu0
    %v3406 = vadd.f32 %v3142, %v3405
    %3407 = vmatprep.mubr.bf16.mxu0 0
    %3408 = vmatmul.mubr.bf16.gmra.mrb[0].mxu0 %v3132
    %v3409 = vpop.f32.mrb[0].mxu0
    %v3410 = vadd.f32 %v3138, %v3409
    %v3411 = vpop.f32.mrb[0].mxu0
    %v3412 = vadd.f32 %v3142, %v3411
    %v3413 = vpop.f32.mrb[0].mxu0
    %v3414 = vadd.f32 %v3138, %v3413
    %v3415 = vpop.f32.mrb[0].mxu0
    %v3416 = vadd.f32 %v3142, %v3415
    %3417 = vdwg.mxu0
    %v3418 = vmax.f32 %v3260, 0.0
    %v3419 = vmax.f32 %v3262, 0.0
    %v3420 = vmax.f32 %v3264, 0.0
    %v3421 = vmax.f32 %v3266, 0.0
    %v3422 = vmax.f32 %v3270, 0.0
    %v3423 = vmax.f32 %v3272, 0.0
    %v3424 = vmax.f32 %v3274, 0.0
    %v3425 = vmax.f32 %v3276, 0.0
    %v3426 = vmax.f32 %v3280, 0.0
    %v3427 = vmax.f32 %v3282, 0.0
    %v3428 = vmax.f32 %v3284, 0.0
    %v3429 = vmax.f32 %v3286, 0.0
    %v3430 = vmax.f32 %v3290, 0.0
    %v3431 = vmax.f32 %v3292, 0.0
    %v3432 = vmax.f32 %v3294, 0.0
    %v3433 = vmax.f32 %v3296, 0.0
    %v3434 = vmax.f32 %v3300, 0.0
    %v3435 = vmax.f32 %v3302, 0.0
    %v3436 = vmax.f32 %v3304, 0.0
    %v3437 = vmax.f32 %v3306, 0.0
    %v3438 = vmax.f32 %v3310, 0.0
    %v3439 = vmax.f32 %v3312, 0.0
    %v3440 = vmax.f32 %v3314, 0.0
    %v3441 = vmax.f32 %v3316, 0.0
    %v3442 = vmax.f32 %v3320, 0.0
    %v3443 = vmax.f32 %v3322, 0.0
    %v3444 = vmax.f32 %v3324, 0.0
    %v3445 = vmax.f32 %v3326, 0.0
    %v3446 = vmax.f32 %v3330, 0.0
    %v3447 = vmax.f32 %v3332, 0.0
    %v3448 = vmax.f32 %v3334, 0.0
    %v3449 = vmax.f32 %v3336, 0.0
    %v3450 = vmax.f32 %v3340, 0.0
    %v3451 = vmax.f32 %v3342, 0.0
    %v3452 = vmax.f32 %v3344, 0.0
    %v3453 = vmax.f32 %v3346, 0.0
    %v3454 = vmax.f32 %v3350, 0.0
    %v3455 = vmax.f32 %v3352, 0.0
    %v3456 = vmax.f32 %v3354, 0.0
    %v3457 = vmax.f32 %v3356, 0.0
    %v3458 = vmax.f32 %v3360, 0.0
    %v3459 = vmax.f32 %v3362, 0.0
    %v3460 = vmax.f32 %v3364, 0.0
    %v3461 = vmax.f32 %v3366, 0.0
    %v3462 = vmax.f32 %v3370, 0.0
    %v3463 = vmax.f32 %v3372, 0.0
    %v3464 = vmax.f32 %v3374, 0.0
    %v3465 = vmax.f32 %v3376, 0.0
    %v3466 = vmax.f32 %v3380, 0.0
    %v3467 = vmax.f32 %v3382, 0.0
    %v3468 = vmax.f32 %v3384, 0.0
    %v3469 = vmax.f32 %v3386, 0.0
    %v3470 = vmax.f32 %v3390, 0.0
    %v3471 = vmax.f32 %v3392, 0.0
    %v3472 = vmax.f32 %v3394, 0.0
    %v3473 = vmax.f32 %v3396, 0.0
    %v3474 = vmax.f32 %v3400, 0.0
    %v3475 = vmax.f32 %v3402, 0.0
    %v3476 = vmax.f32 %v3404, 0.0
    %v3477 = vmax.f32 %v3406, 0.0
    %v3478 = vmax.f32 %v3410, 0.0
    %v3479 = vmax.f32 %v3412, 0.0
    %v3480 = vmax.f32 %v3414, 0.0
    %v3481 = vmax.f32 %v3416, 0.0
    %v3482 = vpack.c.bf16 %v3420, %v3418
    %v3483 = vpack.c.bf16 %v3421, %v3419
    %v3484 = vpack.c.bf16 %v3424, %v3422
    %v3485 = vpack.c.bf16 %v3425, %v3423
    %v3486 = vpack.c.bf16 %v3428, %v3426
    %v3487 = vpack.c.bf16 %v3429, %v3427
    %v3488 = vpack.c.bf16 %v3432, %v3430
    %v3489 = vpack.c.bf16 %v3433, %v3431
    %v3490 = vpack.c.bf16 %v3436, %v3434
    %v3491 = vpack.c.bf16 %v3437, %v3435
    %v3492 = vpack.c.bf16 %v3440, %v3438
    %v3493 = vpack.c.bf16 %v3441, %v3439
    %v3494 = vpack.c.bf16 %v3444, %v3442
    %v3495 = vpack.c.bf16 %v3445, %v3443
    %v3496 = vpack.c.bf16 %v3448, %v3446
    %v3497 = vpack.c.bf16 %v3449, %v3447
    %v3498 = vpack.c.bf16 %v3452, %v3450
    %v3499 = vpack.c.bf16 %v3453, %v3451
    %v3500 = vpack.c.bf16 %v3456, %v3454
    %v3501 = vpack.c.bf16 %v3457, %v3455
    %v3502 = vpack.c.bf16 %v3460, %v3458
    %v3503 = vpack.c.bf16 %v3461, %v3459
    %v3504 = vpack.c.bf16 %v3464, %v3462
    %v3505 = vpack.c.bf16 %v3465, %v3463
    %v3506 = vpack.c.bf16 %v3468, %v3466
    %v3507 = vpack.c.bf16 %v3469, %v3467
    %v3508 = vpack.c.bf16 %v3472, %v3470
    %v3509 = vpack.c.bf16 %v3473, %v3471
    %v3510 = vpack.c.bf16 %v3476, %v3474
    %v3511 = vpack.c.bf16 %v3477, %v3475
    %v3512 = vpack.c.bf16 %v3480, %v3478
    %v3513 = vpack.c.bf16 %v3481, %v3479
    %v3514 = vld [vmem:[%s6 + $0xb] sm:$0xf]
    %v3516 = vlaneseq
    %v3517 = vshrl.u32 %v3516, 7
    %v3518 = vsub.s32 0, %v3517
    %v3519 = vrot.slane %v3514, %v3518
    %v3520 = vlaneseq
    %v3521 = vshrl.u32 %v3520, 7
    %v3522 = vsub.s32 1, %v3521
    %v3523 = vrot.slane %v3514, %v3522
    %v3524 = vlaneseq
    %v3525 = vshrl.u32 %v3524, 7
    %v3526 = vsub.s32 2, %v3525
    %v3527 = vrot.slane %v3514, %v3526
    %v3528 = vlaneseq
    %v3529 = vshrl.u32 %v3528, 7
    %v3530 = vsub.s32 3, %v3529
    %v3531 = vrot.slane %v3514, %v3530
    %v3600 = vunpack.c.l.b16 %v322
    %v3601 = vunpack.c.h.b16 %v322
    %v3602 = vunpack.c.l.b16 %v323
    %v3603 = vunpack.c.h.b16 %v323
    %v3604 = vunpack.c.l.b16 %v324
    %v3605 = vunpack.c.h.b16 %v324
    %v3606 = vunpack.c.l.b16 %v325
    %v3607 = vunpack.c.h.b16 %v325
    %v3608 = vunpack.c.l.b16 %v326
    %v3609 = vunpack.c.h.b16 %v326
    %v3610 = vunpack.c.l.b16 %v327
    %v3611 = vunpack.c.h.b16 %v327
    %v3612 = vunpack.c.l.b16 %v328
    %v3613 = vunpack.c.h.b16 %v328
    %v3614 = vunpack.c.l.b16 %v329
    %v3615 = vunpack.c.h.b16 %v329
    %v3616 = vunpack.c.l.b16 %v330
    %v3617 = vunpack.c.h.b16 %v330
    %v3618 = vunpack.c.l.b16 %v331
    %v3619 = vunpack.c.h.b16 %v331
    %v3620 = vunpack.c.l.b16 %v332
    %v3621 = vunpack.c.h.b16 %v332
    %v3622 = vunpack.c.l.b16 %v333
    %v3623 = vunpack.c.h.b16 %v333
    %v3624 = vunpack.c.l.b16 %v334
    %v3625 = vunpack.c.h.b16 %v334
    %v3626 = vunpack.c.l.b16 %v335
    %v3627 = vunpack.c.h.b16 %v335
    %v3628 = vunpack.c.l.b16 %v336
    %v3629 = vunpack.c.h.b16 %v336
    %v3630 = vunpack.c.l.b16 %v337
    %v3631 = vunpack.c.h.b16 %v337
    %v3632 = vunpack.c.l.b16 %v338
    %v3633 = vunpack.c.h.b16 %v338
    %v3634 = vunpack.c.l.b16 %v339
    %v3635 = vunpack.c.h.b16 %v339
    %v3636 = vunpack.c.l.b16 %v340
    %v3637 = vunpack.c.h.b16 %v340
    %v3638 = vunpack.c.l.b16 %v341
    %v3639 = vunpack.c.h.b16 %v341
    %v3640 = vunpack.c.l.b16 %v342
    %v3641 = vunpack.c.h.b16 %v342
    %v3642 = vunpack.c.l.b16 %v343
    %v3643 = vunpack.c.h.b16 %v343
    %v3644 = vunpack.c.l.b16 %v344
    %v3645 = vunpack.c.h.b16 %v344
    %v3646 = vunpack.c.l.b16 %v345
    %v3647 = vunpack.c.h.b16 %v345
    %v3648 = vunpack.c.l.b16 %v346
    %v3649 = vunpack.c.h.b16 %v346
    %v3650 = vunpack.c.l.b16 %v347
    %v3651 = vunpack.c.h.b16 %v347
    %v3652 = vunpack.c.l.b16 %v348
    %v3653 = vunpack.c.h.b16 %v348
    %v3654 = vunpack.c.l.b16 %v349
    %v3655 = vunpack.c.h.b16 %v349
    %v3656 = vunpack.c.l.b16 %v350
    %v3657 = vunpack.c.h.b16 %v350
    %v3658 = vunpack.c.l.b16 %v351
    %v3659 = vunpack.c.h.b16 %v351
    %v3660 = vunpack.c.l.b16 %v352
    %v3661 = vunpack.c.h.b16 %v352
    %v3662 = vunpack.c.l.b16 %v353
    %v3663 = vunpack.c.h.b16 %v353
    %v3664 = vunpack.c.l.b16 %v354
    %v3665 = vunpack.c.h.b16 %v354
    %v3666 = vunpack.c.l.b16 %v355
    %v3667 = vunpack.c.h.b16 %v355
    %v3668 = vunpack.c.l.b16 %v356
    %v3669 = vunpack.c.h.b16 %v356
    %v3670 = vunpack.c.l.b16 %v357
    %v3671 = vunpack.c.h.b16 %v357
    %v3672 = vunpack.c.l.b16 %v358
    %v3673 = vunpack.c.h.b16 %v358
    %v3674 = vunpack.c.l.b16 %v359
    %v3675 = vunpack.c.h.b16 %v359
    %v3676 = vunpack.c.l.b16 %v360
    %v3677 = vunpack.c.h.b16 %v360
    %v3678 = vunpack.c.l.b16 %v361
    %v3679 = vunpack.c.h.b16 %v361
    %v3680 = vunpack.c.l.b16 %v362
    %v3681 = vunpack.c.h.b16 %v362
    %v3682 = vunpack.c.l.b16 %v363
    %v3683 = vunpack.c.h.b16 %v363
    %v3684 = vunpack.c.l.b16 %v364
    %v3685 = vunpack.c.h.b16 %v364
    %v3686 = vunpack.c.l.b16 %v365
    %v3687 = vunpack.c.h.b16 %v365
    %v3688 = vunpack.c.l.b16 %v366
    %v3689 = vunpack.c.h.b16 %v366
    %v3690 = vunpack.c.l.b16 %v367
    %v3691 = vunpack.c.h.b16 %v367
    %v3692 = vunpack.c.l.b16 %v368
    %v3693 = vunpack.c.h.b16 %v368
    %v3694 = vunpack.c.l.b16 %v369
    %v3695 = vunpack.c.h.b16 %v369
    %v3696 = vunpack.c.l.b16 %v370
    %v3697 = vunpack.c.h.b16 %v370
    %v3698 = vunpack.c.l.b16 %v371
    %v3699 = vunpack.c.h.b16 %v371
    %v3700 = vunpack.c.l.b16 %v372
    %v3701 = vunpack.c.h.b16 %v372
    %v3702 = vunpack.c.l.b16 %v373
    %v3703 = vunpack.c.h.b16 %v373
    %v3704 = vunpack.c.l.b16 %v374
    %v3705 = vunpack.c.h.b16 %v374
    %v3706 = vunpack.c.l.b16 %v375
    %v3707 = vunpack.c.h.b16 %v375
    %v3708 = vunpack.c.l.b16 %v376
    %v3709 = vunpack.c.h.b16 %v376
    %v3710 = vunpack.c.l.b16 %v377
    %v3711 = vunpack.c.h.b16 %v377
    %v3712 = vunpack.c.l.b16 %v378
    %v3713 = vunpack.c.h.b16 %v378
    %v3714 = vunpack.c.l.b16 %v379
    %v3715 = vunpack.c.h.b16 %v379
    %v3716 = vunpack.c.l.b16 %v380
    %v3717 = vunpack.c.h.b16 %v380
    %v3718 = vunpack.c.l.b16 %v381
    %v3719 = vunpack.c.h.b16 %v381
    %v3720 = vunpack.c.l.b16 %v382
    %v3721 = vunpack.c.h.b16 %v382
    %v3722 = vunpack.c.l.b16 %v383
    %v3723 = vunpack.c.h.b16 %v383
    %v3724 = vunpack.c.l.b16 %v384
    %v3725 = vunpack.c.h.b16 %v384
    %v3726 = vunpack.c.l.b16 %v385
    %v3727 = vunpack.c.h.b16 %v385
    %v3728 = vpack.c.b16 %v3604, %v3600
    %v3729 = vpack.c.b16 %v3605, %v3601
    %v3730 = vpack.c.b16 %v3606, %v3602
    %v3731 = vpack.c.b16 %v3607, %v3603
    %v3732 = vpack.c.b16 %v3612, %v3608
    %v3733 = vpack.c.b16 %v3613, %v3609
    %v3734 = vpack.c.b16 %v3614, %v3610
    %v3735 = vpack.c.b16 %v3615, %v3611
    %v3736 = vpack.c.b16 %v3620, %v3616
    %v3737 = vpack.c.b16 %v3621, %v3617
    %v3738 = vpack.c.b16 %v3622, %v3618
    %v3739 = vpack.c.b16 %v3623, %v3619
    %v3740 = vpack.c.b16 %v3628, %v3624
    %v3741 = vpack.c.b16 %v3629, %v3625
    %v3742 = vpack.c.b16 %v3630, %v3626
    %v3743 = vpack.c.b16 %v3631, %v3627
    %v3744 = vpack.c.b16 %v3636, %v3632
    %v3745 = vpack.c.b16 %v3637, %v3633
    %v3746 = vpack.c.b16 %v3638, %v3634
    %v3747 = vpack.c.b16 %v3639, %v3635
    %v3748 = vpack.c.b16 %v3644, %v3640
    %v3749 = vpack.c.b16 %v3645, %v3641
    %v3750 = vpack.c.b16 %v3646, %v3642
    %v3751 = vpack.c.b16 %v3647, %v3643
    %v3752 = vpack.c.b16 %v3652, %v3648
    %v3753 = vpack.c.b16 %v3653, %v3649
    %v3754 = vpack.c.b16 %v3654, %v3650
    %v3755 = vpack.c.b16 %v3655, %v3651
    %v3756 = vpack.c.b16 %v3660, %v3656
    %v3757 = vpack.c.b16 %v3661, %v3657
    %v3758 = vpack.c.b16 %v3662, %v3658
    %v3759 = vpack.c.b16 %v3663, %v3659
    %v3760 = vpack.c.b16 %v3668, %v3664
    %v3761 = vpack.c.b16 %v3669, %v3665
    %v3762 = vpack.c.b16 %v3670, %v3666
    %v3763 = vpack.c.b16 %v3671, %v3667
    %v3764 = vpack.c.b16 %v3676, %v3672
    %v3765 = vpack.c.b16 %v3677, %v3673
    %v3766 = vpack.c.b16 %v3678, %v3674
    %v3767 = vpack.c.b16 %v3679, %v3675
    %v3768 = vpack.c.b16 %v3684, %v3680
    %v3769 = vpack.c.b16 %v3685, %v3681
    %v3770 = vpack.c.b16 %v3686, %v3682
    %v3771 = vpack.c.b16 %v3687, %v3683
    %v3772 = vpack.c.b16 %v3692, %v3688
    %v3773 = vpack.c.b16 %v3693, %v3689
    %v3774 = vpack.c.b16 %v3694, %v3690
    %v3775 = vpack.c.b16 %v3695, %v3691
    %v3776 = vpack.c.b16 %v3700, %v3696
    %v3777 = vpack.c.b16 %v3701, %v3697
    %v3778 = vpack.c.b16 %v3702, %v3698
    %v3779 = vpack.c.b16 %v3703, %v3699
    %v3780 = vpack.c.b16 %v3708, %v3704
    %v3781 = vpack.c.b16 %v3709, %v3705
    %v3782 = vpack.c.b16 %v3710, %v3706
    %v3783 = vpack.c.b16 %v3711, %v3707
    %v3784 = vpack.c.b16 %v3716, %v3712
    %v3785 = vpack.c.b16 %v3717, %v3713
    %v3786 = vpack.c.b16 %v3718, %v3714
    %v3787 = vpack.c.b16 %v3719, %v3715
    %v3788 = vpack.c.b16 %v3724, %v3720
    %v3789 = vpack.c.b16 %v3725, %v3721
    %v3790 = vpack.c.b16 %v3726, %v3722
    %v3791 = vpack.c.b16 %v3727, %v3723
    %3856 = vmatprep.subr.bf16.mxu0 %v3729
    %3857 = vmatpush1.bf16.msra.mxu0 %v3728
    %3858 = vmatprep.subr.bf16.mxu0 %v3733
    %3859 = vmatpush1.bf16.msra.mxu0 %v3732
    %3860 = vmatprep.subr.bf16.mxu0 %v3737
    %3861 = vmatpush1.bf16.msra.mxu0 %v3736
    %3862 = vmatprep.subr.bf16.mxu0 %v3741
    %3863 = vmatpush1.bf16.msra.mxu0 %v3740
    %3864 = vmatprep.subr.bf16.mxu0 %v3745
    %3865 = vmatpush1.bf16.msra.mxu0 %v3744
    %3866 = vmatprep.subr.bf16.mxu0 %v3749
    %3867 = vmatpush1.bf16.msra.mxu0 %v3748
    %3868 = vmatprep.subr.bf16.mxu0 %v3753
    %3869 = vmatpush1.bf16.msra.mxu0 %v3752
    %3870 = vmatprep.subr.bf16.mxu0 %v3757
    %3871 = vmatpush1.bf16.msra.mxu0 %v3756
    %3872 = vmatprep.subr.bf16.mxu0 %v3761
    %3873 = vmatpush1.bf16.msra.mxu0 %v3760
    %3874 = vmatprep.subr.bf16.mxu0 %v3765
    %3875 = vmatpush1.bf16.msra.mxu0 %v3764
    %3876 = vmatprep.subr.bf16.mxu0 %v3769
    %3877 = vmatpush1.bf16.msra.mxu0 %v3768
    %3878 = vmatprep.subr.bf16.mxu0 %v3773
    %3879 = vmatpush1.bf16.msra.mxu0 %v3772
    %3880 = vmatprep.subr.bf16.mxu0 %v3777
    %3881 = vmatpush1.bf16.msra.mxu0 %v3776
    %3882 = vmatprep.subr.bf16.mxu0 %v3781
    %3883 = vmatpush1.bf16.msra.mxu0 %v3780
    %3884 = vmatprep.subr.bf16.mxu0 %v3785
    %3885 = vmatpush1.bf16.msra.mxu0 %v3784
    %3886 = vmatprep.subr.bf16.mxu0 %v3789
    %3887 = vmatpush1.bf16.msra.mxu0 %v3788
    %3888 = vmatprep.mubr.bf16.mxu0 %v3483
    %3889 = vmatmul.mubr.bf16.gmra.mrb[0].mxu0 %v3482
    %v3890 = vpop.f32.mrb[0].mxu0
    %v3891 = vadd.f32 %v3519, %v3890
    %v3892 = vpop.f32.mrb[0].mxu0
    %v3893 = vadd.f32 %v3523, %v3892
    %v3894 = vpop.f32.mrb[0].mxu0
    %v3895 = vadd.f32 %v3519, %v3894
    %v3896 = vpop.f32.mrb[0].mxu0
    %v3897 = vadd.f32 %v3523, %v3896
    %3898 = vmatprep.mubr.bf16.mxu0 %v3485
    %3899 = vmatmul.mubr.bf16.gmra.mrb[0].mxu0 %v3484
    %v3900 = vpop.f32.mrb[0].mxu0
    %v3901 = vadd.f32 %v3519, %v3900
    %v3902 = vpop.f32.mrb[0].mxu0
    %v3903 = vadd.f32 %v3523, %v3902
    %v3904 = vpop.f32.mrb[0].mxu0
    %v3905 = vadd.f32 %v3519, %v3904
    %v3906 = vpop.f32.mrb[0].mxu0
    %v3907 = vadd.f32 %v3523, %v3906
    %3908 = vmatprep.mubr.bf16.mxu0 %v3487
    %3909 = vmatmul.mubr.bf16.gmra.mrb[0].mxu0 %v3486
    %v3910 = vpop.f32.mrb[0].mxu0
    %v3911 = vadd.f32 %v3519, %v3910
    %v3912 = vpop.f32.mrb[0].mxu0
    %v3913 = vadd.f32 %v3523, %v3912
    %v3914 = vpop.f32.mrb[0].mxu0
    %v3915 = vadd.f32 %v3519, %v3914
    %v3916 = vpop.f32.mrb[0].mxu0
    %v3917 = vadd.f32 %v3523, %v3916
    %3918 = vmatprep.mubr.bf16.mxu0 %v3489
    %3919 = vmatmul.mubr.bf16.gmra.mrb[0].mxu0 %v3488
    %v3920 = vpop.f32.mrb[0].mxu0
    %v3921 = vadd.f32 %v3519, %v3920
    %v3922 = vpop.f32.mrb[0].mxu0
    %v3923 = vadd.f32 %v3523, %v3922
    %v3924 = vpop.f32.mrb[0].mxu0
    %v3925 = vadd.f32 %v3519, %v3924
    %v3926 = vpop.f32.mrb[0].mxu0
    %v3927 = vadd.f32 %v3523, %v3926
    %3928 = vmatprep.mubr.bf16.mxu0 %v3491
    %3929 = vmatmul.mubr.bf16.gmra.mrb[0].mxu0 %v3490
    %v3930 = vpop.f32.mrb[0].mxu0
    %v3931 = vadd.f32 %v3519, %v3930
    %v3932 = vpop.f32.mrb[0].mxu0
    %v3933 = vadd.f32 %v3523, %v3932
    %v3934 = vpop.f32.mrb[0].mxu0
    %v3935 = vadd.f32 %v3519, %v3934
    %v3936 = vpop.f32.mrb[0].mxu0
    %v3937 = vadd.f32 %v3523, %v3936
    %3938 = vmatprep.mubr.bf16.mxu0 %v3493
    %3939 = vmatmul.mubr.bf16.gmra.mrb[0].mxu0 %v3492
    %v3940 = vpop.f32.mrb[0].mxu0
    %v3941 = vadd.f32 %v3519, %v3940
    %v3942 = vpop.f32.mrb[0].mxu0
    %v3943 = vadd.f32 %v3523, %v3942
    %v3944 = vpop.f32.mrb[0].mxu0
    %v3945 = vadd.f32 %v3519, %v3944
    %v3946 = vpop.f32.mrb[0].mxu0
    %v3947 = vadd.f32 %v3523, %v3946
    %3948 = vmatprep.mubr.bf16.mxu0 %v3495
    %3949 = vmatmul.mubr.bf16.gmra.mrb[0].mxu0 %v3494
    %v3950 = vpop.f32.mrb[0].mxu0
    %v3951 = vadd.f32 %v3519, %v3950
    %v3952 = vpop.f32.mrb[0].mxu0
    %v3953 = vadd.f32 %v3523, %v3952
    %v3954 = vpop.f32.mrb[0].mxu0
    %v3955 = vadd.f32 %v3519, %v3954
    %v3956 = vpop.f32.mrb[0].mxu0
    %v3957 = vadd.f32 %v3523, %v3956
    %3958 = vmatprep.mubr.bf16.mxu0 %v3497
    %3959 = vmatmul.mubr.bf16.gmra.mrb[0].mxu0 %v3496
    %v3960 = vpop.f32.mrb[0].mxu0
    %v3961 = vadd.f32 %v3519, %v3960
    %v3962 = vpop.f32.mrb[0].mxu0
    %v3963 = vadd.f32 %v3523, %v3962
    %v3964 = vpop.f32.mrb[0].mxu0
    %v3965 = vadd.f32 %v3519, %v3964
    %v3966 = vpop.f32.mrb[0].mxu0
    %v3967 = vadd.f32 %v3523, %v3966
    %3968 = vmatprep.mubr.bf16.mxu0 %v3499
    %3969 = vmatmul.mubr.bf16.gmra.mrb[0].mxu0 %v3498
    %v3970 = vpop.f32.mrb[0].mxu0
    %v3971 = vadd.f32 %v3519, %v3970
    %v3972 = vpop.f32.mrb[0].mxu0
    %v3973 = vadd.f32 %v3523, %v3972
    %v3974 = vpop.f32.mrb[0].mxu0
    %v3975 = vadd.f32 %v3519, %v3974
    %v3976 = vpop.f32.mrb[0].mxu0
    %v3977 = vadd.f32 %v3523, %v3976
    %3978 = vmatprep.mubr.bf16.mxu0 %v3501
    %3979 = vmatmul.mubr.bf16.gmra.mrb[0].mxu0 %v3500
    %v3980 = vpop.f32.mrb[0].mxu0
    %v3981 = vadd.f32 %v3519, %v3980
    %v3982 = vpop.f32.mrb[0].mxu0
    %v3983 = vadd.f32 %v3523, %v3982
    %v3984 = vpop.f32.mrb[0].mxu0
    %v3985 = vadd.f32 %v3519, %v3984
    %v3986 = vpop.f32.mrb[0].mxu0
    %v3987 = vadd.f32 %v3523, %v3986
    %3988 = vmatprep.mubr.bf16.mxu0 %v3503
    %3989 = vmatmul.mubr.bf16.gmra.mrb[0].mxu0 %v3502
    %v3990 = vpop.f32.mrb[0].mxu0
    %v3991 = vadd.f32 %v3519, %v3990
    %v3992 = vpop.f32.mrb[0].mxu0
    %v3993 = vadd.f32 %v3523, %v3992
    %v3994 = vpop.f32.mrb[0].mxu0
    %v3995 = vadd.f32 %v3519, %v3994
    %v3996 = vpop.f32.mrb[0].mxu0
    %v3997 = vadd.f32 %v3523, %v3996
    %3998 = vmatprep.mubr.bf16.mxu0 %v3505
    %3999 = vmatmul.mubr.bf16.gmra.mrb[0].mxu0 %v3504
    %v4000 = vpop.f32.mrb[0].mxu0
    %v4001 = vadd.f32 %v3519, %v4000
    %v4002 = vpop.f32.mrb[0].mxu0
    %v4003 = vadd.f32 %v3523, %v4002
    %v4004 = vpop.f32.mrb[0].mxu0
    %v4005 = vadd.f32 %v3519, %v4004
    %v4006 = vpop.f32.mrb[0].mxu0
    %v4007 = vadd.f32 %v3523, %v4006
    %4008 = vmatprep.mubr.bf16.mxu0 %v3507
    %4009 = vmatmul.mubr.bf16.gmra.mrb[0].mxu0 %v3506
    %v4010 = vpop.f32.mrb[0].mxu0
    %v4011 = vadd.f32 %v3519, %v4010
    %v4012 = vpop.f32.mrb[0].mxu0
    %v4013 = vadd.f32 %v3523, %v4012
    %v4014 = vpop.f32.mrb[0].mxu0
    %v4015 = vadd.f32 %v3519, %v4014
    %v4016 = vpop.f32.mrb[0].mxu0
    %v4017 = vadd.f32 %v3523, %v4016
    %4018 = vmatprep.mubr.bf16.mxu0 %v3509
    %4019 = vmatmul.mubr.bf16.gmra.mrb[0].mxu0 %v3508
    %v4020 = vpop.f32.mrb[0].mxu0
    %v4021 = vadd.f32 %v3519, %v4020
    %v4022 = vpop.f32.mrb[0].mxu0
    %v4023 = vadd.f32 %v3523, %v4022
    %v4024 = vpop.f32.mrb[0].mxu0
    %v4025 = vadd.f32 %v3519, %v4024
    %v4026 = vpop.f32.mrb[0].mxu0
    %v4027 = vadd.f32 %v3523, %v4026
    %4028 = vmatprep.mubr.bf16.mxu0 %v3511
    %4029 = vmatmul.mubr.bf16.gmra.mrb[0].mxu0 %v3510
    %v4030 = vpop.f32.mrb[0].mxu0
    %v4031 = vadd.f32 %v3519, %v4030
    %v4032 = vpop.f32.mrb[0].mxu0
    %v4033 = vadd.f32 %v3523, %v4032
    %v4034 = vpop.f32.mrb[0].mxu0
    %v4035 = vadd.f32 %v3519, %v4034
    %v4036 = vpop.f32.mrb[0].mxu0
    %v4037 = vadd.f32 %v3523, %v4036
    %4038 = vmatprep.mubr.bf16.mxu0 %v3513
    %4039 = vmatmul.mubr.bf16.gmra.mrb[0].mxu0 %v3512
    %v4040 = vpop.f32.mrb[0].mxu0
    %v4041 = vadd.f32 %v3519, %v4040
    %v4042 = vpop.f32.mrb[0].mxu0
    %v4043 = vadd.f32 %v3523, %v4042
    %v4044 = vpop.f32.mrb[0].mxu0
    %v4045 = vadd.f32 %v3519, %v4044
    %v4046 = vpop.f32.mrb[0].mxu0
    %v4047 = vadd.f32 %v3523, %v4046
    %4048 = vdwg.mxu0
    %4049 = vmatprep.subr.bf16.mxu0 %v3731
    %4050 = vmatpush1.bf16.msra.mxu0 %v3730
    %4051 = vmatprep.subr.bf16.mxu0 %v3735
    %4052 = vmatpush1.bf16.msra.mxu0 %v3734
    %4053 = vmatprep.subr.bf16.mxu0 %v3739
    %4054 = vmatpush1.bf16.msra.mxu0 %v3738
    %4055 = vmatprep.subr.bf16.mxu0 %v3743
    %4056 = vmatpush1.bf16.msra.mxu0 %v3742
    %4057 = vmatprep.subr.bf16.mxu0 %v3747
    %4058 = vmatpush1.bf16.msra.mxu0 %v3746
    %4059 = vmatprep.subr.bf16.mxu0 %v3751
    %4060 = vmatpush1.bf16.msra.mxu0 %v3750
    %4061 = vmatprep.subr.bf16.mxu0 %v3755
    %4062 = vmatpush1.bf16.msra.mxu0 %v3754
    %4063 = vmatprep.subr.bf16.mxu0 %v3759
    %4064 = vmatpush1.bf16.msra.mxu0 %v3758
    %4065 = vmatprep.subr.bf16.mxu0 %v3763
    %4066 = vmatpush1.bf16.msra.mxu0 %v3762
    %4067 = vmatprep.subr.bf16.mxu0 %v3767
    %4068 = vmatpush1.bf16.msra.mxu0 %v3766
    %4069 = vmatprep.subr.bf16.mxu0 %v3771
    %4070 = vmatpush1.bf16.msra.mxu0 %v3770
    %4071 = vmatprep.subr.bf16.mxu0 %v3775
    %4072 = vmatpush1.bf16.msra.mxu0 %v3774
    %4073 = vmatprep.subr.bf16.mxu0 %v3779
    %4074 = vmatpush1.bf16.msra.mxu0 %v3778
    %4075 = vmatprep.subr.bf16.mxu0 %v3783
    %4076 = vmatpush1.bf16.msra.mxu0 %v3782
    %4077 = vmatprep.subr.bf16.mxu0 %v3787
    %4078 = vmatpush1.bf16.msra.mxu0 %v3786
    %4079 = vmatprep.subr.bf16.mxu0 %v3791
    %4080 = vmatpush1.bf16.msra.mxu0 %v3790
    %4081 = vmatprep.mubr.bf16.mxu0 %v3483
    %4082 = vmatmul.mubr.bf16.gmra.mrb[0].mxu0 %v3482
    %v4083 = vpop.f32.mrb[0].mxu0
    %v4084 = vadd.f32 %v3527, %v4083
    %v4085 = vpop.f32.mrb[0].mxu0
    %v4086 = vadd.f32 %v3531, %v4085
    %v4087 = vpop.f32.mrb[0].mxu0
    %v4088 = vadd.f32 %v3527, %v4087
    %v4089 = vpop.f32.mrb[0].mxu0
    %v4090 = vadd.f32 %v3531, %v4089
    %4091 = vmatprep.mubr.bf16.mxu0 %v3485
    %4092 = vmatmul.mubr.bf16.gmra.mrb[0].mxu0 %v3484
    %v4093 = vpop.f32.mrb[0].mxu0
    %v4094 = vadd.f32 %v3527, %v4093
    %v4095 = vpop.f32.mrb[0].mxu0
    %v4096 = vadd.f32 %v3531, %v4095
    %v4097 = vpop.f32.mrb[0].mxu0
    %v4098 = vadd.f32 %v3527, %v4097
    %v4099 = vpop.f32.mrb[0].mxu0
    %v4100 = vadd.f32 %v3531, %v4099
    %4101 = vmatprep.mubr.bf16.mxu0 %v3487
    %4102 = vmatmul.mubr.bf16.gmra.mrb[0].mxu0 %v3486
    %v4103 = vpop.f32.mrb[0].mxu0
    %v4104 = vadd.f32 %v3527, %v4103
    %v4105 = vpop.f32.mrb[0].mxu0
    %v4106 = vadd.f32 %v3531, %v4105
    %v4107 = vpop.f32.mrb[0].mxu0
    %v4108 = vadd.f32 %v3527, %v4107
    %v4109 = vpop.f32.mrb[0].mxu0
    %v4110 = vadd.f32 %v3531, %v4109
    %4111 = vmatprep.mubr.bf16.mxu0 %v3489
    %4112 = vmatmul.mubr.bf16.gmra.mrb[0].mxu0 %v3488
    %v4113 = vpop.f32.mrb[0].mxu0
    %v4114 = vadd.f32 %v3527, %v4113
    %v4115 = vpop.f32.mrb[0].mxu0
    %v4116 = vadd.f32 %v3531, %v4115
    %v4117 = vpop.f32.mrb[0].mxu0
    %v4118 = vadd.f32 %v3527, %v4117
    %v4119 = vpop.f32.mrb[0].mxu0
    %v4120 = vadd.f32 %v3531, %v4119
    %4121 = vmatprep.mubr.bf16.mxu0 %v3491
    %4122 = vmatmul.mubr.bf16.gmra.mrb[0].mxu0 %v3490
    %v4123 = vpop.f32.mrb[0].mxu0
    %v4124 = vadd.f32 %v3527, %v4123
    %v4125 = vpop.f32.mrb[0].mxu0
    %v4126 = vadd.f32 %v3531, %v4125
    %v4127 = vpop.f32.mrb[0].mxu0
    %v4128 = vadd.f32 %v3527, %v4127
    %v4129 = vpop.f32.mrb[0].mxu0
    %v4130 = vadd.f32 %v3531, %v4129
    %4131 = vmatprep.mubr.bf16.mxu0 %v3493
    %4132 = vmatmul.mubr.bf16.gmra.mrb[0].mxu0 %v3492
    %v4133 = vpop.f32.mrb[0].mxu0
    %v4134 = vadd.f32 %v3527, %v4133
    %v4135 = vpop.f32.mrb[0].mxu0
    %v4136 = vadd.f32 %v3531, %v4135
    %v4137 = vpop.f32.mrb[0].mxu0
    %v4138 = vadd.f32 %v3527, %v4137
    %v4139 = vpop.f32.mrb[0].mxu0
    %v4140 = vadd.f32 %v3531, %v4139
    %4141 = vmatprep.mubr.bf16.mxu0 %v3495
    %4142 = vmatmul.mubr.bf16.gmra.mrb[0].mxu0 %v3494
    %v4143 = vpop.f32.mrb[0].mxu0
    %v4144 = vadd.f32 %v3527, %v4143
    %v4145 = vpop.f32.mrb[0].mxu0
    %v4146 = vadd.f32 %v3531, %v4145
    %v4147 = vpop.f32.mrb[0].mxu0
    %v4148 = vadd.f32 %v3527, %v4147
    %v4149 = vpop.f32.mrb[0].mxu0
    %v4150 = vadd.f32 %v3531, %v4149
    %4151 = vmatprep.mubr.bf16.mxu0 %v3497
    %4152 = vmatmul.mubr.bf16.gmra.mrb[0].mxu0 %v3496
    %v4153 = vpop.f32.mrb[0].mxu0
    %v4154 = vadd.f32 %v3527, %v4153
    %v4155 = vpop.f32.mrb[0].mxu0
    %v4156 = vadd.f32 %v3531, %v4155
    %v4157 = vpop.f32.mrb[0].mxu0
    %v4158 = vadd.f32 %v3527, %v4157
    %v4159 = vpop.f32.mrb[0].mxu0
    %v4160 = vadd.f32 %v3531, %v4159
    %4161 = vmatprep.mubr.bf16.mxu0 %v3499
    %4162 = vmatmul.mubr.bf16.gmra.mrb[0].mxu0 %v3498
    %v4163 = vpop.f32.mrb[0].mxu0
    %v4164 = vadd.f32 %v3527, %v4163
    %v4165 = vpop.f32.mrb[0].mxu0
    %v4166 = vadd.f32 %v3531, %v4165
    %v4167 = vpop.f32.mrb[0].mxu0
    %v4168 = vadd.f32 %v3527, %v4167
    %v4169 = vpop.f32.mrb[0].mxu0
    %v4170 = vadd.f32 %v3531, %v4169
    %4171 = vmatprep.mubr.bf16.mxu0 %v3501
    %4172 = vmatmul.mubr.bf16.gmra.mrb[0].mxu0 %v3500
    %v4173 = vpop.f32.mrb[0].mxu0
    %v4174 = vadd.f32 %v3527, %v4173
    %v4175 = vpop.f32.mrb[0].mxu0
    %v4176 = vadd.f32 %v3531, %v4175
    %v4177 = vpop.f32.mrb[0].mxu0
    %v4178 = vadd.f32 %v3527, %v4177
    %v4179 = vpop.f32.mrb[0].mxu0
    %v4180 = vadd.f32 %v3531, %v4179
    %4181 = vmatprep.mubr.bf16.mxu0 %v3503
    %4182 = vmatmul.mubr.bf16.gmra.mrb[0].mxu0 %v3502
    %v4183 = vpop.f32.mrb[0].mxu0
    %v4184 = vadd.f32 %v3527, %v4183
    %v4185 = vpop.f32.mrb[0].mxu0
    %v4186 = vadd.f32 %v3531, %v4185
    %v4187 = vpop.f32.mrb[0].mxu0
    %v4188 = vadd.f32 %v3527, %v4187
    %v4189 = vpop.f32.mrb[0].mxu0
    %v4190 = vadd.f32 %v3531, %v4189
    %4191 = vmatprep.mubr.bf16.mxu0 %v3505
    %4192 = vmatmul.mubr.bf16.gmra.mrb[0].mxu0 %v3504
    %v4193 = vpop.f32.mrb[0].mxu0
    %v4194 = vadd.f32 %v3527, %v4193
    %v4195 = vpop.f32.mrb[0].mxu0
    %v4196 = vadd.f32 %v3531, %v4195
    %v4197 = vpop.f32.mrb[0].mxu0
    %v4198 = vadd.f32 %v3527, %v4197
    %v4199 = vpop.f32.mrb[0].mxu0
    %v4200 = vadd.f32 %v3531, %v4199
    %4201 = vmatprep.mubr.bf16.mxu0 %v3507
    %4202 = vmatmul.mubr.bf16.gmra.mrb[0].mxu0 %v3506
    %v4203 = vpop.f32.mrb[0].mxu0
    %v4204 = vadd.f32 %v3527, %v4203
    %v4205 = vpop.f32.mrb[0].mxu0
    %v4206 = vadd.f32 %v3531, %v4205
    %v4207 = vpop.f32.mrb[0].mxu0
    %v4208 = vadd.f32 %v3527, %v4207
    %v4209 = vpop.f32.mrb[0].mxu0
    %v4210 = vadd.f32 %v3531, %v4209
    %4211 = vmatprep.mubr.bf16.mxu0 %v3509
    %4212 = vmatmul.mubr.bf16.gmra.mrb[0].mxu0 %v3508
    %v4213 = vpop.f32.mrb[0].mxu0
    %v4214 = vadd.f32 %v3527, %v4213
    %v4215 = vpop.f32.mrb[0].mxu0
    %v4216 = vadd.f32 %v3531, %v4215
    %v4217 = vpop.f32.mrb[0].mxu0
    %v4218 = vadd.f32 %v3527, %v4217
    %v4219 = vpop.f32.mrb[0].mxu0
    %v4220 = vadd.f32 %v3531, %v4219
    %4221 = vmatprep.mubr.bf16.mxu0 %v3511
    %4222 = vmatmul.mubr.bf16.gmra.mrb[0].mxu0 %v3510
    %v4223 = vpop.f32.mrb[0].mxu0
    %v4224 = vadd.f32 %v3527, %v4223
    %v4225 = vpop.f32.mrb[0].mxu0
    %v4226 = vadd.f32 %v3531, %v4225
    %v4227 = vpop.f32.mrb[0].mxu0
    %v4228 = vadd.f32 %v3527, %v4227
    %v4229 = vpop.f32.mrb[0].mxu0
    %v4230 = vadd.f32 %v3531, %v4229
    %4231 = vmatprep.mubr.bf16.mxu0 %v3513
    %4232 = vmatmul.mubr.bf16.gmra.mrb[0].mxu0 %v3512
    %v4233 = vpop.f32.mrb[0].mxu0
    %v4234 = vadd.f32 %v3527, %v4233
    %v4235 = vpop.f32.mrb[0].mxu0
    %v4236 = vadd.f32 %v3531, %v4235
    %v4237 = vpop.f32.mrb[0].mxu0
    %v4238 = vadd.f32 %v3527, %v4237
    %v4239 = vpop.f32.mrb[0].mxu0
    %v4240 = vadd.f32 %v3531, %v4239
    %4241 = vdwg.mxu0
    %v4242 = vmax.f32 %v3891, 0.0
    %v4243 = vmax.f32 %v3893, 0.0
    %v4244 = vmax.f32 %v4084, 0.0
    %v4245 = vmax.f32 %v4086, 0.0
    %v4246 = vmax.f32 %v3895, 0.0
    %v4247 = vmax.f32 %v3897, 0.0
    %v4248 = vmax.f32 %v4088, 0.0
    %v4249 = vmax.f32 %v4090, 0.0
    %v4250 = vmax.f32 %v3901, 0.0
    %v4251 = vmax.f32 %v3903, 0.0
    %v4252 = vmax.f32 %v4094, 0.0
    %v4253 = vmax.f32 %v4096, 0.0
    %v4254 = vmax.f32 %v3905, 0.0
    %v4255 = vmax.f32 %v3907, 0.0
    %v4256 = vmax.f32 %v4098, 0.0
    %v4257 = vmax.f32 %v4100, 0.0
    %v4258 = vmax.f32 %v3911, 0.0
    %v4259 = vmax.f32 %v3913, 0.0
    %v4260 = vmax.f32 %v4104, 0.0
    %v4261 = vmax.f32 %v4106, 0.0
    %v4262 = vmax.f32 %v3915, 0.0
    %v4263 = vmax.f32 %v3917, 0.0
    %v4264 = vmax.f32 %v4108, 0.0
    %v4265 = vmax.f32 %v4110, 0.0
    %v4266 = vmax.f32 %v3921, 0.0
    %v4267 = vmax.f32 %v3923, 0.0
    %v4268 = vmax.f32 %v4114, 0.0
    %v4269 = vmax.f32 %v4116, 0.0
    %v4270 = vmax.f32 %v3925, 0.0
    %v4271 = vmax.f32 %v3927, 0.0
    %v4272 = vmax.f32 %v4118, 0.0
    %v4273 = vmax.f32 %v4120, 0.0
    %v4274 = vmax.f32 %v3931, 0.0
    %v4275 = vmax.f32 %v3933, 0.0
    %v4276 = vmax.f32 %v4124, 0.0
    %v4277 = vmax.f32 %v4126, 0.0
    %v4278 = vmax.f32 %v3935, 0.0
    %v4279 = vmax.f32 %v3937, 0.0
    %v4280 = vmax.f32 %v4128, 0.0
    %v4281 = vmax.f32 %v4130, 0.0
    %v4282 = vmax.f32 %v3941, 0.0
    %v4283 = vmax.f32 %v3943, 0.0
    %v4284 = vmax.f32 %v4134, 0.0
    %v4285 = vmax.f32 %v4136, 0.0
    %v4286 = vmax.f32 %v3945, 0.0
    %v4287 = vmax.f32 %v3947, 0.0
    %v4288 = vmax.f32 %v4138, 0.0
    %v4289 = vmax.f32 %v4140, 0.0
    %v4290 = vmax.f32 %v3951, 0.0
    %v4291 = vmax.f32 %v3953, 0.0
    %v4292 = vmax.f32 %v4144, 0.0
    %v4293 = vmax.f32 %v4146, 0.0
    %v4294 = vmax.f32 %v3955, 0.0
    %v4295 = vmax.f32 %v3957, 0.0
    %v4296 = vmax.f32 %v4148, 0.0
    %v4297 = vmax.f32 %v4150, 0.0
    %v4298 = vmax.f32 %v3961, 0.0
    %v4299 = vmax.f32 %v3963, 0.0
    %v4300 = vmax.f32 %v4154, 0.0
    %v4301 = vmax.f32 %v4156, 0.0
    %v4302 = vmax.f32 %v3965, 0.0
    %v4303 = vmax.f32 %v3967, 0.0
    %v4304 = vmax.f32 %v4158, 0.0
    %v4305 = vmax.f32 %v4160, 0.0
    %v4306 = vmax.f32 %v3971, 0.0
    %v4307 = vmax.f32 %v3973, 0.0
    %v4308 = vmax.f32 %v4164, 0.0
    %v4309 = vmax.f32 %v4166, 0.0
    %v4310 = vmax.f32 %v3975, 0.0
    %v4311 = vmax.f32 %v3977, 0.0
    %v4312 = vmax.f32 %v4168, 0.0
    %v4313 = vmax.f32 %v4170, 0.0
    %v4314 = vmax.f32 %v3981, 0.0
    %v4315 = vmax.f32 %v3983, 0.0
    %v4316 = vmax.f32 %v4174, 0.0
    %v4317 = vmax.f32 %v4176, 0.0
    %v4318 = vmax.f32 %v3985, 0.0
    %v4319 = vmax.f32 %v3987, 0.0
    %v4320 = vmax.f32 %v4178, 0.0
    %v4321 = vmax.f32 %v4180, 0.0
    %v4322 = vmax.f32 %v3991, 0.0
    %v4323 = vmax.f32 %v3993, 0.0
    %v4324 = vmax.f32 %v4184, 0.0
    %v4325 = vmax.f32 %v4186, 0.0
    %v4326 = vmax.f32 %v3995, 0.0
    %v4327 = vmax.f32 %v3997, 0.0
    %v4328 = vmax.f32 %v4188, 0.0
    %v4329 = vmax.f32 %v4190, 0.0
    %v4330 = vmax.f32 %v4001, 0.0
    %v4331 = vmax.f32 %v4003, 0.0
    %v4332 = vmax.f32 %v4194, 0.0
    %v4333 = vmax.f32 %v4196, 0.0
    %v4334 = vmax.f32 %v4005, 0.0
    %v4335 = vmax.f32 %v4007, 0.0
    %v4336 = vmax.f32 %v4198, 0.0
    %v4337 = vmax.f32 %v4200, 0.0
    %v4338 = vmax.f32 %v4011, 0.0
    %v4339 = vmax.f32 %v4013, 0.0
    %v4340 = vmax.f32 %v4204, 0.0
    %v4341 = vmax.f32 %v4206, 0.0
    %v4342 = vmax.f32 %v4015, 0.0
    %v4343 = vmax.f32 %v4017, 0.0
    %v4344 = vmax.f32 %v4208, 0.0
    %v4345 = vmax.f32 %v4210, 0.0
    %v4346 = vmax.f32 %v4021, 0.0
    %v4347 = vmax.f32 %v4023, 0.0
    %v4348 = vmax.f32 %v4214, 0.0
    %v4349 = vmax.f32 %v4216, 0.0
    %v4350 = vmax.f32 %v4025, 0.0
    %v4351 = vmax.f32 %v4027, 0.0
    %v4352 = vmax.f32 %v4218, 0.0
    %v4353 = vmax.f32 %v4220, 0.0
    %v4354 = vmax.f32 %v4031, 0.0
    %v4355 = vmax.f32 %v4033, 0.0
    %v4356 = vmax.f32 %v4224, 0.0
    %v4357 = vmax.f32 %v4226, 0.0
    %v4358 = vmax.f32 %v4035, 0.0
    %v4359 = vmax.f32 %v4037, 0.0
    %v4360 = vmax.f32 %v4228, 0.0
    %v4361 = vmax.f32 %v4230, 0.0
    %v4362 = vmax.f32 %v4041, 0.0
    %v4363 = vmax.f32 %v4043, 0.0
    %v4364 = vmax.f32 %v4234, 0.0
    %v4365 = vmax.f32 %v4236, 0.0
    %v4366 = vmax.f32 %v4045, 0.0
    %v4367 = vmax.f32 %v4047, 0.0
    %v4368 = vmax.f32 %v4238, 0.0
    %v4369 = vmax.f32 %v4240, 0.0
    %v4370 = vpack.c.bf16 %v4246, %v4242
    %v4371 = vpack.c.bf16 %v4247, %v4243
    %v4372 = vpack.c.bf16 %v4248, %v4244
    %v4373 = vpack.c.bf16 %v4249, %v4245
    %v4374 = vpack.c.bf16 %v4254, %v4250
    %v4375 = vpack.c.bf16 %v4255, %v4251
    %v4376 = vpack.c.bf16 %v4256, %v4252
    %v4377 = vpack.c.bf16 %v4257, %v4253
    %v4378 = vpack.c.bf16 %v4262, %v4258
    %v4379 = vpack.c.bf16 %v4263, %v4259
    %v4380 = vpack.c.bf16 %v4264, %v4260
    %v4381 = vpack.c.bf16 %v4265, %v4261
    %v4382 = vpack.c.bf16 %v4270, %v4266
    %v4383 = vpack.c.bf16 %v4271, %v4267
    %v4384 = vpack.c.bf16 %v4272, %v4268
    %v4385 = vpack.c.bf16 %v4273, %v4269
    %v4386 = vpack.c.bf16 %v4278, %v4274
    %v4387 = vpack.c.bf16 %v4279, %v4275
    %v4388 = vpack.c.bf16 %v4280, %v4276
    %v4389 = vpack.c.bf16 %v4281, %v4277
    %v4390 = vpack.c.bf16 %v4286, %v4282
    %v4391 = vpack.c.bf16 %v4287, %v4283
    %v4392 = vpack.c.bf16 %v4288, %v4284
    %v4393 = vpack.c.bf16 %v4289, %v4285
    %v4394 = vpack.c.bf16 %v4294, %v4290
    %v4395 = vpack.c.bf16 %v4295, %v4291
    %v4396 = vpack.c.bf16 %v4296, %v4292
    %v4397 = vpack.c.bf16 %v4297, %v4293
    %v4398 = vpack.c.bf16 %v4302, %v4298
    %v4399 = vpack.c.bf16 %v4303, %v4299
    %v4400 = vpack.c.bf16 %v4304, %v4300
    %v4401 = vpack.c.bf16 %v4305, %v4301
    %v4402 = vpack.c.bf16 %v4310, %v4306
    %v4403 = vpack.c.bf16 %v4311, %v4307
    %v4404 = vpack.c.bf16 %v4312, %v4308
    %v4405 = vpack.c.bf16 %v4313, %v4309
    %v4406 = vpack.c.bf16 %v4318, %v4314
    %v4407 = vpack.c.bf16 %v4319, %v4315
    %v4408 = vpack.c.bf16 %v4320, %v4316
    %v4409 = vpack.c.bf16 %v4321, %v4317
    %v4410 = vpack.c.bf16 %v4326, %v4322
    %v4411 = vpack.c.bf16 %v4327, %v4323
    %v4412 = vpack.c.bf16 %v4328, %v4324
    %v4413 = vpack.c.bf16 %v4329, %v4325
    %v4414 = vpack.c.bf16 %v4334, %v4330
    %v4415 = vpack.c.bf16 %v4335, %v4331
    %v4416 = vpack.c.bf16 %v4336, %v4332
    %v4417 = vpack.c.bf16 %v4337, %v4333
    %v4418 = vpack.c.bf16 %v4342, %v4338
    %v4419 = vpack.c.bf16 %v4343, %v4339
    %v4420 = vpack.c.bf16 %v4344, %v4340
    %v4421 = vpack.c.bf16 %v4345, %v4341
    %v4422 = vpack.c.bf16 %v4350, %v4346
    %v4423 = vpack.c.bf16 %v4351, %v4347
    %v4424 = vpack.c.bf16 %v4352, %v4348
    %v4425 = vpack.c.bf16 %v4353, %v4349
    %v4426 = vpack.c.bf16 %v4358, %v4354
    %v4427 = vpack.c.bf16 %v4359, %v4355
    %v4428 = vpack.c.bf16 %v4360, %v4356
    %v4429 = vpack.c.bf16 %v4361, %v4357
    %v4430 = vpack.c.bf16 %v4366, %v4362
    %v4431 = vpack.c.bf16 %v4367, %v4363
    %v4432 = vpack.c.bf16 %v4368, %v4364
    %v4433 = vpack.c.bf16 %v4369, %v4365
    %v4434 = vld [vmem:[%s6 + $0xf] sm:$0x1]
    %v4436 = vlaneseq
    %v4437 = vshrl.u32 %v4436, 7
    %v4438 = vsub.s32 0, %v4437
    %v4439 = vrot.slane %v4434, %v4438
    %v4505 = vunpack.c.l.b16 %v114
    %v4506 = vunpack.c.l.b16 %v115
    %v4507 = vunpack.c.l.b16 %v116
    %v4508 = vunpack.c.l.b16 %v117
    %v4509 = vunpack.c.l.b16 %v118
    %v4510 = vunpack.c.l.b16 %v119
    %v4511 = vunpack.c.l.b16 %v120
    %v4512 = vunpack.c.l.b16 %v121
    %v4513 = vunpack.c.l.b16 %v122
    %v4514 = vunpack.c.l.b16 %v123
    %v4515 = vunpack.c.l.b16 %v124
    %v4516 = vunpack.c.l.b16 %v125
    %v4517 = vunpack.c.l.b16 %v126
    %v4518 = vunpack.c.l.b16 %v127
    %v4519 = vunpack.c.l.b16 %v128
    %v4520 = vunpack.c.l.b16 %v129
    %v4521 = vunpack.c.l.b16 %v130
    %v4522 = vunpack.c.l.b16 %v131
    %v4523 = vunpack.c.l.b16 %v132
    %v4524 = vunpack.c.l.b16 %v133
    %v4525 = vunpack.c.l.b16 %v134
    %v4526 = vunpack.c.l.b16 %v135
    %v4527 = vunpack.c.l.b16 %v136
    %v4528 = vunpack.c.l.b16 %v137
    %v4529 = vunpack.c.l.b16 %v138
    %v4530 = vunpack.c.l.b16 %v139
    %v4531 = vunpack.c.l.b16 %v140
    %v4532 = vunpack.c.l.b16 %v141
    %v4533 = vunpack.c.l.b16 %v142
    %v4534 = vunpack.c.l.b16 %v143
    %v4535 = vunpack.c.l.b16 %v144
    %v4536 = vunpack.c.l.b16 %v145
    %v4537 = vunpack.c.l.b16 %v146
    %v4538 = vunpack.c.l.b16 %v147
    %v4539 = vunpack.c.l.b16 %v148
    %v4540 = vunpack.c.l.b16 %v149
    %v4541 = vunpack.c.l.b16 %v150
    %v4542 = vunpack.c.l.b16 %v151
    %v4543 = vunpack.c.l.b16 %v152
    %v4544 = vunpack.c.l.b16 %v153
    %v4545 = vunpack.c.l.b16 %v154
    %v4546 = vunpack.c.l.b16 %v155
    %v4547 = vunpack.c.l.b16 %v156
    %v4548 = vunpack.c.l.b16 %v157
    %v4549 = vunpack.c.l.b16 %v158
    %v4550 = vunpack.c.l.b16 %v159
    %v4551 = vunpack.c.l.b16 %v160
    %v4552 = vunpack.c.l.b16 %v161
    %v4553 = vunpack.c.l.b16 %v162
    %v4554 = vunpack.c.l.b16 %v163
    %v4555 = vunpack.c.l.b16 %v164
    %v4556 = vunpack.c.l.b16 %v165
    %v4557 = vunpack.c.l.b16 %v166
    %v4558 = vunpack.c.l.b16 %v167
    %v4559 = vunpack.c.l.b16 %v168
    %v4560 = vunpack.c.l.b16 %v169
    %v4561 = vunpack.c.l.b16 %v170
    %v4562 = vunpack.c.l.b16 %v171
    %v4563 = vunpack.c.l.b16 %v172
    %v4564 = vunpack.c.l.b16 %v173
    %v4565 = vunpack.c.l.b16 %v174
    %v4566 = vunpack.c.l.b16 %v175
    %v4567 = vunpack.c.l.b16 %v176
    %v4568 = vunpack.c.l.b16 %v177
    %v4569 = vpack.c.b16 %v4506, %v4505
    %v4570 = vpack.c.b16 %v4508, %v4507
    %v4571 = vpack.c.b16 %v4510, %v4509
    %v4572 = vpack.c.b16 %v4512, %v4511
    %v4573 = vpack.c.b16 %v4514, %v4513
    %v4574 = vpack.c.b16 %v4516, %v4515
    %v4575 = vpack.c.b16 %v4518, %v4517
    %v4576 = vpack.c.b16 %v4520, %v4519
    %v4577 = vpack.c.b16 %v4522, %v4521
    %v4578 = vpack.c.b16 %v4524, %v4523
    %v4579 = vpack.c.b16 %v4526, %v4525
    %v4580 = vpack.c.b16 %v4528, %v4527
    %v4581 = vpack.c.b16 %v4530, %v4529
    %v4582 = vpack.c.b16 %v4532, %v4531
    %v4583 = vpack.c.b16 %v4534, %v4533
    %v4584 = vpack.c.b16 %v4536, %v4535
    %v4585 = vpack.c.b16 %v4538, %v4537
    %v4586 = vpack.c.b16 %v4540, %v4539
    %v4587 = vpack.c.b16 %v4542, %v4541
    %v4588 = vpack.c.b16 %v4544, %v4543
    %v4589 = vpack.c.b16 %v4546, %v4545
    %v4590 = vpack.c.b16 %v4548, %v4547
    %v4591 = vpack.c.b16 %v4550, %v4549
    %v4592 = vpack.c.b16 %v4552, %v4551
    %v4593 = vpack.c.b16 %v4554, %v4553
    %v4594 = vpack.c.b16 %v4556, %v4555
    %v4595 = vpack.c.b16 %v4558, %v4557
    %v4596 = vpack.c.b16 %v4560, %v4559
    %v4597 = vpack.c.b16 %v4562, %v4561
    %v4598 = vpack.c.b16 %v4564, %v4563
    %v4599 = vpack.c.b16 %v4566, %v4565
    %v4600 = vpack.c.b16 %v4568, %v4567
    %4633 = vmatprep.subr.bf16.mxu0 0
    %4634 = vmatpush1.bf16.msra.mxu0 %v4569
    %4635 = vmatprep.subr.bf16.mxu0 0
    %4636 = vmatpush1.bf16.msra.mxu0 %v4570
    %4637 = vmatprep.subr.bf16.mxu0 0
    %4638 = vmatpush1.bf16.msra.mxu0 %v4571
    %4639 = vmatprep.subr.bf16.mxu0 0
    %4640 = vmatpush1.bf16.msra.mxu0 %v4572
    %4641 = vmatprep.subr.bf16.mxu0 0
    %4642 = vmatpush1.bf16.msra.mxu0 %v4573
    %4643 = vmatprep.subr.bf16.mxu0 0
    %4644 = vmatpush1.bf16.msra.mxu0 %v4574
    %4645 = vmatprep.subr.bf16.mxu0 0
    %4646 = vmatpush1.bf16.msra.mxu0 %v4575
    %4647 = vmatprep.subr.bf16.mxu0 0
    %4648 = vmatpush1.bf16.msra.mxu0 %v4576
    %4649 = vmatprep.subr.bf16.mxu0 0
    %4650 = vmatpush1.bf16.msra.mxu0 %v4577
    %4651 = vmatprep.subr.bf16.mxu0 0
    %4652 = vmatpush1.bf16.msra.mxu0 %v4578
    %4653 = vmatprep.subr.bf16.mxu0 0
    %4654 = vmatpush1.bf16.msra.mxu0 %v4579
    %4655 = vmatprep.subr.bf16.mxu0 0
    %4656 = vmatpush1.bf16.msra.mxu0 %v4580
    %4657 = vmatprep.subr.bf16.mxu0 0
    %4658 = vmatpush1.bf16.msra.mxu0 %v4581
    %4659 = vmatprep.subr.bf16.mxu0 0
    %4660 = vmatpush1.bf16.msra.mxu0 %v4582
    %4661 = vmatprep.subr.bf16.mxu0 0
    %4662 = vmatpush1.bf16.msra.mxu0 %v4583
    %4663 = vmatprep.subr.bf16.mxu0 0
    %4664 = vmatpush1.bf16.msra.mxu0 %v4584
    %4665 = vmatprep.mubr.bf16.mxu0 %v4371
    %4666 = vmatmul.mubr.bf16.gmra.mrb[0].mxu0 %v4370
    %v4667 = vpop.f32.mrb[0].mxu0
    %v4668 = vadd.f32 %v4439, %v4667
    %v4669 = vpop.f32.mrb[0].mxu0
    %v4670 = vpop.f32.mrb[0].mxu0
    %v4671 = vadd.f32 %v4439, %v4670
    %v4672 = vpop.f32.mrb[0].mxu0
    %4673 = vmatprep.mubr.bf16.mxu0 %v4375
    %4674 = vmatmul.mubr.bf16.gmra.mrb[0].mxu0 %v4374
    %v4675 = vpop.f32.mrb[0].mxu0
    %v4676 = vadd.f32 %v4439, %v4675
    %v4677 = vpop.f32.mrb[0].mxu0
    %v4678 = vpop.f32.mrb[0].mxu0
    %v4679 = vadd.f32 %v4439, %v4678
    %v4680 = vpop.f32.mrb[0].mxu0
    %4681 = vmatprep.mubr.bf16.mxu0 %v4379
    %4682 = vmatmul.mubr.bf16.gmra.mrb[0].mxu0 %v4378
    %v4683 = vpop.f32.mrb[0].mxu0
    %v4684 = vadd.f32 %v4439, %v4683
    %v4685 = vpop.f32.mrb[0].mxu0
    %v4686 = vpop.f32.mrb[0].mxu0
    %v4687 = vadd.f32 %v4439, %v4686
    %v4688 = vpop.f32.mrb[0].mxu0
    %4689 = vmatprep.mubr.bf16.mxu0 %v4383
    %4690 = vmatmul.mubr.bf16.gmra.mrb[0].mxu0 %v4382
    %v4691 = vpop.f32.mrb[0].mxu0
    %v4692 = vadd.f32 %v4439, %v4691
    %v4693 = vpop.f32.mrb[0].mxu0
    %v4694 = vpop.f32.mrb[0].mxu0
    %v4695 = vadd.f32 %v4439, %v4694
    %v4696 = vpop.f32.mrb[0].mxu0
    %4697 = vmatprep.mubr.bf16.mxu0 %v4387
    %4698 = vmatmul.mubr.bf16.gmra.mrb[0].mxu0 %v4386
    %v4699 = vpop.f32.mrb[0].mxu0
    %v4700 = vadd.f32 %v4439, %v4699
    %v4701 = vpop.f32.mrb[0].mxu0
    %v4702 = vpop.f32.mrb[0].mxu0
    %v4703 = vadd.f32 %v4439, %v4702
    %v4704 = vpop.f32.mrb[0].mxu0
    %4705 = vmatprep.mubr.bf16.mxu0 %v4391
    %4706 = vmatmul.mubr.bf16.gmra.mrb[0].mxu0 %v4390
    %v4707 = vpop.f32.mrb[0].mxu0
    %v4708 = vadd.f32 %v4439, %v4707
    %v4709 = vpop.f32.mrb[0].mxu0
    %v4710 = vpop.f32.mrb[0].mxu0
    %v4711 = vadd.f32 %v4439, %v4710
    %v4712 = vpop.f32.mrb[0].mxu0
    %4713 = vmatprep.mubr.bf16.mxu0 %v4395
    %4714 = vmatmul.mubr.bf16.gmra.mrb[0].mxu0 %v4394
    %v4715 = vpop.f32.mrb[0].mxu0
    %v4716 = vadd.f32 %v4439, %v4715
    %v4717 = vpop.f32.mrb[0].mxu0
    %v4718 = vpop.f32.mrb[0].mxu0
    %v4719 = vadd.f32 %v4439, %v4718
    %v4720 = vpop.f32.mrb[0].mxu0
    %4721 = vmatprep.mubr.bf16.mxu0 %v4399
    %4722 = vmatmul.mubr.bf16.gmra.mrb[0].mxu0 %v4398
    %v4723 = vpop.f32.mrb[0].mxu0
    %v4724 = vadd.f32 %v4439, %v4723
    %v4725 = vpop.f32.mrb[0].mxu0
    %v4726 = vpop.f32.mrb[0].mxu0
    %v4727 = vadd.f32 %v4439, %v4726
    %v4728 = vpop.f32.mrb[0].mxu0
    %4729 = vmatprep.mubr.bf16.mxu0 %v4403
    %4730 = vmatmul.mubr.bf16.gmra.mrb[0].mxu0 %v4402
    %v4731 = vpop.f32.mrb[0].mxu0
    %v4732 = vadd.f32 %v4439, %v4731
    %v4733 = vpop.f32.mrb[0].mxu0
    %v4734 = vpop.f32.mrb[0].mxu0
    %v4735 = vadd.f32 %v4439, %v4734
    %v4736 = vpop.f32.mrb[0].mxu0
    %4737 = vmatprep.mubr.bf16.mxu0 %v4407
    %4738 = vmatmul.mubr.bf16.gmra.mrb[0].mxu0 %v4406
    %v4739 = vpop.f32.mrb[0].mxu0
    %v4740 = vadd.f32 %v4439, %v4739
    %v4741 = vpop.f32.mrb[0].mxu0
    %v4742 = vpop.f32.mrb[0].mxu0
    %v4743 = vadd.f32 %v4439, %v4742
    %v4744 = vpop.f32.mrb[0].mxu0
    %4745 = vmatprep.mubr.bf16.mxu0 %v4411
    %4746 = vmatmul.mubr.bf16.gmra.mrb[0].mxu0 %v4410
    %v4747 = vpop.f32.mrb[0].mxu0
    %v4748 = vadd.f32 %v4439, %v4747
    %v4749 = vpop.f32.mrb[0].mxu0
    %v4750 = vpop.f32.mrb[0].mxu0
    %v4751 = vadd.f32 %v4439, %v4750
    %v4752 = vpop.f32.mrb[0].mxu0
    %4753 = vmatprep.mubr.bf16.mxu0 %v4415
    %4754 = vmatmul.mubr.bf16.gmra.mrb[0].mxu0 %v4414
    %v4755 = vpop.f32.mrb[0].mxu0
    %v4756 = vadd.f32 %v4439, %v4755
    %v4757 = vpop.f32.mrb[0].mxu0
    %v4758 = vpop.f32.mrb[0].mxu0
    %v4759 = vadd.f32 %v4439, %v4758
    %v4760 = vpop.f32.mrb[0].mxu0
    %4761 = vmatprep.mubr.bf16.mxu0 %v4419
    %4762 = vmatmul.mubr.bf16.gmra.mrb[0].mxu0 %v4418
    %v4763 = vpop.f32.mrb[0].mxu0
    %v4764 = vadd.f32 %v4439, %v4763
    %v4765 = vpop.f32.mrb[0].mxu0
    %v4766 = vpop.f32.mrb[0].mxu0
    %v4767 = vadd.f32 %v4439, %v4766
    %v4768 = vpop.f32.mrb[0].mxu0
    %4769 = vmatprep.mubr.bf16.mxu0 %v4423
    %4770 = vmatmul.mubr.bf16.gmra.mrb[0].mxu0 %v4422
    %v4771 = vpop.f32.mrb[0].mxu0
    %v4772 = vadd.f32 %v4439, %v4771
    %v4773 = vpop.f32.mrb[0].mxu0
    %v4774 = vpop.f32.mrb[0].mxu0
    %v4775 = vadd.f32 %v4439, %v4774
    %v4776 = vpop.f32.mrb[0].mxu0
    %4777 = vmatprep.mubr.bf16.mxu0 %v4427
    %4778 = vmatmul.mubr.bf16.gmra.mrb[0].mxu0 %v4426
    %v4779 = vpop.f32.mrb[0].mxu0
    %v4780 = vadd.f32 %v4439, %v4779
    %v4781 = vpop.f32.mrb[0].mxu0
    %v4782 = vpop.f32.mrb[0].mxu0
    %v4783 = vadd.f32 %v4439, %v4782
    %v4784 = vpop.f32.mrb[0].mxu0
    %4785 = vmatprep.mubr.bf16.mxu0 %v4431
    %4786 = vmatmul.mubr.bf16.gmra.mrb[0].mxu0 %v4430
    %v4787 = vpop.f32.mrb[0].mxu0
    %v4788 = vadd.f32 %v4439, %v4787
    %v4789 = vpop.f32.mrb[0].mxu0
    %v4790 = vpop.f32.mrb[0].mxu0
    %v4791 = vadd.f32 %v4439, %v4790
    %v4792 = vpop.f32.mrb[0].mxu0
    %4793 = vdwg.mxu0
    %4794 = vmatprep.subr.bf16.mxu0 0
    %4795 = vmatpush1.bf16.msra.mxu0 %v4585
    %4796 = vmatprep.subr.bf16.mxu0 0
    %4797 = vmatpush1.bf16.msra.mxu0 %v4586
    %4798 = vmatprep.subr.bf16.mxu0 0
    %4799 = vmatpush1.bf16.msra.mxu0 %v4587
    %4800 = vmatprep.subr.bf16.mxu0 0
    %4801 = vmatpush1.bf16.msra.mxu0 %v4588
    %4802 = vmatprep.subr.bf16.mxu0 0
    %4803 = vmatpush1.bf16.msra.mxu0 %v4589
    %4804 = vmatprep.subr.bf16.mxu0 0
    %4805 = vmatpush1.bf16.msra.mxu0 %v4590
    %4806 = vmatprep.subr.bf16.mxu0 0
    %4807 = vmatpush1.bf16.msra.mxu0 %v4591
    %4808 = vmatprep.subr.bf16.mxu0 0
    %4809 = vmatpush1.bf16.msra.mxu0 %v4592
    %4810 = vmatprep.subr.bf16.mxu0 0
    %4811 = vmatpush1.bf16.msra.mxu0 %v4593
    %4812 = vmatprep.subr.bf16.mxu0 0
    %4813 = vmatpush1.bf16.msra.mxu0 %v4594
    %4814 = vmatprep.subr.bf16.mxu0 0
    %4815 = vmatpush1.bf16.msra.mxu0 %v4595
    %4816 = vmatprep.subr.bf16.mxu0 0
    %4817 = vmatpush1.bf16.msra.mxu0 %v4596
    %4818 = vmatprep.subr.bf16.mxu0 0
    %4819 = vmatpush1.bf16.msra.mxu0 %v4597
    %4820 = vmatprep.subr.bf16.mxu0 0
    %4821 = vmatpush1.bf16.msra.mxu0 %v4598
    %4822 = vmatprep.subr.bf16.mxu0 0
    %4823 = vmatpush1.bf16.msra.mxu0 %v4599
    %4824 = vmatprep.subr.bf16.mxu0 0
    %4825 = vmatpush1.bf16.msra.mxu0 %v4600
    %4826 = vmatprep.mubr.bf16.mxu0 %v4373
    %4827 = vmatmul.mubr.bf16.gmra.mrb[0].mxu0 %v4372
    %v4828 = vpop.f32.mrb[0].mxu0
    %v4829 = vadd.f32 %v4668, %v4828
    %v4830 = vpop.f32.mrb[0].mxu0
    %v4831 = vpop.f32.mrb[0].mxu0
    %v4832 = vadd.f32 %v4671, %v4831
    %v4833 = vpop.f32.mrb[0].mxu0
    %4834 = vmatprep.mubr.bf16.mxu0 %v4377
    %4835 = vmatmul.mubr.bf16.gmra.mrb[0].mxu0 %v4376
    %v4836 = vpop.f32.mrb[0].mxu0
    %v4837 = vadd.f32 %v4676, %v4836
    %v4838 = vpop.f32.mrb[0].mxu0
    %v4839 = vpop.f32.mrb[0].mxu0
    %v4840 = vadd.f32 %v4679, %v4839
    %v4841 = vpop.f32.mrb[0].mxu0
    %4842 = vmatprep.mubr.bf16.mxu0 %v4381
    %4843 = vmatmul.mubr.bf16.gmra.mrb[0].mxu0 %v4380
    %v4844 = vpop.f32.mrb[0].mxu0
    %v4845 = vadd.f32 %v4684, %v4844
    %v4846 = vpop.f32.mrb[0].mxu0
    %v4847 = vpop.f32.mrb[0].mxu0
    %v4848 = vadd.f32 %v4687, %v4847
    %v4849 = vpop.f32.mrb[0].mxu0
    %4850 = vmatprep.mubr.bf16.mxu0 %v4385
    %4851 = vmatmul.mubr.bf16.gmra.mrb[0].mxu0 %v4384
    %v4852 = vpop.f32.mrb[0].mxu0
    %v4853 = vadd.f32 %v4692, %v4852
    %v4854 = vpop.f32.mrb[0].mxu0
    %v4855 = vpop.f32.mrb[0].mxu0
    %v4856 = vadd.f32 %v4695, %v4855
    %v4857 = vpop.f32.mrb[0].mxu0
    %4858 = vmatprep.mubr.bf16.mxu0 %v4389
    %4859 = vmatmul.mubr.bf16.gmra.mrb[0].mxu0 %v4388
    %v4860 = vpop.f32.mrb[0].mxu0
    %v4861 = vadd.f32 %v4700, %v4860
    %v4862 = vpop.f32.mrb[0].mxu0
    %v4863 = vpop.f32.mrb[0].mxu0
    %v4864 = vadd.f32 %v4703, %v4863
    %v4865 = vpop.f32.mrb[0].mxu0
    %4866 = vmatprep.mubr.bf16.mxu0 %v4393
    %4867 = vmatmul.mubr.bf16.gmra.mrb[0].mxu0 %v4392
    %v4868 = vpop.f32.mrb[0].mxu0
    %v4869 = vadd.f32 %v4708, %v4868
    %v4870 = vpop.f32.mrb[0].mxu0
    %v4871 = vpop.f32.mrb[0].mxu0
    %v4872 = vadd.f32 %v4711, %v4871
    %v4873 = vpop.f32.mrb[0].mxu0
    %4874 = vmatprep.mubr.bf16.mxu0 %v4397
    %4875 = vmatmul.mubr.bf16.gmra.mrb[0].mxu0 %v4396
    %v4876 = vpop.f32.mrb[0].mxu0
    %v4877 = vadd.f32 %v4716, %v4876
    %v4878 = vpop.f32.mrb[0].mxu0
    %v4879 = vpop.f32.mrb[0].mxu0
    %v4880 = vadd.f32 %v4719, %v4879
    %v4881 = vpop.f32.mrb[0].mxu0
    %4882 = vmatprep.mubr.bf16.mxu0 %v4401
    %4883 = vmatmul.mubr.bf16.gmra.mrb[0].mxu0 %v4400
    %v4884 = vpop.f32.mrb[0].mxu0
    %v4885 = vadd.f32 %v4724, %v4884
    %v4886 = vpop.f32.mrb[0].mxu0
    %v4887 = vpop.f32.mrb[0].mxu0
    %v4888 = vadd.f32 %v4727, %v4887
    %v4889 = vpop.f32.mrb[0].mxu0
    %4890 = vmatprep.mubr.bf16.mxu0 %v4405
    %4891 = vmatmul.mubr.bf16.gmra.mrb[0].mxu0 %v4404
    %v4892 = vpop.f32.mrb[0].mxu0
    %v4893 = vadd.f32 %v4732, %v4892
    %v4894 = vpop.f32.mrb[0].mxu0
    %v4895 = vpop.f32.mrb[0].mxu0
    %v4896 = vadd.f32 %v4735, %v4895
    %v4897 = vpop.f32.mrb[0].mxu0
    %4898 = vmatprep.mubr.bf16.mxu0 %v4409
    %4899 = vmatmul.mubr.bf16.gmra.mrb[0].mxu0 %v4408
    %v4900 = vpop.f32.mrb[0].mxu0
    %v4901 = vadd.f32 %v4740, %v4900
    %v4902 = vpop.f32.mrb[0].mxu0
    %v4903 = vpop.f32.mrb[0].mxu0
    %v4904 = vadd.f32 %v4743, %v4903
    %v4905 = vpop.f32.mrb[0].mxu0
    %4906 = vmatprep.mubr.bf16.mxu0 %v4413
    %4907 = vmatmul.mubr.bf16.gmra.mrb[0].mxu0 %v4412
    %v4908 = vpop.f32.mrb[0].mxu0
    %v4909 = vadd.f32 %v4748, %v4908
    %v4910 = vpop.f32.mrb[0].mxu0
    %v4911 = vpop.f32.mrb[0].mxu0
    %v4912 = vadd.f32 %v4751, %v4911
    %v4913 = vpop.f32.mrb[0].mxu0
    %4914 = vmatprep.mubr.bf16.mxu0 %v4417
    %4915 = vmatmul.mubr.bf16.gmra.mrb[0].mxu0 %v4416
    %v4916 = vpop.f32.mrb[0].mxu0
    %v4917 = vadd.f32 %v4756, %v4916
    %v4918 = vpop.f32.mrb[0].mxu0
    %v4919 = vpop.f32.mrb[0].mxu0
    %v4920 = vadd.f32 %v4759, %v4919
    %v4921 = vpop.f32.mrb[0].mxu0
    %4922 = vmatprep.mubr.bf16.mxu0 %v4421
    %4923 = vmatmul.mubr.bf16.gmra.mrb[0].mxu0 %v4420
    %v4924 = vpop.f32.mrb[0].mxu0
    %v4925 = vadd.f32 %v4764, %v4924
    %v4926 = vpop.f32.mrb[0].mxu0
    %v4927 = vpop.f32.mrb[0].mxu0
    %v4928 = vadd.f32 %v4767, %v4927
    %v4929 = vpop.f32.mrb[0].mxu0
    %4930 = vmatprep.mubr.bf16.mxu0 %v4425
    %4931 = vmatmul.mubr.bf16.gmra.mrb[0].mxu0 %v4424
    %v4932 = vpop.f32.mrb[0].mxu0
    %v4933 = vadd.f32 %v4772, %v4932
    %v4934 = vpop.f32.mrb[0].mxu0
    %v4935 = vpop.f32.mrb[0].mxu0
    %v4936 = vadd.f32 %v4775, %v4935
    %v4937 = vpop.f32.mrb[0].mxu0
    %4938 = vmatprep.mubr.bf16.mxu0 %v4429
    %4939 = vmatmul.mubr.bf16.gmra.mrb[0].mxu0 %v4428
    %v4940 = vpop.f32.mrb[0].mxu0
    %v4941 = vadd.f32 %v4780, %v4940
    %v4942 = vpop.f32.mrb[0].mxu0
    %v4943 = vpop.f32.mrb[0].mxu0
    %v4944 = vadd.f32 %v4783, %v4943
    %v4945 = vpop.f32.mrb[0].mxu0
    %4946 = vmatprep.mubr.bf16.mxu0 %v4433
    %4947 = vmatmul.mubr.bf16.gmra.mrb[0].mxu0 %v4432
    %v4948 = vpop.f32.mrb[0].mxu0
    %v4949 = vadd.f32 %v4788, %v4948
    %v4950 = vpop.f32.mrb[0].mxu0
    %v4951 = vpop.f32.mrb[0].mxu0
    %v4952 = vadd.f32 %v4791, %v4951
    %v4953 = vpop.f32.mrb[0].mxu0
    %4954 = vdwg.mxu0
    %v4955 = vsub.f32 0.0, %v4829
    %v4956 = vsub.f32 0.0, %v4832
    %v4957 = vsub.f32 0.0, %v4837
    %v4958 = vsub.f32 0.0, %v4840
    %v4959 = vsub.f32 0.0, %v4845
    %v4960 = vsub.f32 0.0, %v4848
    %v4961 = vsub.f32 0.0, %v4853
    %v4962 = vsub.f32 0.0, %v4856
    %v4963 = vsub.f32 0.0, %v4861
    %v4964 = vsub.f32 0.0, %v4864
    %v4965 = vsub.f32 0.0, %v4869
    %v4966 = vsub.f32 0.0, %v4872
    %v4967 = vsub.f32 0.0, %v4877
    %v4968 = vsub.f32 0.0, %v4880
    %v4969 = vsub.f32 0.0, %v4885
    %v4970 = vsub.f32 0.0, %v4888
    %v4971 = vsub.f32 0.0, %v4893
    %v4972 = vsub.f32 0.0, %v4896
    %v4973 = vsub.f32 0.0, %v4901
    %v4974 = vsub.f32 0.0, %v4904
    %v4975 = vsub.f32 0.0, %v4909
    %v4976 = vsub.f32 0.0, %v4912
    %v4977 = vsub.f32 0.0, %v4917
    %v4978 = vsub.f32 0.0, %v4920
    %v4979 = vsub.f32 0.0, %v4925
    %v4980 = vsub.f32 0.0, %v4928
    %v4981 = vsub.f32 0.0, %v4933
    %v4982 = vsub.f32 0.0, %v4936
    %v4983 = vsub.f32 0.0, %v4941
    %v4984 = vsub.f32 0.0, %v4944
    %v4985 = vsub.f32 0.0, %v4949
    %v4986 = vsub.f32 0.0, %v4952
    %v4987 = vmul.f32 %v4955, 1.442695
    %v4988 = vpow.pop %v4987
    %v4989 = vmul.f32 %v4956, 1.442695
    %v4990 = vpow.pop %v4989
    %v4991 = vmul.f32 %v4957, 1.442695
    %v4992 = vpow.pop %v4991
    %v4993 = vmul.f32 %v4958, 1.442695
    %v4994 = vpow.pop %v4993
    %v4995 = vmul.f32 %v4959, 1.442695
    %v4996 = vpow.pop %v4995
    %v4997 = vmul.f32 %v4960, 1.442695
    %v4998 = vpow.pop %v4997
    %v4999 = vmul.f32 %v4961, 1.442695
    %v5000 = vpow.pop %v4999
    %v5001 = vmul.f32 %v4962, 1.442695
    %v5002 = vpow.pop %v5001
    %v5003 = vmul.f32 %v4963, 1.442695
    %v5004 = vpow.pop %v5003
    %v5005 = vmul.f32 %v4964, 1.442695
    %v5006 = vpow.pop %v5005
    %v5007 = vmul.f32 %v4965, 1.442695
    %v5008 = vpow.pop %v5007
    %v5009 = vmul.f32 %v4966, 1.442695
    %v5010 = vpow.pop %v5009
    %v5011 = vmul.f32 %v4967, 1.442695
    %v5012 = vpow.pop %v5011
    %v5013 = vmul.f32 %v4968, 1.442695
    %v5014 = vpow.pop %v5013
    %v5015 = vmul.f32 %v4969, 1.442695
    %v5016 = vpow.pop %v5015
    %v5017 = vmul.f32 %v4970, 1.442695
    %v5018 = vpow.pop %v5017
    %v5019 = vmul.f32 %v4971, 1.442695
    %v5020 = vpow.pop %v5019
    %v5021 = vmul.f32 %v4972, 1.442695
    %v5022 = vpow.pop %v5021
    %v5023 = vmul.f32 %v4973, 1.442695
    %v5024 = vpow.pop %v5023
    %v5025 = vmul.f32 %v4974, 1.442695
    %v5026 = vpow.pop %v5025
    %v5027 = vmul.f32 %v4975, 1.442695
    %v5028 = vpow.pop %v5027
    %v5029 = vmul.f32 %v4976, 1.442695
    %v5030 = vpow.pop %v5029
    %v5031 = vmul.f32 %v4977, 1.442695
    %v5032 = vpow.pop %v5031
    %v5033 = vmul.f32 %v4978, 1.442695
    %v5034 = vpow.pop %v5033
    %v5035 = vmul.f32 %v4979, 1.442695
    %v5036 = vpow.pop %v5035
    %v5037 = vmul.f32 %v4980, 1.442695
    %v5038 = vpow.pop %v5037
    %v5039 = vmul.f32 %v4981, 1.442695
    %v5040 = vpow.pop %v5039
    %v5041 = vmul.f32 %v4982, 1.442695
    %v5042 = vpow.pop %v5041
    %v5043 = vmul.f32 %v4983, 1.442695
    %v5044 = vpow.pop %v5043
    %v5045 = vmul.f32 %v4984, 1.442695
    %v5046 = vpow.pop %v5045
    %v5047 = vmul.f32 %v4985, 1.442695
    %v5048 = vpow.pop %v5047
    %v5049 = vmul.f32 %v4986, 1.442695
    %v5050 = vpow.pop %v5049
    %v5051 = vadd.f32 %v4988, 1.0
    %v5052 = vadd.f32 %v4990, 1.0
    %v5053 = vadd.f32 %v4992, 1.0
    %v5054 = vadd.f32 %v4994, 1.0
    %v5055 = vadd.f32 %v4996, 1.0
    %v5056 = vadd.f32 %v4998, 1.0
    %v5057 = vadd.f32 %v5000, 1.0
    %v5058 = vadd.f32 %v5002, 1.0
    %v5059 = vadd.f32 %v5004, 1.0
    %v5060 = vadd.f32 %v5006, 1.0
    %v5061 = vadd.f32 %v5008, 1.0
    %v5062 = vadd.f32 %v5010, 1.0
    %v5063 = vadd.f32 %v5012, 1.0
    %v5064 = vadd.f32 %v5014, 1.0
    %v5065 = vadd.f32 %v5016, 1.0
    %v5066 = vadd.f32 %v5018, 1.0
    %v5067 = vadd.f32 %v5020, 1.0
    %v5068 = vadd.f32 %v5022, 1.0
    %v5069 = vadd.f32 %v5024, 1.0
    %v5070 = vadd.f32 %v5026, 1.0
    %v5071 = vadd.f32 %v5028, 1.0
    %v5072 = vadd.f32 %v5030, 1.0
    %v5073 = vadd.f32 %v5032, 1.0
    %v5074 = vadd.f32 %v5034, 1.0
    %v5075 = vadd.f32 %v5036, 1.0
    %v5076 = vadd.f32 %v5038, 1.0
    %v5077 = vadd.f32 %v5040, 1.0
    %v5078 = vadd.f32 %v5042, 1.0
    %v5079 = vadd.f32 %v5044, 1.0
    %v5080 = vadd.f32 %v5046, 1.0
    %v5081 = vadd.f32 %v5048, 1.0
    %v5082 = vadd.f32 %v5050, 1.0
    %v5083 = vrcp.pop %v5051
    %v5084 = vrcp.pop %v5052
    %v5085 = vrcp.pop %v5053
    %v5086 = vrcp.pop %v5054
    %v5087 = vrcp.pop %v5055
    %v5088 = vrcp.pop %v5056
    %v5089 = vrcp.pop %v5057
    %v5090 = vrcp.pop %v5058
    %v5091 = vrcp.pop %v5059
    %v5092 = vrcp.pop %v5060
    %v5093 = vrcp.pop %v5061
    %v5094 = vrcp.pop %v5062
    %v5095 = vrcp.pop %v5063
    %v5096 = vrcp.pop %v5064
    %v5097 = vrcp.pop %v5065
    %v5098 = vrcp.pop %v5066
    %v5099 = vrcp.pop %v5067
    %v5100 = vrcp.pop %v5068
    %v5101 = vrcp.pop %v5069
    %v5102 = vrcp.pop %v5070
    %v5103 = vrcp.pop %v5071
    %v5104 = vrcp.pop %v5072
    %v5105 = vrcp.pop %v5073
    %v5106 = vrcp.pop %v5074
    %v5107 = vrcp.pop %v5075
    %v5108 = vrcp.pop %v5076
    %v5109 = vrcp.pop %v5077
    %v5110 = vrcp.pop %v5078
    %v5111 = vrcp.pop %v5079
    %v5112 = vrcp.pop %v5080
    %v5113 = vrcp.pop %v5081
    %v5114 = vrcp.pop %v5082
    %5115 = vst [vmem:[%s7] sm:$0xff] %v5083
    %5116 = vst [vmem:[%s7 + $0x18] sm:$0xff] %v5084
    %5117 = vst [vmem:[%s7 + $0x30] sm:$0xff] %v5085
    %5118 = vst [vmem:[%s7 + $0x48] sm:$0xff] %v5086
    %5119 = vst [vmem:[%s7 + $0x60] sm:$0xff] %v5087
    %5120 = vst [vmem:[%s7 + $0x78] sm:$0xff] %v5088
    %5121 = vst [vmem:[%s7 + $0x90] sm:$0xff] %v5089
    %5122 = vst [vmem:[%s7 + $0xa8] sm:$0xff] %v5090
    %5123 = vst [vmem:[%s7 + $0xc0] sm:$0xff] %v5091
    %5124 = vst [vmem:[%s7 + $0xd8] sm:$0xff] %v5092
    %5125 = vst [vmem:[%s7 + $0xf0] sm:$0xff] %v5093
    %5126 = vst [vmem:[%s7 + $0x108] sm:$0xff] %v5094
    %5127 = vst [vmem:[%s7 + $0x120] sm:$0xff] %v5095
    %5128 = vst [vmem:[%s7 + $0x138] sm:$0xff] %v5096
    %5129 = vst [vmem:[%s7 + $0x150] sm:$0xff] %v5097
    %5130 = vst [vmem:[%s7 + $0x168] sm:$0xff] %v5098
    %5131 = vst [vmem:[%s7 + $0x180] sm:$0xff] %v5099
    %5132 = vst [vmem:[%s7 + $0x198] sm:$0xff] %v5100
    %5133 = vst [vmem:[%s7 + $0x1b0] sm:$0xff] %v5101
    %5134 = vst [vmem:[%s7 + $0x1c8] sm:$0xff] %v5102
    %5135 = vst [vmem:[%s7 + $0x1e0] sm:$0xff] %v5103
    %5136 = vst [vmem:[%s7 + $0x1f8] sm:$0xff] %v5104
    %5137 = vst [vmem:[%s7 + $0x210] sm:$0xff] %v5105
    %5138 = vst [vmem:[%s7 + $0x228] sm:$0xff] %v5106
    %5139 = vst [vmem:[%s7 + $0x240] sm:$0xff] %v5107
    %5140 = vst [vmem:[%s7 + $0x258] sm:$0xff] %v5108
    %5141 = vst [vmem:[%s7 + $0x270] sm:$0xff] %v5109
    %5142 = vst [vmem:[%s7 + $0x288] sm:$0xff] %v5110
    %5143 = vst [vmem:[%s7 + $0x2a0] sm:$0xff] %v5111
    %5144 = vst [vmem:[%s7 + $0x2b8] sm:$0xff] %v5112
    %5145 = vst [vmem:[%s7 + $0x2d0] sm:$0xff] %v5113
    %5146 = vst [vmem:[%s7 + $0x2e8] sm:$0xff] %v5114
    // Predicated region
    $region46: #{disentangled_content_layer.1} parent=1 // pred_check
      _
    $region47: #{disentangled_content_layer.1} parent=1 // pred_check_branch
      %5148 = sbr.rel (0) target = $region49
    $region48: #{disentangled_content_layer.1} parent=1 // pred_region
      _
    $region49: #{disentangled_content_layer.1} parent=1 // pred_fallthru
      _
    // Predicated region
    $region50: #{disentangled_content_layer.1} parent=1 // pred_check
      _
    $region51: #{disentangled_content_layer.1} parent=1 // pred_check_branch
      %5150 = sbr.rel (0) target = $region53
    $region52: #{disentangled_content_layer.1} parent=1 // pred_region
      _
    $region53: #{disentangled_content_layer.1} parent=1 // pred_fallthru
      _
    %5151 = vsyncpa [#allocation3], 1
    %5152 = vsyncpa [#allocation5], 1
    %5153 = vsyncpa [#allocation8], 1

</llo_original>
